<compile_context>
chip_gen: v6e
topology: v6e:2x2x1
jax: 0.10.0
libtpu: 0.0.40
codegen_flags: <defaults>
</compile_context>

<pallas_src>
import math
from functools import partial

import jax
import jax.numpy as jnp
from jax import lax
from jax.experimental import pallas as pl
from jax.experimental.pallas import tpu as pltpu


def _layer_norm(x, w, b, eps=1e-5):
    mu = jnp.mean(x, axis=-1, keepdims=True)
    var = jnp.mean(jnp.square(x - mu), axis=-1, keepdims=True)
    return (x - mu) * lax.rsqrt(var + eps) * w + b


# Packed per-layer vector rows (inside stacked["vecs"][l]).
_ROW_BQK, _ROW_BV, _ROW_BO = 0, 1, 2
_ROW_LN1W, _ROW_LN1B = 3, 4
_ROW_B1, _ROW_B2 = 5, 6
_ROW_LN2W, _ROW_LN2B = 7, 8
_NUM_VEC_ROWS = 16  # padded to a sublane-friendly row count


# ----------------------------------------------------------------------------
# Pallas kernel: the FULL encoder stack over ALL batch elements.
# grid = (num_layers,); the activation (B*S, C) lives in VMEM across layers,
# each layer's weights are DMA'd from HBM exactly once.
# ----------------------------------------------------------------------------
def encoder_stack_kernel(
    x_ref, pos_ref,
    wqk_ref, wv_ref, wo_ref, w1_ref, w2_ref, vec_ref,
    out_ref,
    xs_ref, attn_ref,
    *, nhead: int, batch: int, seq: int,
):
    layer = pl.program_id(0)

    # Load the input activation into the VMEM-resident scratch on layer 0.
    @pl.when(layer == 0)
    def _():
        xs_ref[...] = x_ref[...].astype(jnp.float32)

    x = xs_ref[...]                             # (R, C) f32, R = B*S
    pos = pos_ref[...].astype(jnp.float32)      # (R, C)
    R, C = x.shape
    hd = C // nhead
    C2 = 2 * C
    Fh = w1_ref.shape[1]

    # Packed per-layer biases / LayerNorm params (f32), one DMA for all of them.
    vecs = vec_ref[...]                         # (16, VW)
    bqk = vecs[_ROW_BQK:_ROW_BQK + 1, 0:C2]     # bq (pre-scaled) | bk
    bv = vecs[_ROW_BV:_ROW_BV + 1, 0:C]
    bo = vecs[_ROW_BO:_ROW_BO + 1, 0:C]
    ln1_w = vecs[_ROW_LN1W:_ROW_LN1W + 1, 0:C]
    ln1_b = vecs[_ROW_LN1B:_ROW_LN1B + 1, 0:C]
    b1 = vecs[_ROW_B1:_ROW_B1 + 1, 0:Fh]
    b2 = vecs[_ROW_B2:_ROW_B2 + 1, 0:C]
    ln2_w = vecs[_ROW_LN2W:_ROW_LN2W + 1, 0:C]
    ln2_b = vecs[_ROW_LN2B:_ROW_LN2B + 1, 0:C]

    # ---- self-attention projections (q = k = x + pos, v = x) ----------------
    # Fused q/k matmul: wqk = [wq*scale | wk], so q comes out pre-scaled.
    qk_in = (x + pos).astype(jnp.bfloat16)
    x_bf = x.astype(jnp.bfloat16)
    qk = jnp.dot(qk_in, wqk_ref[...], preferred_element_type=jnp.float32) + bqk
    v = jnp.dot(x_bf, wv_ref[...], preferred_element_type=jnp.float32) + bv

    q_bf = qk[:, 0:C].astype(jnp.bfloat16)      # (R, C), already * 1/sqrt(hd)
    k_bf = qk[:, C:C2].astype(jnp.bfloat16)     # (R, C)
    v_bf = v.astype(jnp.bfloat16)               # (R, C)

    # ---- scaled-dot-product attention per (batch, head) ---------------------
    # Static, tile-aligned slices (seq rows multiple of 8, hd lanes multiple of
    # 128): 2-D matmuls only, no layout-crossing reshapes / transposes.
    for b in range(batch):
        r0 = b * seq
        for h in range(nhead):
            c0 = h * hd
            qh = q_bf[r0:r0 + seq, c0:c0 + hd]
            kh = k_bf[r0:r0 + seq, c0:c0 + hd]
            vh = v_bf[r0:r0 + seq, c0:c0 + hd]
            s = jnp.einsum("qd,kd->qk", qh, kh,
                           preferred_element_type=jnp.float32)   # (S, S) f32
            s = s - jnp.max(s, axis=-1, keepdims=True)
            p = jnp.exp(s)
            denom = jnp.sum(p, axis=-1, keepdims=True)
            p = p * pl.reciprocal(denom, approx=True)             # EUP slot
            o = jnp.dot(p.astype(jnp.bfloat16), vh,
                        preferred_element_type=jnp.float32)       # (S, hd)
            attn_ref[r0:r0 + seq, c0:c0 + hd] = o

    attn = jnp.dot(attn_ref[...].astype(jnp.bfloat16), wo_ref[...],
                   preferred_element_type=jnp.float32) + bo       # (R, C)

    # ---- residual + LayerNorm 1 ---------------------------------------------
    x = _layer_norm(x + attn, ln1_w, ln1_b)

    # ---- feed-forward (ReLU); dropout is eval-mode identity -----------------
    h1 = jnp.dot(x.astype(jnp.bfloat16), w1_ref[...],
                 preferred_element_type=jnp.float32) + b1
    h1 = jnp.maximum(h1, 0.0)
    h2 = jnp.dot(h1.astype(jnp.bfloat16), w2_ref[...],
                 preferred_element_type=jnp.float32) + b2

    # ---- residual + LayerNorm 2 ---------------------------------------------
    x = _layer_norm(x + h2, ln2_w, ln2_b)

    xs_ref[...] = x

    # Emit to HBM only after the last layer (output block is grid-resident).
    @pl.when(layer == pl.num_programs(0) - 1)
    def _():
        out_ref[...] = x.astype(out_ref.dtype)


# ----------------------------------------------------------------------------
# Wrapper: one pallas_call for the whole stack. grid = (num_layers,).
# ----------------------------------------------------------------------------
def encoder_stack(x_rc, pos_rc, stacked, nhead, batch, seq,
                  *, vmem_limit_bytes=48 * 1024 * 1024):
    R, C = x_rc.shape
    L, _, C2 = stacked["wqk"].shape
    Fh = stacked["w1"].shape[2]
    NV, VW = stacked["vecs"].shape[1:]

    # Sequence / output block: index constant across the layer axis -> streamed
    # into VMEM once, resident for the whole stack.
    seq_spec = pl.BlockSpec((R, C), lambda l: (0, 0))

    def w_spec(r, c):
        # Per-layer parameter block, indexed by the (outer/only) layer axis:
        # each layer's weights cross HBM exactly once per forward pass.
        # If a profile shows exposed weight-DMA waits, sweep
        # pipeline_mode=pl.Buffered(3) here.
        return pl.BlockSpec((None, r, c), lambda l: (l, 0, 0))

    grid_spec = pltpu.PrefetchScalarGridSpec(
        num_scalar_prefetch=0,
        grid=(L,),
        in_specs=[
            seq_spec, seq_spec,                 # x, pos
            w_spec(C, C2),                      # wqk (wq*scale | wk)
            w_spec(C, C),                       # wv
            w_spec(C, C),                       # wo
            w_spec(C, Fh),                      # w1
            w_spec(Fh, C),                      # w2
            w_spec(NV, VW),                     # packed biases / LN params
        ],
        out_specs=pl.BlockSpec((R, C), lambda l: (0, 0)),
        scratch_shapes=[
            pltpu.VMEM((R, C), jnp.float32),    # residual stream (resident)
            pltpu.VMEM((R, C), jnp.float32),    # per-head attention assembly
        ],
    )

    return pl.pallas_call(
        partial(encoder_stack_kernel, nhead=nhead, batch=batch, seq=seq),
        out_shape=jax.ShapeDtypeStruct((R, C), jnp.float32),
        grid_spec=grid_spec,
        compiler_params=pltpu.CompilerParams(
            # Single layer axis carries the residual stream -> arbitrary.
            # TODO(synk): for v7x dual-TC, shard a row/query-tile axis with
            # CORE_PARALLEL once flash-style tiling is added for prod shapes.
            dimension_semantics=("arbitrary",),
            vmem_limit_bytes=vmem_limit_bytes,
        ),
    )(
        x_rc, pos_rc,
        stacked["wqk"], stacked["wv"], stacked["wo"],
        stacked["w1"], stacked["w2"], stacked["vecs"],
    )


# ----------------------------------------------------------------------------
# Full TransformerEncoderDefault.forward (norm=None, no masks, PE every layer)
# ----------------------------------------------------------------------------
def transformer_encoder_forward(src, pos, stacked_params, nhead):
    B, N, C, H, W = src.shape
    S = N * H * W

    # flatten_input, collapsed: (B,N,C,H,W) -> rows (B*S, C), channels last,
    # sequence index s = n*H*W + h*W + w (matches the PyTorch permute/flatten).
    x = jnp.transpose(src, (0, 1, 3, 4, 2)).reshape(B * S, C)
    pe = jnp.transpose(pos, (0, 1, 3, 4, 2)).reshape(B * S, C)

    out = encoder_stack(x, pe, stacked_params, nhead, batch=B, seq=S)

    # flatten_back, collapsed: (B*S, C) -> (B*N, C, H, W).
    out = out.reshape(B, N, H, W, C)
    out = jnp.transpose(out, (0, 1, 4, 2, 3)).reshape(B * N, C, H, W)
    return out


# ----------------------------------------------------------------------------
# Deterministic parameter construction (xavier-uniform matrices, zero biases,
# ones/zeros LayerNorm — matching _reset_parameters) and host-side packing.
# ----------------------------------------------------------------------------
def make_layer_params(key, C, Fh):
    ks = jax.random.split(key, 6)

    def xavier(k, shape):
        limit = math.sqrt(6.0 / (shape[0] + shape[1]))
        return jax.random.uniform(k, shape, jnp.float32, -limit, limit)

    return {
        "wq": xavier(ks[0], (C, C)),
        "wk": xavier(ks[1], (C, C)),
        "wv": xavier(ks[2], (C, C)),
        "bq": jnp.zeros((C,), jnp.float32),
        "bk": jnp.zeros((C,), jnp.float32),
        "bv": jnp.zeros((C,), jnp.float32),
        "wo": xavier(ks[3], (C, C)),
        "bo": jnp.zeros((C,), jnp.float32),
        "ln1_w": jnp.ones((C,), jnp.float32),
        "ln1_b": jnp.zeros((C,), jnp.float32),
        "w1": xavier(ks[4], (C, Fh)),
        "b1": jnp.zeros((Fh,), jnp.float32),
        "w2": xavier(ks[5], (Fh, C)),
        "b2": jnp.zeros((C,), jnp.float32),
        "ln2_w": jnp.ones((C,), jnp.float32),
        "ln2_b": jnp.zeros((C,), jnp.float32),
    }


def stack_layer_params(layer_params, nhead):
    """Stack per-layer params along a leading L axis, fuse wq/wk (with the
    1/sqrt(hd) scale folded into wq/bq), pre-cast matmul weights to bf16, and
    pack all small bias / LayerNorm vectors into one (L, 16, VW) f32 array."""
    C, Fh = layer_params[0]["w1"].shape
    hd = C // nhead
    scale = 1.0 / math.sqrt(hd)
    VW = max(2 * C, Fh)

    wqk, wv, wo, w1, w2, vecs = [], [], [], [], [], []
    for lp in layer_params:
        wqk.append(jnp.concatenate([lp["wq"] * scale, lp["wk"]], axis=1))
        wv.append(lp["wv"])
        wo.append(lp["wo"])
        w1.append(lp["w1"])
        w2.append(lp["w2"])

        v = jnp.zeros((_NUM_VEC_ROWS, VW), jnp.float32)
        v = v.at[_ROW_BQK, 0:2 * C].set(
            jnp.concatenate([lp["bq"] * scale, lp["bk"]]))
        v = v.at[_ROW_BV, 0:C].set(lp["bv"])
        v = v.at[_ROW_BO, 0:C].set(lp["bo"])
        v = v.at[_ROW_LN1W, 0:C].set(lp["ln1_w"])
        v = v.at[_ROW_LN1B, 0:C].set(lp["ln1_b"])
        v = v.at[_ROW_B1, 0:Fh].set(lp["b1"])
        v = v.at[_ROW_B2, 0:C].set(lp["b2"])
        v = v.at[_ROW_LN2W, 0:C].set(lp["ln2_w"])
        v = v.at[_ROW_LN2B, 0:C].set(lp["ln2_b"])
        vecs.append(v)

    # Matmul weights feed the MXU in bf16 (f32 accumulation via
    # preferred_element_type); biases / LayerNorm params stay f32.
    return {
        "wqk": jnp.stack(wqk).astype(jnp.bfloat16),
        "wv": jnp.stack(wv).astype(jnp.bfloat16),
        "wo": jnp.stack(wo).astype(jnp.bfloat16),
        "w1": jnp.stack(w1).astype(jnp.bfloat16),
        "w2": jnp.stack(w2).astype(jnp.bfloat16),
        "vecs": jnp.stack(vecs),
    }


if __name__ == "__main__":
    # Small shapes consistent with the module: src is (B, N, C, H, W).
    # C = 256 (DETR d_model), nhead = 2 -> hd = 128 (lane-aligned head slices).
    B, N, C, H, W = 2, 2, 256, 4, 4
    nhead = 2
    dim_feedforward = 512
    num_layers = 2

    key = jax.random.PRNGKey(0)
    k_src, k_pos, k_par = jax.random.split(key, 3)

    src = jax.random.normal(k_src, (B, N, C, H, W), jnp.float32)
    pos = jax.random.normal(k_pos, (B, N, C, H, W), jnp.float32)

    layer_keys = jax.random.split(k_par, num_layers)
    stacked = stack_layer_params(
        [make_layer_params(k, C, dim_feedforward) for k in layer_keys], nhead)

    fwd = jax.jit(partial(transformer_encoder_forward, nhead=nhead))
    out = fwd(src, pos, stacked)
    jax.block_until_ready(out)

    assert out.shape == (B * N, C, H, W)
    assert bool(jnp.isfinite(out).all())
    print("KERNEL_OK")
</pallas_src>

<mosaic_0001>
module attributes {stable_mosaic.version = 11 : i64} {
  func.func @encoder_stack_kernel(%arg0: i32, %arg1: memref<64x256xf32, #tpu.memory_space<vmem>>, %arg2: memref<64x256xf32, #tpu.memory_space<vmem>>, %arg3: memref<1x256x512xbf16, #tpu.memory_space<vmem>>, %arg4: memref<1x256x256xbf16, #tpu.memory_space<vmem>>, %arg5: memref<1x256x256xbf16, #tpu.memory_space<vmem>>, %arg6: memref<1x256x512xbf16, #tpu.memory_space<vmem>>, %arg7: memref<1x512x256xbf16, #tpu.memory_space<vmem>>, %arg8: memref<1x16x512xf32, #tpu.memory_space<vmem>>, %arg9: memref<64x256xf32, #tpu.memory_space<vmem>>, %arg10: memref<64x256xf32, #tpu.memory_space<vmem>>, %arg11: memref<64x256xf32, #tpu.memory_space<vmem>>) attributes {dimension_semantics = [#tpu.dimension_semantics<arbitrary>], iteration_bounds = array<i64: 2>, scalar_prefetch = 0 : i64, scratch_operands = 2 : i64, tpu.core_type = #tpu.core_type<tc>, window_params = [{pipeline_mode = #tpu.pipeline_mode<synchronous>, transform_indices = @transform_0, window_bounds = array<i64: 64, 256>}, {pipeline_mode = #tpu.pipeline_mode<synchronous>, transform_indices = @transform_1, window_bounds = array<i64: 64, 256>}, {transform_indices = @transform_2, window_bounds = array<i64: 1, 256, 512>}, {transform_indices = @transform_3, window_bounds = array<i64: 1, 256, 256>}, {transform_indices = @transform_4, window_bounds = array<i64: 1, 256, 256>}, {transform_indices = @transform_5, window_bounds = array<i64: 1, 256, 512>}, {transform_indices = @transform_6, window_bounds = array<i64: 1, 512, 256>}, {transform_indices = @transform_7, window_bounds = array<i64: 1, 16, 512>}, {pipeline_mode = #tpu.pipeline_mode<synchronous>, transform_indices = @transform_8, window_bounds = array<i64: 64, 256>}]} {
    %c0_i32 = arith.constant 0 : i32
    %0 = arith.cmpi eq, %arg0, %c0_i32 : i32
    %1 = arith.extui %0 : i1 to i32
    %c0_i32_0 = arith.constant 0 : i32
    %2 = arith.cmpi ne, %1, %c0_i32_0 : i32
    scf.if %2 {
      %c0_64 = arith.constant 0 : index
      %c0_65 = arith.constant 0 : index
      %173 = vector.load %arg1[%c0_64, %c0_65] : memref<64x256xf32, #tpu.memory_space<vmem>>, vector<64x256xf32>
      %c0_66 = arith.constant 0 : index
      %c0_67 = arith.constant 0 : index
      %174 = vector.load %arg10[%c0_66, %c0_67] : memref<64x256xf32, #tpu.memory_space<vmem>>, vector<64x256xf32>
      tpu.vector_store %arg10[%c0_66, %c0_67], %173 {strides = array<i32>} : memref<64x256xf32, #tpu.memory_space<vmem>>, vector<64x256xf32>,
    } else {
    }
    %c0 = arith.constant 0 : index
    %c0_1 = arith.constant 0 : index
    %3 = vector.load %arg10[%c0, %c0_1] : memref<64x256xf32, #tpu.memory_space<vmem>>, vector<64x256xf32>
    %c0_2 = arith.constant 0 : index
    %c0_3 = arith.constant 0 : index
    %4 = vector.load %arg2[%c0_2, %c0_3] : memref<64x256xf32, #tpu.memory_space<vmem>>, vector<64x256xf32>
    %c0_4 = arith.constant 0 : index
    %c0_5 = arith.constant 0 : index
    %c0_6 = arith.constant 0 : index
    %5 = vector.load %arg8[%c0_4, %c0_5, %c0_6] : memref<1x16x512xf32, #tpu.memory_space<vmem>>, vector<1x16x512xf32>
    %6 = vector.shape_cast %5 : vector<1x16x512xf32> to vector<16x512xf32>
    %7 = vector.extract_strided_slice %6 {offsets = [0, 0], sizes = [1, 512], strides = [1, 1]} : vector<16x512xf32> to vector<1x512xf32>
    %8 = vector.extract_strided_slice %6 {offsets = [1, 0], sizes = [1, 256], strides = [1, 1]} : vector<16x512xf32> to vector<1x256xf32>
    %9 = vector.extract_strided_slice %6 {offsets = [2, 0], sizes = [1, 256], strides = [1, 1]} : vector<16x512xf32> to vector<1x256xf32>
    %10 = vector.extract_strided_slice %6 {offsets = [3, 0], sizes = [1, 256], strides = [1, 1]} : vector<16x512xf32> to vector<1x256xf32>
    %11 = vector.extract_strided_slice %6 {offsets = [4, 0], sizes = [1, 256], strides = [1, 1]} : vector<16x512xf32> to vector<1x256xf32>
    %12 = vector.extract_strided_slice %6 {offsets = [5, 0], sizes = [1, 512], strides = [1, 1]} : vector<16x512xf32> to vector<1x512xf32>
    %13 = vector.extract_strided_slice %6 {offsets = [6, 0], sizes = [1, 256], strides = [1, 1]} : vector<16x512xf32> to vector<1x256xf32>
    %14 = vector.extract_strided_slice %6 {offsets = [7, 0], sizes = [1, 256], strides = [1, 1]} : vector<16x512xf32> to vector<1x256xf32>
    %15 = vector.extract_strided_slice %6 {offsets = [8, 0], sizes = [1, 256], strides = [1, 1]} : vector<16x512xf32> to vector<1x256xf32>
    %16 = arith.addf %3, %4 : vector<64x256xf32>
    %17 = arith.truncf %16 : vector<64x256xf32> to vector<64x256xbf16>
    %18 = arith.truncf %3 : vector<64x256xf32> to vector<64x256xbf16>
    %c0_7 = arith.constant 0 : index
    %c0_8 = arith.constant 0 : index
    %c0_9 = arith.constant 0 : index
    %19 = vector.load %arg3[%c0_7, %c0_8, %c0_9] : memref<1x256x512xbf16, #tpu.memory_space<vmem>>, vector<1x256x512xbf16>
    %20 = vector.shape_cast %19 : vector<1x256x512xbf16> to vector<256x512xbf16>
    %cst = arith.constant dense<0.000000e+00> : vector<64x512xf32>
    %21 = tpu.matmul %17, %20, %cst {dimension_numbers = #tpu.dot_dimension_numbers<[1], [0], [0], [1], [0, 0, 1, 1], [], []>} : vector<64x256xbf16>, vector<256x512xbf16>, vector<64x512xf32> -> vector<64x512xf32>
    %22 = vector.broadcast %7 : vector<1x512xf32> to vector<64x512xf32>
    %23 = arith.addf %21, %22 : vector<64x512xf32>
    %c0_10 = arith.constant 0 : index
    %c0_11 = arith.constant 0 : index
    %c0_12 = arith.constant 0 : index
    %24 = vector.load %arg4[%c0_10, %c0_11, %c0_12] : memref<1x256x256xbf16, #tpu.memory_space<vmem>>, vector<1x256x256xbf16>
    %25 = vector.shape_cast %24 : vector<1x256x256xbf16> to vector<256x256xbf16>
    %cst_13 = arith.constant dense<0.000000e+00> : vector<64x256xf32>
    %26 = tpu.matmul %18, %25, %cst_13 {dimension_numbers = #tpu.dot_dimension_numbers<[1], [0], [0], [1], [0, 0, 1, 1], [], []>} : vector<64x256xbf16>, vector<256x256xbf16>, vector<64x256xf32> -> vector<64x256xf32>
    %27 = vector.broadcast %8 : vector<1x256xf32> to vector<64x256xf32>
    %28 = arith.addf %26, %27 : vector<64x256xf32>
    %29 = vector.extract_strided_slice %23 {offsets = [0, 0], sizes = [64, 256], strides = [1, 1]} : vector<64x512xf32> to vector<64x256xf32>
    %30 = arith.truncf %29 : vector<64x256xf32> to vector<64x256xbf16>
    %31 = vector.extract_strided_slice %23 {offsets = [0, 256], sizes = [64, 256], strides = [1, 1]} : vector<64x512xf32> to vector<64x256xf32>
    %32 = arith.truncf %31 : vector<64x256xf32> to vector<64x256xbf16>
    %33 = arith.truncf %28 : vector<64x256xf32> to vector<64x256xbf16>
    %34 = vector.extract_strided_slice %30 {offsets = [0, 0], sizes = [32, 128], strides = [1, 1]} : vector<64x256xbf16> to vector<32x128xbf16>
    %35 = vector.extract_strided_slice %32 {offsets = [0, 0], sizes = [32, 128], strides = [1, 1]} : vector<64x256xbf16> to vector<32x128xbf16>
    %36 = vector.extract_strided_slice %33 {offsets = [0, 0], sizes = [32, 128], strides = [1, 1]} : vector<64x256xbf16> to vector<32x128xbf16>
    "tpu.trace_start"() <{level = 10 : i32, message = "qd,kd->qk"}> : () -> ()
    %cst_14 = arith.constant dense<0.000000e+00> : vector<32x32xf32>
    %37 = tpu.matmul %34, %35, %cst_14 {dimension_numbers = #tpu.dot_dimension_numbers<[1], [1], [0], [0], [0, 0, 1, 0], [], []>} : vector<32x128xbf16>, vector<32x128xbf16>, vector<32x32xf32> -> vector<32x32xf32>
    "tpu.trace_stop"() : () -> ()
    %cst_15 = arith.constant dense<0xFF800000> : vector<32xf32>
    %38 = vector.multi_reduction <maximumf>, %37, %cst_15 [1] : vector<32x32xf32> to vector<32xf32>
    %39 = vector.shape_cast %38 : vector<32xf32> to vector<32x1xf32>
    %40 = vector.broadcast %39 : vector<32x1xf32> to vector<32x32xf32>
    %41 = arith.subf %37, %40 : vector<32x32xf32>
    %42 = math.exp %41 : vector<32x32xf32>
    %cst_16 = arith.constant dense<0.000000e+00> : vector<32xf32>
    %43 = vector.multi_reduction <add>, %42, %cst_16 [1] : vector<32x32xf32> to vector<32xf32>
    %44 = vector.shape_cast %43 : vector<32xf32> to vector<32x1xf32>
    %45 = tpu.reciprocal %44 {approx = true} : vector<32x1xf32> -> vector<32x1xf32>
    %46 = vector.broadcast %45 : vector<32x1xf32> to vector<32x32xf32>
    %47 = arith.mulf %42, %46 : vector<32x32xf32>
    %48 = arith.truncf %47 : vector<32x32xf32> to vector<32x32xbf16>
    %cst_17 = arith.constant dense<0.000000e+00> : vector<32x128xf32>
    %49 = tpu.matmul %48, %36, %cst_17 {dimension_numbers = #tpu.dot_dimension_numbers<[1], [0], [0], [1], [0, 0, 1, 1], [], []>} : vector<32x32xbf16>, vector<32x128xbf16>, vector<32x128xf32> -> vector<32x128xf32>
    %c0_18 = arith.constant 0 : index
    %c0_19 = arith.constant 0 : index
    %50 = vector.load %arg11[%c0_18, %c0_19] : memref<64x256xf32, #tpu.memory_space<vmem>>, vector<32x128xf32>
    tpu.vector_store %arg11[%c0_18, %c0_19], %49 {strides = array<i32>} : memref<64x256xf32, #tpu.memory_space<vmem>>, vector<32x128xf32>,
    %51 = vector.extract_strided_slice %30 {offsets = [0, 128], sizes = [32, 128], strides = [1, 1]} : vector<64x256xbf16> to vector<32x128xbf16>
    %52 = vector.extract_strided_slice %32 {offsets = [0, 128], sizes = [32, 128], strides = [1, 1]} : vector<64x256xbf16> to vector<32x128xbf16>
    %53 = vector.extract_strided_slice %33 {offsets = [0, 128], sizes = [32, 128], strides = [1, 1]} : vector<64x256xbf16> to vector<32x128xbf16>
    "tpu.trace_start"() <{level = 10 : i32, message = "qd,kd->qk"}> : () -> ()
    %cst_20 = arith.constant dense<0.000000e+00> : vector<32x32xf32>
    %54 = tpu.matmul %51, %52, %cst_20 {dimension_numbers = #tpu.dot_dimension_numbers<[1], [1], [0], [0], [0, 0, 1, 0], [], []>} : vector<32x128xbf16>, vector<32x128xbf16>, vector<32x32xf32> -> vector<32x32xf32>
    "tpu.trace_stop"() : () -> ()
    %cst_21 = arith.constant dense<0xFF800000> : vector<32xf32>
    %55 = vector.multi_reduction <maximumf>, %54, %cst_21 [1] : vector<32x32xf32> to vector<32xf32>
    %56 = vector.shape_cast %55 : vector<32xf32> to vector<32x1xf32>
    %57 = vector.broadcast %56 : vector<32x1xf32> to vector<32x32xf32>
    %58 = arith.subf %54, %57 : vector<32x32xf32>
    %59 = math.exp %58 : vector<32x32xf32>
    %cst_22 = arith.constant dense<0.000000e+00> : vector<32xf32>
    %60 = vector.multi_reduction <add>, %59, %cst_22 [1] : vector<32x32xf32> to vector<32xf32>
    %61 = vector.shape_cast %60 : vector<32xf32> to vector<32x1xf32>
    %62 = tpu.reciprocal %61 {approx = true} : vector<32x1xf32> -> vector<32x1xf32>
    %63 = vector.broadcast %62 : vector<32x1xf32> to vector<32x32xf32>
    %64 = arith.mulf %59, %63 : vector<32x32xf32>
    %65 = arith.truncf %64 : vector<32x32xf32> to vector<32x32xbf16>
    %cst_23 = arith.constant dense<0.000000e+00> : vector<32x128xf32>
    %66 = tpu.matmul %65, %53, %cst_23 {dimension_numbers = #tpu.dot_dimension_numbers<[1], [0], [0], [1], [0, 0, 1, 1], [], []>} : vector<32x32xbf16>, vector<32x128xbf16>, vector<32x128xf32> -> vector<32x128xf32>
    %c0_24 = arith.constant 0 : index
    %c128 = arith.constant 128 : index
    %67 = vector.load %arg11[%c0_24, %c128] : memref<64x256xf32, #tpu.memory_space<vmem>>, vector<32x128xf32>
    tpu.vector_store %arg11[%c0_24, %c128], %66 {strides = array<i32>} : memref<64x256xf32, #tpu.memory_space<vmem>>, vector<32x128xf32>,
    %68 = vector.extract_strided_slice %30 {offsets = [32, 0], sizes = [32, 128], strides = [1, 1]} : vector<64x256xbf16> to vector<32x128xbf16>
    %69 = vector.extract_strided_slice %32 {offsets = [32, 0], sizes = [32, 128], strides = [1, 1]} : vector<64x256xbf16> to vector<32x128xbf16>
    %70 = vector.extract_strided_slice %33 {offsets = [32, 0], sizes = [32, 128], strides = [1, 1]} : vector<64x256xbf16> to vector<32x128xbf16>
    "tpu.trace_start"() <{level = 10 : i32, message = "qd,kd->qk"}> : () -> ()
    %cst_25 = arith.constant dense<0.000000e+00> : vector<32x32xf32>
    %71 = tpu.matmul %68, %69, %cst_25 {dimension_numbers = #tpu.dot_dimension_numbers<[1], [1], [0], [0], [0, 0, 1, 0], [], []>} : vector<32x128xbf16>, vector<32x128xbf16>, vector<32x32xf32> -> vector<32x32xf32>
    "tpu.trace_stop"() : () -> ()
    %cst_26 = arith.constant dense<0xFF800000> : vector<32xf32>
    %72 = vector.multi_reduction <maximumf>, %71, %cst_26 [1] : vector<32x32xf32> to vector<32xf32>
    %73 = vector.shape_cast %72 : vector<32xf32> to vector<32x1xf32>
    %74 = vector.broadcast %73 : vector<32x1xf32> to vector<32x32xf32>
    %75 = arith.subf %71, %74 : vector<32x32xf32>
    %76 = math.exp %75 : vector<32x32xf32>
    %cst_27 = arith.constant dense<0.000000e+00> : vector<32xf32>
    %77 = vector.multi_reduction <add>, %76, %cst_27 [1] : vector<32x32xf32> to vector<32xf32>
    %78 = vector.shape_cast %77 : vector<32xf32> to vector<32x1xf32>
    %79 = tpu.reciprocal %78 {approx = true} : vector<32x1xf32> -> vector<32x1xf32>
    %80 = vector.broadcast %79 : vector<32x1xf32> to vector<32x32xf32>
    %81 = arith.mulf %76, %80 : vector<32x32xf32>
    %82 = arith.truncf %81 : vector<32x32xf32> to vector<32x32xbf16>
    %cst_28 = arith.constant dense<0.000000e+00> : vector<32x128xf32>
    %83 = tpu.matmul %82, %70, %cst_28 {dimension_numbers = #tpu.dot_dimension_numbers<[1], [0], [0], [1], [0, 0, 1, 1], [], []>} : vector<32x32xbf16>, vector<32x128xbf16>, vector<32x128xf32> -> vector<32x128xf32>
    %c32 = arith.constant 32 : index
    %c0_29 = arith.constant 0 : index
    %84 = vector.load %arg11[%c32, %c0_29] : memref<64x256xf32, #tpu.memory_space<vmem>>, vector<32x128xf32>
    tpu.vector_store %arg11[%c32, %c0_29], %83 {strides = array<i32>} : memref<64x256xf32, #tpu.memory_space<vmem>>, vector<32x128xf32>,
    %85 = vector.extract_strided_slice %30 {offsets = [32, 128], sizes = [32, 128], strides = [1, 1]} : vector<64x256xbf16> to vector<32x128xbf16>
    %86 = vector.extract_strided_slice %32 {offsets = [32, 128], sizes = [32, 128], strides = [1, 1]} : vector<64x256xbf16> to vector<32x128xbf16>
    %87 = vector.extract_strided_slice %33 {offsets = [32, 128], sizes = [32, 128], strides = [1, 1]} : vector<64x256xbf16> to vector<32x128xbf16>
    "tpu.trace_start"() <{level = 10 : i32, message = "qd,kd->qk"}> : () -> ()
    %cst_30 = arith.constant dense<0.000000e+00> : vector<32x32xf32>
    %88 = tpu.matmul %85, %86, %cst_30 {dimension_numbers = #tpu.dot_dimension_numbers<[1], [1], [0], [0], [0, 0, 1, 0], [], []>} : vector<32x128xbf16>, vector<32x128xbf16>, vector<32x32xf32> -> vector<32x32xf32>
    "tpu.trace_stop"() : () -> ()
    %cst_31 = arith.constant dense<0xFF800000> : vector<32xf32>
    %89 = vector.multi_reduction <maximumf>, %88, %cst_31 [1] : vector<32x32xf32> to vector<32xf32>
    %90 = vector.shape_cast %89 : vector<32xf32> to vector<32x1xf32>
    %91 = vector.broadcast %90 : vector<32x1xf32> to vector<32x32xf32>
    %92 = arith.subf %88, %91 : vector<32x32xf32>
    %93 = math.exp %92 : vector<32x32xf32>
    %cst_32 = arith.constant dense<0.000000e+00> : vector<32xf32>
    %94 = vector.multi_reduction <add>, %93, %cst_32 [1] : vector<32x32xf32> to vector<32xf32>
    %95 = vector.shape_cast %94 : vector<32xf32> to vector<32x1xf32>
    %96 = tpu.reciprocal %95 {approx = true} : vector<32x1xf32> -> vector<32x1xf32>
    %97 = vector.broadcast %96 : vector<32x1xf32> to vector<32x32xf32>
    %98 = arith.mulf %93, %97 : vector<32x32xf32>
    %99 = arith.truncf %98 : vector<32x32xf32> to vector<32x32xbf16>
    %cst_33 = arith.constant dense<0.000000e+00> : vector<32x128xf32>
    %100 = tpu.matmul %99, %87, %cst_33 {dimension_numbers = #tpu.dot_dimension_numbers<[1], [0], [0], [1], [0, 0, 1, 1], [], []>} : vector<32x32xbf16>, vector<32x128xbf16>, vector<32x128xf32> -> vector<32x128xf32>
    %c32_34 = arith.constant 32 : index
    %c128_35 = arith.constant 128 : index
    %101 = vector.load %arg11[%c32_34, %c128_35] : memref<64x256xf32, #tpu.memory_space<vmem>>, vector<32x128xf32>
    tpu.vector_store %arg11[%c32_34, %c128_35], %100 {strides = array<i32>} : memref<64x256xf32, #tpu.memory_space<vmem>>, vector<32x128xf32>,
    %c0_36 = arith.constant 0 : index
    %c0_37 = arith.constant 0 : index
    %102 = vector.load %arg11[%c0_36, %c0_37] : memref<64x256xf32, #tpu.memory_space<vmem>>, vector<64x256xf32>
    %103 = arith.truncf %102 : vector<64x256xf32> to vector<64x256xbf16>
    %c0_38 = arith.constant 0 : index
    %c0_39 = arith.constant 0 : index
    %c0_40 = arith.constant 0 : index
    %104 = vector.load %arg5[%c0_38, %c0_39, %c0_40] : memref<1x256x256xbf16, #tpu.memory_space<vmem>>, vector<1x256x256xbf16>
    %105 = vector.shape_cast %104 : vector<1x256x256xbf16> to vector<256x256xbf16>
    %cst_41 = arith.constant dense<0.000000e+00> : vector<64x256xf32>
    %106 = tpu.matmul %103, %105, %cst_41 {dimension_numbers = #tpu.dot_dimension_numbers<[1], [0], [0], [1], [0, 0, 1, 1], [], []>} : vector<64x256xbf16>, vector<256x256xbf16>, vector<64x256xf32> -> vector<64x256xf32>
    %107 = vector.broadcast %9 : vector<1x256xf32> to vector<64x256xf32>
    %108 = arith.addf %106, %107 : vector<64x256xf32>
    %109 = arith.addf %3, %108 : vector<64x256xf32>
    %cst_42 = arith.constant dense<0.000000e+00> : vector<64xf32>
    %110 = vector.multi_reduction <add>, %109, %cst_42 [1] : vector<64x256xf32> to vector<64xf32>
    %111 = vector.shape_cast %110 : vector<64xf32> to vector<64x1xf32>
    %cst_43 = arith.constant 2.560000e+02 : f32
    %112 = vector.broadcast %cst_43 : f32 to vector<64x1xf32>
    %113 = arith.divf %111, %112 : vector<64x1xf32>
    %114 = vector.broadcast %113 : vector<64x1xf32> to vector<64x256xf32>
    %115 = arith.subf %109, %114 : vector<64x256xf32>
    %116 = arith.mulf %115, %115 : vector<64x256xf32>
    %cst_44 = arith.constant dense<0.000000e+00> : vector<64xf32>
    %117 = vector.multi_reduction <add>, %116, %cst_44 [1] : vector<64x256xf32> to vector<64xf32>
    %118 = vector.shape_cast %117 : vector<64xf32> to vector<64x1xf32>
    %cst_45 = arith.constant 2.560000e+02 : f32
    %119 = vector.broadcast %cst_45 : f32 to vector<64x1xf32>
    %120 = arith.divf %118, %119 : vector<64x1xf32>
    %121 = vector.broadcast %113 : vector<64x1xf32> to vector<64x256xf32>
    %122 = arith.subf %109, %121 : vector<64x256xf32>
    %cst_46 = arith.constant 9.99999974E-6 : f32
    %123 = vector.broadcast %cst_46 : f32 to vector<64x1xf32>
    %124 = arith.addf %120, %123 : vector<64x1xf32>
    %125 = math.rsqrt %124 : vector<64x1xf32>
    %126 = vector.broadcast %125 : vector<64x1xf32> to vector<64x256xf32>
    %127 = arith.mulf %122, %126 : vector<64x256xf32>
    %128 = vector.broadcast %10 : vector<1x256xf32> to vector<64x256xf32>
    %129 = arith.mulf %127, %128 : vector<64x256xf32>
    %130 = vector.broadcast %11 : vector<1x256xf32> to vector<64x256xf32>
    %131 = arith.addf %129, %130 : vector<64x256xf32>
    %132 = arith.truncf %131 : vector<64x256xf32> to vector<64x256xbf16>
    %c0_47 = arith.constant 0 : index
    %c0_48 = arith.constant 0 : index
    %c0_49 = arith.constant 0 : index
    %133 = vector.load %arg6[%c0_47, %c0_48, %c0_49] : memref<1x256x512xbf16, #tpu.memory_space<vmem>>, vector<1x256x512xbf16>
    %134 = vector.shape_cast %133 : vector<1x256x512xbf16> to vector<256x512xbf16>
    %cst_50 = arith.constant dense<0.000000e+00> : vector<64x512xf32>
    %135 = tpu.matmul %132, %134, %cst_50 {dimension_numbers = #tpu.dot_dimension_numbers<[1], [0], [0], [1], [0, 0, 1, 1], [], []>} : vector<64x256xbf16>, vector<256x512xbf16>, vector<64x512xf32> -> vector<64x512xf32>
    %136 = vector.broadcast %12 : vector<1x512xf32> to vector<64x512xf32>
    %137 = arith.addf %135, %136 : vector<64x512xf32>
    %cst_51 = arith.constant 0.000000e+00 : f32
    %138 = vector.broadcast %cst_51 : f32 to vector<64x512xf32>
    %139 = arith.maximumf %137, %138 : vector<64x512xf32>
    %140 = arith.truncf %139 : vector<64x512xf32> to vector<64x512xbf16>
    %c0_52 = arith.constant 0 : index
    %c0_53 = arith.constant 0 : index
    %c0_54 = arith.constant 0 : index
    %141 = vector.load %arg7[%c0_52, %c0_53, %c0_54] : memref<1x512x256xbf16, #tpu.memory_space<vmem>>, vector<1x512x256xbf16>
    %142 = vector.shape_cast %141 : vector<1x512x256xbf16> to vector<512x256xbf16>
    %cst_55 = arith.constant dense<0.000000e+00> : vector<64x256xf32>
    %143 = tpu.matmul %140, %142, %cst_55 {dimension_numbers = #tpu.dot_dimension_numbers<[1], [0], [0], [1], [0, 0, 1, 1], [], []>} : vector<64x512xbf16>, vector<512x256xbf16>, vector<64x256xf32> -> vector<64x256xf32>
    %144 = vector.broadcast %13 : vector<1x256xf32> to vector<64x256xf32>
    %145 = arith.addf %143, %144 : vector<64x256xf32>
    %146 = arith.addf %131, %145 : vector<64x256xf32>
    %cst_56 = arith.constant dense<0.000000e+00> : vector<64xf32>
    %147 = vector.multi_reduction <add>, %146, %cst_56 [1] : vector<64x256xf32> to vector<64xf32>
    %148 = vector.shape_cast %147 : vector<64xf32> to vector<64x1xf32>
    %cst_57 = arith.constant 2.560000e+02 : f32
    %149 = vector.broadcast %cst_57 : f32 to vector<64x1xf32>
    %150 = arith.divf %148, %149 : vector<64x1xf32>
    %151 = vector.broadcast %150 : vector<64x1xf32> to vector<64x256xf32>
    %152 = arith.subf %146, %151 : vector<64x256xf32>
    %153 = arith.mulf %152, %152 : vector<64x256xf32>
    %cst_58 = arith.constant dense<0.000000e+00> : vector<64xf32>
    %154 = vector.multi_reduction <add>, %153, %cst_58 [1] : vector<64x256xf32> to vector<64xf32>
    %155 = vector.shape_cast %154 : vector<64xf32> to vector<64x1xf32>
    %cst_59 = arith.constant 2.560000e+02 : f32
    %156 = vector.broadcast %cst_59 : f32 to vector<64x1xf32>
    %157 = arith.divf %155, %156 : vector<64x1xf32>
    %158 = vector.broadcast %150 : vector<64x1xf32> to vector<64x256xf32>
    %159 = arith.subf %146, %158 : vector<64x256xf32>
    %cst_60 = arith.constant 9.99999974E-6 : f32
    %160 = vector.broadcast %cst_60 : f32 to vector<64x1xf32>
    %161 = arith.addf %157, %160 : vector<64x1xf32>
    %162 = math.rsqrt %161 : vector<64x1xf32>
    %163 = vector.broadcast %162 : vector<64x1xf32> to vector<64x256xf32>
    %164 = arith.mulf %159, %163 : vector<64x256xf32>
    %165 = vector.broadcast %14 : vector<1x256xf32> to vector<64x256xf32>
    %166 = arith.mulf %164, %165 : vector<64x256xf32>
    %167 = vector.broadcast %15 : vector<1x256xf32> to vector<64x256xf32>
    %168 = arith.addf %166, %167 : vector<64x256xf32>
    %c0_61 = arith.constant 0 : index
    %c0_62 = arith.constant 0 : index
    %169 = vector.load %arg10[%c0_61, %c0_62] : memref<64x256xf32, #tpu.memory_space<vmem>>, vector<64x256xf32>
    tpu.vector_store %arg10[%c0_61, %c0_62], %168 {strides = array<i32>} : memref<64x256xf32, #tpu.memory_space<vmem>>, vector<64x256xf32>,
    %c1_i32 = arith.constant 1 : i32
    %170 = arith.cmpi eq, %arg0, %c1_i32 : i32
    %171 = arith.extui %170 : i1 to i32
    %c0_i32_63 = arith.constant 0 : i32
    %172 = arith.cmpi ne, %171, %c0_i32_63 : i32
    scf.if %172 {
      %c0_64 = arith.constant 0 : index
      %c0_65 = arith.constant 0 : index
      %173 = vector.load %arg9[%c0_64, %c0_65] : memref<64x256xf32, #tpu.memory_space<vmem>>, vector<64x256xf32>
      tpu.vector_store %arg9[%c0_64, %c0_65], %168 {strides = array<i32>} : memref<64x256xf32, #tpu.memory_space<vmem>>, vector<64x256xf32>,
    } else {
    }
    return
  }
  func.func @transform_0(%arg0: i32) -> (i32, i32) {
    %c0_i32 = arith.constant 0 : i32
    %c0_i32_0 = arith.constant 0 : i32
    %c0_i32_1 = arith.constant 0 : i32
    return %c0_i32, %c0_i32_0 : i32, i32
  }
  func.func @transform_1(%arg0: i32) -> (i32, i32) {
    %c0_i32 = arith.constant 0 : i32
    %c0_i32_0 = arith.constant 0 : i32
    %c0_i32_1 = arith.constant 0 : i32
    return %c0_i32, %c0_i32_0 : i32, i32
  }
  func.func @transform_2(%arg0: i32) -> (i32, i32, i32) {
    %c0_i32 = arith.constant 0 : i32
    %c0_i32_0 = arith.constant 0 : i32
    %c0_i32_1 = arith.constant 0 : i32
    return %arg0, %c0_i32, %c0_i32_0 : i32, i32, i32
  }
  func.func @transform_3(%arg0: i32) -> (i32, i32, i32) {
    %c0_i32 = arith.constant 0 : i32
    %c0_i32_0 = arith.constant 0 : i32
    %c0_i32_1 = arith.constant 0 : i32
    return %arg0, %c0_i32, %c0_i32_0 : i32, i32, i32
  }
  func.func @transform_4(%arg0: i32) -> (i32, i32, i32) {
    %c0_i32 = arith.constant 0 : i32
    %c0_i32_0 = arith.constant 0 : i32
    %c0_i32_1 = arith.constant 0 : i32
    return %arg0, %c0_i32, %c0_i32_0 : i32, i32, i32
  }
  func.func @transform_5(%arg0: i32) -> (i32, i32, i32) {
    %c0_i32 = arith.constant 0 : i32
    %c0_i32_0 = arith.constant 0 : i32
    %c0_i32_1 = arith.constant 0 : i32
    return %arg0, %c0_i32, %c0_i32_0 : i32, i32, i32
  }
  func.func @transform_6(%arg0: i32) -> (i32, i32, i32) {
    %c0_i32 = arith.constant 0 : i32
    %c0_i32_0 = arith.constant 0 : i32
    %c0_i32_1 = arith.constant 0 : i32
    return %arg0, %c0_i32, %c0_i32_0 : i32, i32, i32
  }
  func.func @transform_7(%arg0: i32) -> (i32, i32, i32) {
    %c0_i32 = arith.constant 0 : i32
    %c0_i32_0 = arith.constant 0 : i32
    %c0_i32_1 = arith.constant 0 : i32
    return %arg0, %c0_i32, %c0_i32_0 : i32, i32, i32
  }
  func.func @transform_8(%arg0: i32) -> (i32, i32) {
    %c0_i32 = arith.constant 0 : i32
    %c0_i32_0 = arith.constant 0 : i32
    %c0_i32_1 = arith.constant 0 : i32
    return %c0_i32, %c0_i32_0 : i32, i32
  }
}

</mosaic_0001>

<llo_original>
// kernel: transformer_encoder_forward.1
$region0: #{transformer_encoder_forward.1}
  #allocation0 [shape = 'u32[]', space=smem, size = 0x4, offset = 0x4, fixed_abs, tag = 'smem constant byte address 0x4 - core index']
  #allocation1 [shape = 'u32[144,128]{1,0:T(1,128)}', space=vmem, size = 0x12000, scoped, tag = 'internal scratch']
  #allocation2 [shape = 'f32[64,256]{1,0:T(8,128)}', space=vmem, size = 0x10000, scoped, tag = 'scratch operand']
  #allocation3 [shape = 'f32[64,256]{1,0:T(8,128)}', space=vmem, size = 0x10000, scoped, tag = 'scratch operand']
  %s0 = inlined_call_operand.vmem [shape: f32[64,256], index: 0, kind: input, shape index: {}]
  %s1 = inlined_call_operand.vmem [shape: f32[64,256], index: 1, kind: input, shape index: {}]
  %s2 = inlined_call_operand.hbm [shape: bf16[2,256,512], index: 2, kind: input, shape index: {}]
  %s3 = inlined_call_operand.vmem [shape: bf16[2,256,256], index: 3, kind: input, shape index: {}]
  %s4 = inlined_call_operand.hbm [shape: bf16[2,256,256], index: 4, kind: input, shape index: {}]
  %s5 = inlined_call_operand.hbm [shape: bf16[2,256,512], index: 5, kind: input, shape index: {}]
  %s6 = inlined_call_operand.hbm [shape: bf16[2,512,256], index: 6, kind: input, shape index: {}]
  %s7 = inlined_call_operand.hbm [shape: f32[2,16,512], index: 7, kind: input, shape index: {}]
  %s8 = inlined_call_operand.vmem [shape: f32[64,256], index: 8, kind: output, shape index: {}]
  %s9 = sld [smem:[#allocation0]]
  $region93: #{transformer_encoder_forward.1} parent=0
    _
  %s11 = ssub.s32 1, %s9
  %s12 = scalar_select 0, %s11, %s9
  $region1: #{transformer_encoder_forward.1} parent=0
    #allocation4 [shape = 'u8[524288]{0}', space=vmem, size = 0x80000, scoped, tag = 'input window, operand 2']
    #allocation5 [shape = 's32[2]{0}', space=sflag, size = 0x8, scoped, tag = 'scoped memory for transformer_encoder_forward.1']
    #allocation6 [shape = 'u8[262144]{0}', space=vmem, size = 0x40000, scoped, tag = 'input window, operand 4']
    #allocation7 [shape = 's32[2]{0}', space=sflag, size = 0x8, scoped, tag = 'scoped memory for transformer_encoder_forward.1']
    #allocation8 [shape = 'u8[524288]{0}', space=vmem, size = 0x80000, scoped, tag = 'input window, operand 5']
    #allocation9 [shape = 'u8[524288]{0}', space=vmem, size = 0x80000, scoped, tag = 'input window, operand 6']
    #allocation10 [shape = 's32[2]{0}', space=sflag, size = 0x8, scoped, tag = 'scoped memory for transformer_encoder_forward.1']
    #allocation11 [shape = 'u8[65536]{0}', space=vmem, size = 0x10000, scoped, tag = 'input window, operand 7']
    %13 = vsyncpa [#allocation5], 0
    %s14 = scalar_lea.sflag [#allocation5], 1
    %15 = vsyncpa %s14, 0
    %16 = vsyncpa [#allocation7], 0
    %s17 = scalar_lea.sflag [#allocation7], 1
    %18 = vsyncpa %s17, 0
    %19 = vsyncpa [#allocation10], 0
    %s20 = scalar_lea.sflag [#allocation10], 1
    %21 = vsyncpa %s20, 0
    loop: start=0, step=1, limit=4
    $region2: #{transformer_encoder_forward.1} parent=1 // loop_pre_header
      _
    $region3: #{transformer_encoder_forward.1} parent=1 // loop_header
      %s23 = sphi 0, %s27
      %p24 = scmp.ge.s32.totalorder %s23, 4
      %s31 = sphi 0, %s31
      %s33 = sphi 0, %s31
      %s34 = sphi 0, %s33
      %s48 = sphi 0, %s34
      %s52 = sphi 0, %s52
      %s54 = sphi 0, %s52
      %s55 = sphi 0, %s54
      %s69 = sphi 0, %s55
      %s75 = sphi 0, %s77
      %s78 = sphi 0, %s75
      %s79 = sphi 0, %s78
      %s95 = sphi 0, %s79
      %s101 = sphi 0, %s103
      %s104 = sphi 0, %s101
      %s105 = sphi 0, %s104
      %s121 = sphi 0, %s105
      %s127 = sphi 0, %s129
      %s130 = sphi 0, %s127
      %s131 = sphi 0, %s130
      %s147 = sphi 0, %s131
      %s153 = sphi 0, %s155
      %s156 = sphi 0, %s153
      %s157 = sphi 0, %s156
      %s173 = sphi 0, %s157
      %s179 = sphi 0, %s181
      %s182 = sphi 0, %s179
      %s183 = sphi 0, %s182
      %s199 = sphi 0, %s183
      %s205 = sphi 0, %s207
      %s208 = sphi 0, %s205
      %s209 = sphi 0, %s208
      %s225 = sphi 0, %s209
      %s229 = sphi 0, %s229
      %s231 = sphi 0, %s229
      %s232 = sphi 0, %s231
      %s246 = sphi 0, %s232
    $region4: #{transformer_encoder_forward.1} parent=1 // loop_header_branch
      %26 = sbr.rel (%p24) target = $region8
    $region5: #{transformer_encoder_forward.1} parent=1 // loop_body
      %s28 = ssub.s32 %s23, 1
      %s29 = ssub.s32 %s23, 2
      %s30 = sadd.s32 %s23, 1
      %s32 = sadd.s32 %s31, 1
      %p35 = scmp.eq.s32.totalorder %s23, 1
      %p36 = scmp.ne.s32.totalorder %s31, %s33
      %p37 = scmp.eq.s32.totalorder %s23, 0
      %p38 = por %p36, %p37
      %p39 = scmp.ne.s32.totalorder %s31, %s33
      %p40 = scmp.eq.s32.totalorder %s28, 1
      %p41 = por %p39, %p40
      %p42 = scmp.ne.s32.totalorder %s33, %s34
      %p43 = scmp.eq.s32.totalorder %s28, 0
      %p44 = por %p42, %p43
      %p45 = scmp.ne.s32.totalorder %s33, %s34
      %p46 = scmp.eq.s32.totalorder %s29, 1
      %p47 = por %p45, %p46
      %p49 = scmp.ne.s32.totalorder %s34, %s48
      %p50 = scmp.eq.s32.totalorder %s29, 0
      %p51 = por %p49, %p50
      %s53 = sadd.s32 %s52, 1
      %p56 = scmp.eq.s32.totalorder %s23, 1
      %p57 = scmp.ne.s32.totalorder %s52, %s54
      %p58 = scmp.eq.s32.totalorder %s23, 0
      %p59 = por %p57, %p58
      %p60 = scmp.ne.s32.totalorder %s52, %s54
      %p61 = scmp.eq.s32.totalorder %s28, 1
      %p62 = por %p60, %p61
      %p63 = scmp.ne.s32.totalorder %s54, %s55
      %p64 = scmp.eq.s32.totalorder %s28, 0
      %p65 = por %p63, %p64
      %p66 = scmp.ne.s32.totalorder %s54, %s55
      %p67 = scmp.eq.s32.totalorder %s29, 1
      %p68 = por %p66, %p67
      %p70 = scmp.ne.s32.totalorder %s55, %s69
      %p71 = scmp.eq.s32.totalorder %s29, 0
      %p72 = por %p70, %p71
      %s73 = ssub.s32 %s23, %s30
      %p74 = scmp.eq.s32.totalorder %s73, 0
      %s76 = sadd.s32 %s75, 1
      %s77 = scalar_select %p74, %s75, %s76
      %p80 = pneg %p74
      %p81 = scmp.eq.s32.totalorder %s23, 1
      %p82 = por %p80, %p81
      %p83 = scmp.ne.s32.totalorder %s75, %s78
      %p84 = scmp.eq.s32.totalorder %s23, 0
      %p85 = por %p83, %p84
      %p86 = scmp.ne.s32.totalorder %s75, %s78
      %p87 = scmp.eq.s32.totalorder %s28, 1
      %p88 = por %p86, %p87
      %p89 = scmp.ne.s32.totalorder %s78, %s79
      %p90 = scmp.eq.s32.totalorder %s28, 0
      %p91 = por %p89, %p90
      %p92 = scmp.ne.s32.totalorder %s78, %s79
      %p93 = scmp.eq.s32.totalorder %s29, 1
      %p94 = por %p92, %p93
      %p96 = scmp.ne.s32.totalorder %s79, %s95
      %p97 = scmp.eq.s32.totalorder %s29, 0
      %p98 = por %p96, %p97
      %s99 = ssub.s32 %s23, %s30
      %p100 = scmp.eq.s32.totalorder %s99, 0
      %s102 = sadd.s32 %s101, 1
      %s103 = scalar_select %p100, %s101, %s102
      %p106 = pneg %p100
      %p107 = scmp.eq.s32.totalorder %s23, 1
      %p108 = por %p106, %p107
      %p109 = scmp.ne.s32.totalorder %s101, %s104
      %p110 = scmp.eq.s32.totalorder %s23, 0
      %p111 = por %p109, %p110
      %p112 = scmp.ne.s32.totalorder %s101, %s104
      %p113 = scmp.eq.s32.totalorder %s28, 1
      %p114 = por %p112, %p113
      %p115 = scmp.ne.s32.totalorder %s104, %s105
      %p116 = scmp.eq.s32.totalorder %s28, 0
      %p117 = por %p115, %p116
      %p118 = scmp.ne.s32.totalorder %s104, %s105
      %p119 = scmp.eq.s32.totalorder %s29, 1
      %p120 = por %p118, %p119
      %p122 = scmp.ne.s32.totalorder %s105, %s121
      %p123 = scmp.eq.s32.totalorder %s29, 0
      %p124 = por %p122, %p123
      %s125 = ssub.s32 %s23, %s30
      %p126 = scmp.eq.s32.totalorder %s125, 0
      %s128 = sadd.s32 %s127, 1
      %s129 = scalar_select %p126, %s127, %s128
      %p132 = pneg %p126
      %p133 = scmp.eq.s32.totalorder %s23, 1
      %p134 = por %p132, %p133
      %p135 = scmp.ne.s32.totalorder %s127, %s130
      %p136 = scmp.eq.s32.totalorder %s23, 0
      %p137 = por %p135, %p136
      %p138 = scmp.ne.s32.totalorder %s127, %s130
      %p139 = scmp.eq.s32.totalorder %s28, 1
      %p140 = por %p138, %p139
      %p141 = scmp.ne.s32.totalorder %s130, %s131
      %p142 = scmp.eq.s32.totalorder %s28, 0
      %p143 = por %p141, %p142
      %p144 = scmp.ne.s32.totalorder %s130, %s131
      %p145 = scmp.eq.s32.totalorder %s29, 1
      %p146 = por %p144, %p145
      %p148 = scmp.ne.s32.totalorder %s131, %s147
      %p149 = scmp.eq.s32.totalorder %s29, 0
      %p150 = por %p148, %p149
      %s151 = ssub.s32 %s23, %s30
      %p152 = scmp.eq.s32.totalorder %s151, 0
      %s154 = sadd.s32 %s153, 1
      %s155 = scalar_select %p152, %s153, %s154
      %p158 = pneg %p152
      %p159 = scmp.eq.s32.totalorder %s23, 1
      %p160 = por %p158, %p159
      %p161 = scmp.ne.s32.totalorder %s153, %s156
      %p162 = scmp.eq.s32.totalorder %s23, 0
      %p163 = por %p161, %p162
      %p164 = scmp.ne.s32.totalorder %s153, %s156
      %p165 = scmp.eq.s32.totalorder %s28, 1
      %p166 = por %p164, %p165
      %p167 = scmp.ne.s32.totalorder %s156, %s157
      %p168 = scmp.eq.s32.totalorder %s28, 0
      %p169 = por %p167, %p168
      %p170 = scmp.ne.s32.totalorder %s156, %s157
      %p171 = scmp.eq.s32.totalorder %s29, 1
      %p172 = por %p170, %p171
      %p174 = scmp.ne.s32.totalorder %s157, %s173
      %p175 = scmp.eq.s32.totalorder %s29, 0
      %p176 = por %p174, %p175
      %s177 = ssub.s32 %s23, %s30
      %p178 = scmp.eq.s32.totalorder %s177, 0
      %s180 = sadd.s32 %s179, 1
      %s181 = scalar_select %p178, %s179, %s180
      %p184 = pneg %p178
      %p185 = scmp.eq.s32.totalorder %s23, 1
      %p186 = por %p184, %p185
      %p187 = scmp.ne.s32.totalorder %s179, %s182
      %p188 = scmp.eq.s32.totalorder %s23, 0
      %p189 = por %p187, %p188
      %p190 = scmp.ne.s32.totalorder %s179, %s182
      %p191 = scmp.eq.s32.totalorder %s28, 1
      %p192 = por %p190, %p191
      %p193 = scmp.ne.s32.totalorder %s182, %s183
      %p194 = scmp.eq.s32.totalorder %s28, 0
      %p195 = por %p193, %p194
      %p196 = scmp.ne.s32.totalorder %s182, %s183
      %p197 = scmp.eq.s32.totalorder %s29, 1
      %p198 = por %p196, %p197
      %p200 = scmp.ne.s32.totalorder %s183, %s199
      %p201 = scmp.eq.s32.totalorder %s29, 0
      %p202 = por %p200, %p201
      %s203 = ssub.s32 %s23, %s30
      %p204 = scmp.eq.s32.totalorder %s203, 0
      %s206 = sadd.s32 %s205, 1
      %s207 = scalar_select %p204, %s205, %s206
      %p210 = pneg %p204
      %p211 = scmp.eq.s32.totalorder %s23, 1
      %p212 = por %p210, %p211
      %p213 = scmp.ne.s32.totalorder %s205, %s208
      %p214 = scmp.eq.s32.totalorder %s23, 0
      %p215 = por %p213, %p214
      %p216 = scmp.ne.s32.totalorder %s205, %s208
      %p217 = scmp.eq.s32.totalorder %s28, 1
      %p218 = por %p216, %p217
      %p219 = scmp.ne.s32.totalorder %s208, %s209
      %p220 = scmp.eq.s32.totalorder %s28, 0
      %p221 = por %p219, %p220
      %p222 = scmp.ne.s32.totalorder %s208, %s209
      %p223 = scmp.eq.s32.totalorder %s29, 1
      %p224 = por %p222, %p223
      %p226 = scmp.ne.s32.totalorder %s209, %s225
      %p227 = scmp.eq.s32.totalorder %s29, 0
      %p228 = por %p226, %p227
      %s230 = sadd.s32 %s229, 1
      %p233 = scmp.eq.s32.totalorder %s23, 1
      %p234 = scmp.ne.s32.totalorder %s229, %s231
      %p235 = scmp.eq.s32.totalorder %s23, 0
      %p236 = por %p234, %p235
      %p237 = scmp.ne.s32.totalorder %s229, %s231
      %p238 = scmp.eq.s32.totalorder %s28, 1
      %p239 = por %p237, %p238
      %p240 = scmp.ne.s32.totalorder %s231, %s232
      %p241 = scmp.eq.s32.totalorder %s28, 0
      %p242 = por %p240, %p241
      %p243 = scmp.ne.s32.totalorder %s231, %s232
      %p244 = scmp.eq.s32.totalorder %s29, 1
      %p245 = por %p243, %p244
      %p247 = scmp.ne.s32.totalorder %s232, %s246
      %p248 = scmp.eq.s32.totalorder %s29, 0
      %p249 = por %p247, %p248
      %p250 = scmp.le.s32.totalorder 1, %s23
      %p251 = scmp.lt.s32.totalorder %s23, 3
      %p252 = pnand %p250, %p251
      %p253 = pneg %p252
      // Predicated region
      $region9: #{transformer_encoder_forward.1} parent=5 // pred_check
        _
      $region10: #{transformer_encoder_forward.1} parent=5 // pred_check_branch
        %255 = sbr.rel (%p252) target = $region12
      $region11: #{transformer_encoder_forward.1} parent=5 // pred_region
        %s256 = ssub.s32 %s23, 1
        // Predicated region
        $region13: #{transformer_encoder_forward.1} parent=11 // pred_check
          %p257 = pneg %p44
        $region14: #{transformer_encoder_forward.1} parent=11 // pred_check_branch
          %259 = sbr.rel (%p257) target = $region16
        $region15: #{transformer_encoder_forward.1} parent=11 // pred_region
          _
        $region16: #{transformer_encoder_forward.1} parent=11 // pred_fallthru
          _
        // Predicated region
        $region17: #{transformer_encoder_forward.1} parent=11 // pred_check
          %p260 = pneg %p65
        $region18: #{transformer_encoder_forward.1} parent=11 // pred_check_branch
          %262 = sbr.rel (%p260) target = $region20
        $region19: #{transformer_encoder_forward.1} parent=11 // pred_region
          _
        $region20: #{transformer_encoder_forward.1} parent=11 // pred_fallthru
          _
      $region12: #{transformer_encoder_forward.1} parent=5 // pred_fallthru
        _
      %p263 = scmp.lt.s32.totalorder %s23, 2
      // Predicated region
      $region21: #{transformer_encoder_forward.1} parent=5 // pred_check
        %p264 = pneg %p263
      $region22: #{transformer_encoder_forward.1} parent=5 // pred_check_branch
        %266 = sbr.rel (%p264) target = $region24
      $region23: #{transformer_encoder_forward.1} parent=5 // pred_region
        // Predicated region
        $region25: #{transformer_encoder_forward.1} parent=23 // pred_check
          %p267 = pneg %p85
        $region26: #{transformer_encoder_forward.1} parent=23 // pred_check_branch
          %269 = sbr.rel (%p267) target = $region28
        $region27: #{transformer_encoder_forward.1} parent=23 // pred_region
          %s270 = sand.u32 %s75, 1
          %s271 = scalar_lea.sflag [#allocation5], %s270
          %s272 = sand.u32 %s75, 1
          %s273 = smul.addr %s272, 512
          %s274 = scalar_lea.vmem [#allocation4], %s273
          %s276 = ssub.s32 8192, 8192
          %277 = vsyncadd %s271, %s276
          %s278 = smul.addr %s23, 128
          %s279 = smul.addr %s278, 64
          %s280 = scalar_lea.hbm %s2, %s279
          %s281 = sshll.u32 %s274, 4
          %s282 = int_to_ptr.vmem [resolvable:$true] %s281
          %287 = dma.hbm_to_vmem [thread:$0]  %s280, 8192, %s282, %s271, 256, 256, 16
        $region28: #{transformer_encoder_forward.1} parent=23 // pred_fallthru
          _
        // Predicated region
        $region29: #{transformer_encoder_forward.1} parent=23 // pred_check
          %p288 = pneg %p111
        $region30: #{transformer_encoder_forward.1} parent=23 // pred_check_branch
          %290 = sbr.rel (%p288) target = $region32
        $region31: #{transformer_encoder_forward.1} parent=23 // pred_region
          %p291 = scmp.lt.s32.totalorder %s23, 1
          %s292 = scalar_select %p291, %s23, 1
          %s293 = smul.addr %s292, 64
          %s294 = smul.addr %s293, 4
          %s295 = scalar_lea.vmem %s3, %s294
        $region32: #{transformer_encoder_forward.1} parent=23 // pred_fallthru
          _
        // Predicated region
        $region33: #{transformer_encoder_forward.1} parent=23 // pred_check
          %p296 = pneg %p137
        $region34: #{transformer_encoder_forward.1} parent=23 // pred_check_branch
          %298 = sbr.rel (%p296) target = $region36
        $region35: #{transformer_encoder_forward.1} parent=23 // pred_region
          %s299 = sand.u32 %s23, 1
          %s300 = scalar_lea.sflag [#allocation7], %s299
          %s301 = sand.u32 %s127, 1
          %s302 = smul.addr %s301, 256
          %s303 = scalar_lea.vmem [#allocation6], %s302
          %s305 = ssub.s32 4096, 4096
          %306 = vsyncadd %s300, %s305
          %s307 = smul.addr %s23, 64
          %s308 = smul.addr %s307, 64
          %s309 = scalar_lea.hbm %s4, %s308
          %s310 = sshll.u32 %s303, 4
          %s311 = int_to_ptr.vmem [resolvable:$true] %s310
          %316 = dma.hbm_to_vmem [thread:$0]  %s309, 4096, %s311, %s300, 128, 128, 8
        $region36: #{transformer_encoder_forward.1} parent=23 // pred_fallthru
          _
        // Predicated region
        $region37: #{transformer_encoder_forward.1} parent=23 // pred_check
          %p317 = pneg %p163
        $region38: #{transformer_encoder_forward.1} parent=23 // pred_check_branch
          %319 = sbr.rel (%p317) target = $region40
        $region39: #{transformer_encoder_forward.1} parent=23 // pred_region
          %s320 = sand.u32 %s23, 1
          %s321 = scalar_lea.sflag [#allocation7], %s320
          %s322 = sand.u32 %s153, 1
          %s323 = smul.addr %s322, 512
          %s324 = scalar_lea.vmem [#allocation8], %s323
          %s326 = ssub.s32 8192, 8192
          %327 = vsyncadd %s321, %s326
          %s328 = smul.addr %s23, 128
          %s329 = smul.addr %s328, 64
          %s330 = scalar_lea.hbm %s5, %s329
          %s331 = sshll.u32 %s324, 4
          %s332 = int_to_ptr.vmem [resolvable:$true] %s331
          %337 = dma.hbm_to_vmem [thread:$0]  %s330, 8192, %s332, %s321, 256, 256, 16
        $region40: #{transformer_encoder_forward.1} parent=23 // pred_fallthru
          _
        // Predicated region
        $region41: #{transformer_encoder_forward.1} parent=23 // pred_check
          %p338 = pneg %p189
        $region42: #{transformer_encoder_forward.1} parent=23 // pred_check_branch
          %340 = sbr.rel (%p338) target = $region44
        $region43: #{transformer_encoder_forward.1} parent=23 // pred_region
          %s341 = sand.u32 %s23, 1
          %s342 = scalar_lea.sflag [#allocation10], %s341
          %s343 = sand.u32 %s179, 1
          %s344 = smul.addr %s343, 512
          %s345 = scalar_lea.vmem [#allocation9], %s344
          %s347 = ssub.s32 8192, 8192
          %348 = vsyncadd %s342, %s347
          %s349 = smul.addr %s23, 128
          %s350 = smul.addr %s349, 64
          %s351 = scalar_lea.hbm %s6, %s350
          %s352 = sshll.u32 %s345, 4
          %s353 = int_to_ptr.vmem [resolvable:$true] %s352
          %358 = dma.hbm_to_vmem [thread:$0]  %s351, 8192, %s353, %s342, 128, 128, 8
        $region44: #{transformer_encoder_forward.1} parent=23 // pred_fallthru
          _
        // Predicated region
        $region45: #{transformer_encoder_forward.1} parent=23 // pred_check
          %p359 = pneg %p215
        $region46: #{transformer_encoder_forward.1} parent=23 // pred_check_branch
          %361 = sbr.rel (%p359) target = $region48
        $region47: #{transformer_encoder_forward.1} parent=23 // pred_region
          %s362 = sand.u32 %s23, 1
          %s363 = scalar_lea.sflag [#allocation10], %s362
          %s364 = sand.u32 %s205, 1
          %s365 = smul.addr %s364, 64
          %s366 = scalar_lea.vmem [#allocation11], %s365
          %s368 = ssub.s32 1024, 1024
          %369 = vsyncadd %s363, %s368
          %s370 = smul.addr %s23, 8
          %s371 = smul.addr %s370, 128
          %s372 = scalar_lea.hbm %s7, %s371
          %s373 = sshll.u32 %s366, 4
          %s374 = int_to_ptr.vmem [resolvable:$true] %s373
          %379 = dma.hbm_to_vmem [thread:$0]  %s372, 1024, %s374, %s363, 512, 512, 32
        $region48: #{transformer_encoder_forward.1} parent=23 // pred_fallthru
          _
      $region24: #{transformer_encoder_forward.1} parent=5 // pred_fallthru
        _
      %p380 = scmp.le.s32.totalorder 1, %s23
      %p381 = scmp.lt.s32.totalorder %s23, 3
      %p382 = pnand %p380, %p381
      %p383 = pneg %p382
      // Predicated region
      $region49: #{transformer_encoder_forward.1} parent=5 // pred_check
        _
      $region50: #{transformer_encoder_forward.1} parent=5 // pred_check_branch
        %385 = sbr.rel (%p382) target = $region52
      $region51: #{transformer_encoder_forward.1} parent=5 // pred_region
        %s386 = ssub.s32 %s23, 1
        %s387 = sand.u32 %s78, 1
        %s388 = scalar_lea.sflag [#allocation5], %s387
        %s389 = sand.u32 %s78, 1
        %s390 = smul.addr %s389, 512
        %s391 = scalar_lea.vmem [#allocation4], %s390
        // Predicated region
        $region53: #{transformer_encoder_forward.1} parent=51 // pred_check
          %p392 = pneg %p91
        $region54: #{transformer_encoder_forward.1} parent=51 // pred_check_branch
          %394 = sbr.rel (%p392) target = $region56
        $region55: #{transformer_encoder_forward.1} parent=51 // pred_region
          %395 = dma.done %s388, 8192
        $region56: #{transformer_encoder_forward.1} parent=51 // pred_fallthru
          _
        %s396 = sand.u32 %s28, 1
        %s397 = scalar_lea.sflag [#allocation7], %s396
        %s398 = sand.u32 %s130, 1
        %s399 = smul.addr %s398, 256
        %s400 = scalar_lea.vmem [#allocation6], %s399
        // Predicated region
        $region57: #{transformer_encoder_forward.1} parent=51 // pred_check
          %p401 = pneg %p143
        $region58: #{transformer_encoder_forward.1} parent=51 // pred_check_branch
          %403 = sbr.rel (%p401) target = $region60
        $region59: #{transformer_encoder_forward.1} parent=51 // pred_region
          %404 = dma.done %s397, 4096
        $region60: #{transformer_encoder_forward.1} parent=51 // pred_fallthru
          _
        %s405 = sand.u32 %s28, 1
        %s406 = scalar_lea.sflag [#allocation7], %s405
        %s407 = sand.u32 %s156, 1
        %s408 = smul.addr %s407, 512
        %s409 = scalar_lea.vmem [#allocation8], %s408
        // Predicated region
        $region61: #{transformer_encoder_forward.1} parent=51 // pred_check
          %p410 = pneg %p169
        $region62: #{transformer_encoder_forward.1} parent=51 // pred_check_branch
          %412 = sbr.rel (%p410) target = $region64
        $region63: #{transformer_encoder_forward.1} parent=51 // pred_region
          %413 = dma.done %s406, 8192
        $region64: #{transformer_encoder_forward.1} parent=51 // pred_fallthru
          _
        %s414 = sand.u32 %s28, 1
        %s415 = scalar_lea.sflag [#allocation10], %s414
        %s416 = sand.u32 %s182, 1
        %s417 = smul.addr %s416, 512
        %s418 = scalar_lea.vmem [#allocation9], %s417
        // Predicated region
        $region65: #{transformer_encoder_forward.1} parent=51 // pred_check
          %p419 = pneg %p195
        $region66: #{transformer_encoder_forward.1} parent=51 // pred_check_branch
          %421 = sbr.rel (%p419) target = $region68
        $region67: #{transformer_encoder_forward.1} parent=51 // pred_region
          %422 = dma.done %s415, 8192
        $region68: #{transformer_encoder_forward.1} parent=51 // pred_fallthru
          _
        %s423 = sand.u32 %s28, 1
        %s424 = scalar_lea.sflag [#allocation10], %s423
        %s425 = sand.u32 %s208, 1
        %s426 = smul.addr %s425, 64
        %s427 = scalar_lea.vmem [#allocation11], %s426
        // Predicated region
        $region69: #{transformer_encoder_forward.1} parent=51 // pred_check
          %p428 = pneg %p221
        $region70: #{transformer_encoder_forward.1} parent=51 // pred_check_branch
          %430 = sbr.rel (%p428) target = $region72
        $region71: #{transformer_encoder_forward.1} parent=51 // pred_region
          %431 = dma.done %s424, 1024
        $region72: #{transformer_encoder_forward.1} parent=51 // pred_fallthru
          _
        %p432 = pneg %p44
        %p433 = pneg %p41
        %p434 = pneg %p65
        %p435 = pneg %p62
        %s436 = sand.u32 %s78, 1
        %s437 = scalar_lea.sflag [#allocation5], %s436
        %s438 = sand.u32 %s78, 1
        %s439 = smul.addr %s438, 512
        %s440 = scalar_lea.vmem [#allocation4], %s439
        %p441 = pneg %p91
        %p442 = pneg %p88
        %p443 = scmp.lt.s32.totalorder %s28, 1
        %s444 = scalar_select %p443, %s28, 1
        %s445 = smul.addr %s444, 64
        %s446 = smul.addr %s445, 4
        %s447 = scalar_lea.vmem %s3, %s446
        %p448 = pneg %p117
        %p449 = pneg %p114
        %s450 = sand.u32 %s28, 1
        %s451 = scalar_lea.sflag [#allocation7], %s450
        %s452 = sand.u32 %s130, 1
        %s453 = smul.addr %s452, 256
        %s454 = scalar_lea.vmem [#allocation6], %s453
        %p455 = pneg %p143
        %p456 = pneg %p140
        %s457 = sand.u32 %s28, 1
        %s458 = scalar_lea.sflag [#allocation7], %s457
        %s459 = sand.u32 %s156, 1
        %s460 = smul.addr %s459, 512
        %s461 = scalar_lea.vmem [#allocation8], %s460
        %p462 = pneg %p169
        %p463 = pneg %p166
        %s464 = sand.u32 %s28, 1
        %s465 = scalar_lea.sflag [#allocation10], %s464
        %s466 = sand.u32 %s182, 1
        %s467 = smul.addr %s466, 512
        %s468 = scalar_lea.vmem [#allocation9], %s467
        %p469 = pneg %p195
        %p470 = pneg %p192
        %s471 = sand.u32 %s28, 1
        %s472 = scalar_lea.sflag [#allocation10], %s471
        %s473 = sand.u32 %s208, 1
        %s474 = smul.addr %s473, 64
        %s475 = scalar_lea.vmem [#allocation11], %s474
        %p476 = pneg %p221
        %p477 = pneg %p218
        %p478 = pneg %p242
        %p479 = pneg %p239
        %p480 = scmp.lt.s32.totalorder %s28, 1
        %s481 = scalar_select %p480, %s28, 1
        %s482 = smul.addr %s481, 64
        %s483 = smul.addr %s482, 4
        %s484 = scalar_lea.vmem %s3, %s483
        %p486 = scmp.eq.s32.totalorder %s28, 0
        // Predicated region
        $region73: #{transformer_encoder_forward.1} parent=51 // pred_check
          %p487 = pneg %p486
        $region74: #{transformer_encoder_forward.1} parent=51 // pred_check_branch
          %489 = sbr.rel (%p487) target = $region76
        $region75: #{transformer_encoder_forward.1} parent=51 // pred_region
          %v490 = vld [vmem:[%s0] sm:$0xff]
          %v491 = vld [vmem:[%s0 + $0x8] sm:$0xff]
          %v492 = vld [vmem:[%s0 + $0x10] sm:$0xff]
          %v493 = vld [vmem:[%s0 + $0x18] sm:$0xff]
          %v494 = vld [vmem:[%s0 + $0x20] sm:$0xff]
          %v495 = vld [vmem:[%s0 + $0x28] sm:$0xff]
          %v496 = vld [vmem:[%s0 + $0x30] sm:$0xff]
          %v497 = vld [vmem:[%s0 + $0x38] sm:$0xff]
          %v498 = vld [vmem:[%s0 + $0x40] sm:$0xff]
          %v499 = vld [vmem:[%s0 + $0x48] sm:$0xff]
          %v500 = vld [vmem:[%s0 + $0x50] sm:$0xff]
          %v501 = vld [vmem:[%s0 + $0x58] sm:$0xff]
          %v502 = vld [vmem:[%s0 + $0x60] sm:$0xff]
          %v503 = vld [vmem:[%s0 + $0x68] sm:$0xff]
          %v504 = vld [vmem:[%s0 + $0x70] sm:$0xff]
          %v505 = vld [vmem:[%s0 + $0x78] sm:$0xff]
          %506 = vst [vmem:[#allocation2] sm:$0xff] %v490
          %507 = vst [vmem:[#allocation2 + $0x8] sm:$0xff] %v491
          %508 = vst [vmem:[#allocation2 + $0x10] sm:$0xff] %v492
          %509 = vst [vmem:[#allocation2 + $0x18] sm:$0xff] %v493
          %510 = vst [vmem:[#allocation2 + $0x20] sm:$0xff] %v494
          %511 = vst [vmem:[#allocation2 + $0x28] sm:$0xff] %v495
          %512 = vst [vmem:[#allocation2 + $0x30] sm:$0xff] %v496
          %513 = vst [vmem:[#allocation2 + $0x38] sm:$0xff] %v497
          %514 = vst [vmem:[#allocation2 + $0x40] sm:$0xff] %v498
          %515 = vst [vmem:[#allocation2 + $0x48] sm:$0xff] %v499
          %516 = vst [vmem:[#allocation2 + $0x50] sm:$0xff] %v500
          %517 = vst [vmem:[#allocation2 + $0x58] sm:$0xff] %v501
          %518 = vst [vmem:[#allocation2 + $0x60] sm:$0xff] %v502
          %519 = vst [vmem:[#allocation2 + $0x68] sm:$0xff] %v503
          %520 = vst [vmem:[#allocation2 + $0x70] sm:$0xff] %v504
          %521 = vst [vmem:[#allocation2 + $0x78] sm:$0xff] %v505
        $region76: #{transformer_encoder_forward.1} parent=51 // pred_fallthru
          _
        %v522 = vld [vmem:[#allocation2] sm:$0xff]
        %v523 = vld [vmem:[#allocation2 + $0x8] sm:$0xff]
        %v524 = vld [vmem:[#allocation2 + $0x10] sm:$0xff]
        %v525 = vld [vmem:[#allocation2 + $0x18] sm:$0xff]
        %v526 = vld [vmem:[#allocation2 + $0x20] sm:$0xff]
        %v527 = vld [vmem:[#allocation2 + $0x28] sm:$0xff]
        %v528 = vld [vmem:[#allocation2 + $0x30] sm:$0xff]
        %v529 = vld [vmem:[#allocation2 + $0x38] sm:$0xff]
        %v530 = vld [vmem:[#allocation2 + $0x40] sm:$0xff]
        %v531 = vld [vmem:[#allocation2 + $0x48] sm:$0xff]
        %v532 = vld [vmem:[#allocation2 + $0x50] sm:$0xff]
        %v533 = vld [vmem:[#allocation2 + $0x58] sm:$0xff]
        %v534 = vld [vmem:[#allocation2 + $0x60] sm:$0xff]
        %v535 = vld [vmem:[#allocation2 + $0x68] sm:$0xff]
        %v536 = vld [vmem:[#allocation2 + $0x70] sm:$0xff]
        %v537 = vld [vmem:[#allocation2 + $0x78] sm:$0xff]
        %v538 = vld [vmem:[%s1] sm:$0xff]
        %v539 = vld [vmem:[%s1 + $0x8] sm:$0xff]
        %v540 = vld [vmem:[%s1 + $0x10] sm:$0xff]
        %v541 = vld [vmem:[%s1 + $0x18] sm:$0xff]
        %v542 = vld [vmem:[%s1 + $0x20] sm:$0xff]
        %v543 = vld [vmem:[%s1 + $0x28] sm:$0xff]
        %v544 = vld [vmem:[%s1 + $0x30] sm:$0xff]
        %v545 = vld [vmem:[%s1 + $0x38] sm:$0xff]
        %v546 = vld [vmem:[%s1 + $0x40] sm:$0xff]
        %v547 = vld [vmem:[%s1 + $0x48] sm:$0xff]
        %v548 = vld [vmem:[%s1 + $0x50] sm:$0xff]
        %v549 = vld [vmem:[%s1 + $0x58] sm:$0xff]
        %v550 = vld [vmem:[%s1 + $0x60] sm:$0xff]
        %v551 = vld [vmem:[%s1 + $0x68] sm:$0xff]
        %v552 = vld [vmem:[%s1 + $0x70] sm:$0xff]
        %v553 = vld [vmem:[%s1 + $0x78] sm:$0xff]
        %v554 = vld [vmem:[%s427] sm:$0xff]
        %v555 = vld [vmem:[%s427 + $0x8] sm:$0xff]
        %v556 = vld [vmem:[%s427 + $0x10] sm:$0xff]
        %v557 = vld [vmem:[%s427 + $0x18] sm:$0xff]
        %v558 = vld [vmem:[%s427 + $0x20] sm:$0xff]
        %v559 = vld [vmem:[%s427 + $0x28] sm:$0xff]
        %v560 = vadd.f32 %v522, %v538
        %v561 = vadd.f32 %v523, %v539
        %v562 = vadd.f32 %v524, %v540
        %v563 = vadd.f32 %v525, %v541
        %v564 = vadd.f32 %v526, %v542
        %v565 = vadd.f32 %v527, %v543
        %v566 = vadd.f32 %v528, %v544
        %v567 = vadd.f32 %v529, %v545
        %v568 = vadd.f32 %v530, %v546
        %v569 = vadd.f32 %v531, %v547
        %v570 = vadd.f32 %v532, %v548
        %v571 = vadd.f32 %v533, %v549
        %v572 = vadd.f32 %v534, %v550
        %v573 = vadd.f32 %v535, %v551
        %v574 = vadd.f32 %v536, %v552
        %v575 = vadd.f32 %v537, %v553
        %v576 = vpack.c.bf16 %v562, %v560
        %v577 = vpack.c.bf16 %v563, %v561
        %v578 = vpack.c.bf16 %v566, %v564
        %v579 = vpack.c.bf16 %v567, %v565
        %v580 = vpack.c.bf16 %v570, %v568
        %v581 = vpack.c.bf16 %v571, %v569
        %v582 = vpack.c.bf16 %v574, %v572
        %v583 = vpack.c.bf16 %v575, %v573
        %v584 = vpack.c.bf16 %v524, %v522
        %v585 = vpack.c.bf16 %v525, %v523
        %v586 = vpack.c.bf16 %v528, %v526
        %v587 = vpack.c.bf16 %v529, %v527
        %v588 = vpack.c.bf16 %v532, %v530
        %v589 = vpack.c.bf16 %v533, %v531
        %v590 = vpack.c.bf16 %v536, %v534
        %v591 = vpack.c.bf16 %v537, %v535
        %v592 = vld [vmem:[%s391] sm:$0xff]
        %v593 = vld [vmem:[%s391 + $0x8] sm:$0xff]
        %v594 = vld [vmem:[%s391 + $0x10] sm:$0xff]
        %v595 = vld [vmem:[%s391 + $0x18] sm:$0xff]
        %v596 = vld [vmem:[%s391 + $0x20] sm:$0xff]
        %v597 = vld [vmem:[%s391 + $0x28] sm:$0xff]
        %v598 = vld [vmem:[%s391 + $0x30] sm:$0xff]
        %v599 = vld [vmem:[%s391 + $0x38] sm:$0xff]
        %v600 = vld [vmem:[%s391 + $0x40] sm:$0xff]
        %v601 = vld [vmem:[%s391 + $0x48] sm:$0xff]
        %v602 = vld [vmem:[%s391 + $0x50] sm:$0xff]
        %v603 = vld [vmem:[%s391 + $0x58] sm:$0xff]
        %v604 = vld [vmem:[%s391 + $0x60] sm:$0xff]
        %v605 = vld [vmem:[%s391 + $0x68] sm:$0xff]
        %v606 = vld [vmem:[%s391 + $0x70] sm:$0xff]
        %v607 = vld [vmem:[%s391 + $0x78] sm:$0xff]
        %v608 = vld [vmem:[%s391 + $0x80] sm:$0xff]
        %v609 = vld [vmem:[%s391 + $0x88] sm:$0xff]
        %v610 = vld [vmem:[%s391 + $0x90] sm:$0xff]
        %v611 = vld [vmem:[%s391 + $0x98] sm:$0xff]
        %v612 = vld [vmem:[%s391 + $0xa0] sm:$0xff]
        %v613 = vld [vmem:[%s391 + $0xa8] sm:$0xff]
        %v614 = vld [vmem:[%s391 + $0xb0] sm:$0xff]
        %v615 = vld [vmem:[%s391 + $0xb8] sm:$0xff]
        %v616 = vld [vmem:[%s391 + $0xc0] sm:$0xff]
        %v617 = vld [vmem:[%s391 + $0xc8] sm:$0xff]
        %v618 = vld [vmem:[%s391 + $0xd0] sm:$0xff]
        %v619 = vld [vmem:[%s391 + $0xd8] sm:$0xff]
        %v620 = vld [vmem:[%s391 + $0xe0] sm:$0xff]
        %v621 = vld [vmem:[%s391 + $0xe8] sm:$0xff]
        %v622 = vld [vmem:[%s391 + $0xf0] sm:$0xff]
        %v623 = vld [vmem:[%s391 + $0xf8] sm:$0xff]
        %v624 = vld [vmem:[%s391 + $0x100] sm:$0xff]
        %v625 = vld [vmem:[%s391 + $0x108] sm:$0xff]
        %v626 = vld [vmem:[%s391 + $0x110] sm:$0xff]
        %v627 = vld [vmem:[%s391 + $0x118] sm:$0xff]
        %v628 = vld [vmem:[%s391 + $0x120] sm:$0xff]
        %v629 = vld [vmem:[%s391 + $0x128] sm:$0xff]
        %v630 = vld [vmem:[%s391 + $0x130] sm:$0xff]
        %v631 = vld [vmem:[%s391 + $0x138] sm:$0xff]
        %v632 = vld [vmem:[%s391 + $0x140] sm:$0xff]
        %v633 = vld [vmem:[%s391 + $0x148] sm:$0xff]
        %v634 = vld [vmem:[%s391 + $0x150] sm:$0xff]
        %v635 = vld [vmem:[%s391 + $0x158] sm:$0xff]
        %v636 = vld [vmem:[%s391 + $0x160] sm:$0xff]
        %v637 = vld [vmem:[%s391 + $0x168] sm:$0xff]
        %v638 = vld [vmem:[%s391 + $0x170] sm:$0xff]
        %v639 = vld [vmem:[%s391 + $0x178] sm:$0xff]
        %v640 = vld [vmem:[%s391 + $0x180] sm:$0xff]
        %v641 = vld [vmem:[%s391 + $0x188] sm:$0xff]
        %v642 = vld [vmem:[%s391 + $0x190] sm:$0xff]
        %v643 = vld [vmem:[%s391 + $0x198] sm:$0xff]
        %v644 = vld [vmem:[%s391 + $0x1a0] sm:$0xff]
        %v645 = vld [vmem:[%s391 + $0x1a8] sm:$0xff]
        %v646 = vld [vmem:[%s391 + $0x1b0] sm:$0xff]
        %v647 = vld [vmem:[%s391 + $0x1b8] sm:$0xff]
        %v648 = vld [vmem:[%s391 + $0x1c0] sm:$0xff]
        %v649 = vld [vmem:[%s391 + $0x1c8] sm:$0xff]
        %v650 = vld [vmem:[%s391 + $0x1d0] sm:$0xff]
        %v651 = vld [vmem:[%s391 + $0x1d8] sm:$0xff]
        %v652 = vld [vmem:[%s391 + $0x1e0] sm:$0xff]
        %v653 = vld [vmem:[%s391 + $0x1e8] sm:$0xff]
        %v654 = vld [vmem:[%s391 + $0x1f0] sm:$0xff]
        %v655 = vld [vmem:[%s391 + $0x1f8] sm:$0xff]
        %v656 = vlaneseq
        %v657 = vshrl.u32 %v656, 7
        %v658 = vsub.s32 0, %v657
        %v659 = vrot.slane %v554, %v658
        %v660 = vlaneseq
        %v661 = vshrl.u32 %v660, 7
        %v662 = vsub.s32 0, %v661
        %v663 = vrot.slane %v555, %v662
        %v664 = vlaneseq
        %v665 = vshrl.u32 %v664, 7
        %v666 = vsub.s32 0, %v665
        %v667 = vrot.slane %v556, %v666
        %v668 = vlaneseq
        %v669 = vshrl.u32 %v668, 7
        %v670 = vsub.s32 0, %v669
        %v671 = vrot.slane %v557, %v670
        %v736 = vunpack.c.l.b16 %v592
        %v737 = vunpack.c.h.b16 %v592
        %v738 = vunpack.c.l.b16 %v593
        %v739 = vunpack.c.h.b16 %v593
        %v740 = vunpack.c.l.b16 %v594
        %v741 = vunpack.c.h.b16 %v594
        %v742 = vunpack.c.l.b16 %v595
        %v743 = vunpack.c.h.b16 %v595
        %v744 = vunpack.c.l.b16 %v596
        %v745 = vunpack.c.h.b16 %v596
        %v746 = vunpack.c.l.b16 %v597
        %v747 = vunpack.c.h.b16 %v597
        %v748 = vunpack.c.l.b16 %v598
        %v749 = vunpack.c.h.b16 %v598
        %v750 = vunpack.c.l.b16 %v599
        %v751 = vunpack.c.h.b16 %v599
        %v752 = vunpack.c.l.b16 %v600
        %v753 = vunpack.c.h.b16 %v600
        %v754 = vunpack.c.l.b16 %v601
        %v755 = vunpack.c.h.b16 %v601
        %v756 = vunpack.c.l.b16 %v602
        %v757 = vunpack.c.h.b16 %v602
        %v758 = vunpack.c.l.b16 %v603
        %v759 = vunpack.c.h.b16 %v603
        %v760 = vunpack.c.l.b16 %v604
        %v761 = vunpack.c.h.b16 %v604
        %v762 = vunpack.c.l.b16 %v605
        %v763 = vunpack.c.h.b16 %v605
        %v764 = vunpack.c.l.b16 %v606
        %v765 = vunpack.c.h.b16 %v606
        %v766 = vunpack.c.l.b16 %v607
        %v767 = vunpack.c.h.b16 %v607
        %v768 = vunpack.c.l.b16 %v608
        %v769 = vunpack.c.h.b16 %v608
        %v770 = vunpack.c.l.b16 %v609
        %v771 = vunpack.c.h.b16 %v609
        %v772 = vunpack.c.l.b16 %v610
        %v773 = vunpack.c.h.b16 %v610
        %v774 = vunpack.c.l.b16 %v611
        %v775 = vunpack.c.h.b16 %v611
        %v776 = vunpack.c.l.b16 %v612
        %v777 = vunpack.c.h.b16 %v612
        %v778 = vunpack.c.l.b16 %v613
        %v779 = vunpack.c.h.b16 %v613
        %v780 = vunpack.c.l.b16 %v614
        %v781 = vunpack.c.h.b16 %v614
        %v782 = vunpack.c.l.b16 %v615
        %v783 = vunpack.c.h.b16 %v615
        %v784 = vunpack.c.l.b16 %v616
        %v785 = vunpack.c.h.b16 %v616
        %v786 = vunpack.c.l.b16 %v617
        %v787 = vunpack.c.h.b16 %v617
        %v788 = vunpack.c.l.b16 %v618
        %v789 = vunpack.c.h.b16 %v618
        %v790 = vunpack.c.l.b16 %v619
        %v791 = vunpack.c.h.b16 %v619
        %v792 = vunpack.c.l.b16 %v620
        %v793 = vunpack.c.h.b16 %v620
        %v794 = vunpack.c.l.b16 %v621
        %v795 = vunpack.c.h.b16 %v621
        %v796 = vunpack.c.l.b16 %v622
        %v797 = vunpack.c.h.b16 %v622
        %v798 = vunpack.c.l.b16 %v623
        %v799 = vunpack.c.h.b16 %v623
        %v800 = vunpack.c.l.b16 %v624
        %v801 = vunpack.c.h.b16 %v624
        %v802 = vunpack.c.l.b16 %v625
        %v803 = vunpack.c.h.b16 %v625
        %v804 = vunpack.c.l.b16 %v626
        %v805 = vunpack.c.h.b16 %v626
        %v806 = vunpack.c.l.b16 %v627
        %v807 = vunpack.c.h.b16 %v627
        %v808 = vunpack.c.l.b16 %v628
        %v809 = vunpack.c.h.b16 %v628
        %v810 = vunpack.c.l.b16 %v629
        %v811 = vunpack.c.h.b16 %v629
        %v812 = vunpack.c.l.b16 %v630
        %v813 = vunpack.c.h.b16 %v630
        %v814 = vunpack.c.l.b16 %v631
        %v815 = vunpack.c.h.b16 %v631
        %v816 = vunpack.c.l.b16 %v632
        %v817 = vunpack.c.h.b16 %v632
        %v818 = vunpack.c.l.b16 %v633
        %v819 = vunpack.c.h.b16 %v633
        %v820 = vunpack.c.l.b16 %v634
        %v821 = vunpack.c.h.b16 %v634
        %v822 = vunpack.c.l.b16 %v635
        %v823 = vunpack.c.h.b16 %v635
        %v824 = vunpack.c.l.b16 %v636
        %v825 = vunpack.c.h.b16 %v636
        %v826 = vunpack.c.l.b16 %v637
        %v827 = vunpack.c.h.b16 %v637
        %v828 = vunpack.c.l.b16 %v638
        %v829 = vunpack.c.h.b16 %v638
        %v830 = vunpack.c.l.b16 %v639
        %v831 = vunpack.c.h.b16 %v639
        %v832 = vunpack.c.l.b16 %v640
        %v833 = vunpack.c.h.b16 %v640
        %v834 = vunpack.c.l.b16 %v641
        %v835 = vunpack.c.h.b16 %v641
        %v836 = vunpack.c.l.b16 %v642
        %v837 = vunpack.c.h.b16 %v642
        %v838 = vunpack.c.l.b16 %v643
        %v839 = vunpack.c.h.b16 %v643
        %v840 = vunpack.c.l.b16 %v644
        %v841 = vunpack.c.h.b16 %v644
        %v842 = vunpack.c.l.b16 %v645
        %v843 = vunpack.c.h.b16 %v645
        %v844 = vunpack.c.l.b16 %v646
        %v845 = vunpack.c.h.b16 %v646
        %v846 = vunpack.c.l.b16 %v647
        %v847 = vunpack.c.h.b16 %v647
        %v848 = vunpack.c.l.b16 %v648
        %v849 = vunpack.c.h.b16 %v648
        %v850 = vunpack.c.l.b16 %v649
        %v851 = vunpack.c.h.b16 %v649
        %v852 = vunpack.c.l.b16 %v650
        %v853 = vunpack.c.h.b16 %v650
        %v854 = vunpack.c.l.b16 %v651
        %v855 = vunpack.c.h.b16 %v651
        %v856 = vunpack.c.l.b16 %v652
        %v857 = vunpack.c.h.b16 %v652
        %v858 = vunpack.c.l.b16 %v653
        %v859 = vunpack.c.h.b16 %v653
        %v860 = vunpack.c.l.b16 %v654
        %v861 = vunpack.c.h.b16 %v654
        %v862 = vunpack.c.l.b16 %v655
        %v863 = vunpack.c.h.b16 %v655
        %v864 = vpack.c.b16 %v740, %v736
        %v865 = vpack.c.b16 %v741, %v737
        %v866 = vpack.c.b16 %v742, %v738
        %v867 = vpack.c.b16 %v743, %v739
        %v868 = vpack.c.b16 %v748, %v744
        %v869 = vpack.c.b16 %v749, %v745
        %v870 = vpack.c.b16 %v750, %v746
        %v871 = vpack.c.b16 %v751, %v747
        %v872 = vpack.c.b16 %v756, %v752
        %v873 = vpack.c.b16 %v757, %v753
        %v874 = vpack.c.b16 %v758, %v754
        %v875 = vpack.c.b16 %v759, %v755
        %v876 = vpack.c.b16 %v764, %v760
        %v877 = vpack.c.b16 %v765, %v761
        %v878 = vpack.c.b16 %v766, %v762
        %v879 = vpack.c.b16 %v767, %v763
        %v880 = vpack.c.b16 %v772, %v768
        %v881 = vpack.c.b16 %v773, %v769
        %v882 = vpack.c.b16 %v774, %v770
        %v883 = vpack.c.b16 %v775, %v771
        %v884 = vpack.c.b16 %v780, %v776
        %v885 = vpack.c.b16 %v781, %v777
        %v886 = vpack.c.b16 %v782, %v778
        %v887 = vpack.c.b16 %v783, %v779
        %v888 = vpack.c.b16 %v788, %v784
        %v889 = vpack.c.b16 %v789, %v785
        %v890 = vpack.c.b16 %v790, %v786
        %v891 = vpack.c.b16 %v791, %v787
        %v892 = vpack.c.b16 %v796, %v792
        %v893 = vpack.c.b16 %v797, %v793
        %v894 = vpack.c.b16 %v798, %v794
        %v895 = vpack.c.b16 %v799, %v795
        %v896 = vpack.c.b16 %v804, %v800
        %v897 = vpack.c.b16 %v805, %v801
        %v898 = vpack.c.b16 %v806, %v802
        %v899 = vpack.c.b16 %v807, %v803
        %v900 = vpack.c.b16 %v812, %v808
        %v901 = vpack.c.b16 %v813, %v809
        %v902 = vpack.c.b16 %v814, %v810
        %v903 = vpack.c.b16 %v815, %v811
        %v904 = vpack.c.b16 %v820, %v816
        %v905 = vpack.c.b16 %v821, %v817
        %v906 = vpack.c.b16 %v822, %v818
        %v907 = vpack.c.b16 %v823, %v819
        %v908 = vpack.c.b16 %v828, %v824
        %v909 = vpack.c.b16 %v829, %v825
        %v910 = vpack.c.b16 %v830, %v826
        %v911 = vpack.c.b16 %v831, %v827
        %v912 = vpack.c.b16 %v836, %v832
        %v913 = vpack.c.b16 %v837, %v833
        %v914 = vpack.c.b16 %v838, %v834
        %v915 = vpack.c.b16 %v839, %v835
        %v916 = vpack.c.b16 %v844, %v840
        %v917 = vpack.c.b16 %v845, %v841
        %v918 = vpack.c.b16 %v846, %v842
        %v919 = vpack.c.b16 %v847, %v843
        %v920 = vpack.c.b16 %v852, %v848
        %v921 = vpack.c.b16 %v853, %v849
        %v922 = vpack.c.b16 %v854, %v850
        %v923 = vpack.c.b16 %v855, %v851
        %v924 = vpack.c.b16 %v860, %v856
        %v925 = vpack.c.b16 %v861, %v857
        %v926 = vpack.c.b16 %v862, %v858
        %v927 = vpack.c.b16 %v863, %v859
        %992 = vmatprep.subr.bf16.mxu0 %v893
        %993 = vmatpush1.bf16.msra.mxu0 %v892
        %994 = vmatprep.subr.bf16.mxu0 %v889
        %995 = vmatpush1.bf16.msra.mxu0 %v888
        %996 = vmatprep.subr.bf16.mxu0 %v885
        %997 = vmatpush1.bf16.msra.mxu0 %v884
        %998 = vmatprep.subr.bf16.mxu0 %v881
        %999 = vmatpush1.bf16.msra.mxu0 %v880
        %1000 = vmatprep.subr.bf16.mxu0 %v877
        %1001 = vmatpush1.bf16.msra.mxu0 %v876
        %1002 = vmatprep.subr.bf16.mxu0 %v873
        %1003 = vmatpush1.bf16.msra.mxu0 %v872
        %1004 = vmatprep.subr.bf16.mxu0 %v869
        %1005 = vmatpush1.bf16.msra.mxu0 %v868
        %1006 = vmatprep.subr.bf16.mxu0 %v865
        %1007 = vmatpush1.bf16.msra.mxu0 %v864
        %1008 = vmatprep.subr.bf16.mxu0 %v925
        %1009 = vmatpush2.bf16.msra.mxu0 %v924
        %1010 = vmatprep.subr.bf16.mxu0 %v921
        %1011 = vmatpush2.bf16.msra.mxu0 %v920
        %1012 = vmatprep.subr.bf16.mxu0 %v917
        %1013 = vmatpush2.bf16.msra.mxu0 %v916
        %1014 = vmatprep.subr.bf16.mxu0 %v913
        %1015 = vmatpush2.bf16.msra.mxu0 %v912
        %1016 = vmatprep.subr.bf16.mxu0 %v909
        %1017 = vmatpush2.bf16.msra.mxu0 %v908
        %1018 = vmatprep.subr.bf16.mxu0 %v905
        %1019 = vmatpush2.bf16.msra.mxu0 %v904
        %1020 = vmatprep.subr.bf16.mxu0 %v901
        %1021 = vmatpush2.bf16.msra.mxu0 %v900
        %1022 = vmatprep.subr.bf16.mxu0 %v897
        %1023 = vmatpush2.bf16.msra.mxu0 %v896
        %1024 = vmatprep.mubr.bf16.mxu0 %v577
        %1025 = vmatmul.mubr.bf16.gmra.mxu0 %v576
        %v1026 = vpop.f32.mrf.mxu0
        %v1027 = vadd.f32 %v659, %v1026
        %v1028 = vpop.f32.mrf.mxu0
        %v1029 = vadd.f32 %v663, %v1028
        %v1030 = vpop.f32.mrf.mxu0
        %v1031 = vadd.f32 %v659, %v1030
        %v1032 = vpop.f32.mrf.mxu0
        %v1033 = vadd.f32 %v663, %v1032
        %1034 = vmatprep.mubr.bf16.mxu0 %v579
        %1035 = vmatmul.mubr.bf16.gmra.mxu0 %v578
        %v1036 = vpop.f32.mrf.mxu0
        %v1037 = vadd.f32 %v659, %v1036
        %v1038 = vpop.f32.mrf.mxu0
        %v1039 = vadd.f32 %v663, %v1038
        %v1040 = vpop.f32.mrf.mxu0
        %v1041 = vadd.f32 %v659, %v1040
        %v1042 = vpop.f32.mrf.mxu0
        %v1043 = vadd.f32 %v663, %v1042
        %1044 = vmatprep.mubr.bf16.mxu0 %v581
        %1045 = vmatmul.mubr.bf16.gmra.mxu0 %v580
        %v1046 = vpop.f32.mrf.mxu0
        %v1047 = vadd.f32 %v659, %v1046
        %v1048 = vpop.f32.mrf.mxu0
        %v1049 = vadd.f32 %v663, %v1048
        %v1050 = vpop.f32.mrf.mxu0
        %v1051 = vadd.f32 %v659, %v1050
        %v1052 = vpop.f32.mrf.mxu0
        %v1053 = vadd.f32 %v663, %v1052
        %1054 = vmatprep.mubr.bf16.mxu0 %v583
        %1055 = vmatmul.mubr.bf16.gmra.mxu0 %v582
        %v1056 = vpop.f32.mrf.mxu0
        %v1057 = vadd.f32 %v659, %v1056
        %v1058 = vpop.f32.mrf.mxu0
        %v1059 = vadd.f32 %v663, %v1058
        %v1060 = vpop.f32.mrf.mxu0
        %v1061 = vadd.f32 %v659, %v1060
        %v1062 = vpop.f32.mrf.mxu0
        %v1063 = vadd.f32 %v663, %v1062
        %1064 = vdwg.mxu0
        %1065 = vmatprep.subr.bf16.mxu0 %v895
        %1066 = vmatpush1.bf16.msra.mxu0 %v894
        %1067 = vmatprep.subr.bf16.mxu0 %v891
        %1068 = vmatpush1.bf16.msra.mxu0 %v890
        %1069 = vmatprep.subr.bf16.mxu0 %v887
        %1070 = vmatpush1.bf16.msra.mxu0 %v886
        %1071 = vmatprep.subr.bf16.mxu0 %v883
        %1072 = vmatpush1.bf16.msra.mxu0 %v882
        %1073 = vmatprep.subr.bf16.mxu0 %v879
        %1074 = vmatpush1.bf16.msra.mxu0 %v878
        %1075 = vmatprep.subr.bf16.mxu0 %v875
        %1076 = vmatpush1.bf16.msra.mxu0 %v874
        %1077 = vmatprep.subr.bf16.mxu0 %v871
        %1078 = vmatpush1.bf16.msra.mxu0 %v870
        %1079 = vmatprep.subr.bf16.mxu0 %v867
        %1080 = vmatpush1.bf16.msra.mxu0 %v866
        %1081 = vmatprep.subr.bf16.mxu0 %v927
        %1082 = vmatpush2.bf16.msra.mxu0 %v926
        %1083 = vmatprep.subr.bf16.mxu0 %v923
        %1084 = vmatpush2.bf16.msra.mxu0 %v922
        %1085 = vmatprep.subr.bf16.mxu0 %v919
        %1086 = vmatpush2.bf16.msra.mxu0 %v918
        %1087 = vmatprep.subr.bf16.mxu0 %v915
        %1088 = vmatpush2.bf16.msra.mxu0 %v914
        %1089 = vmatprep.subr.bf16.mxu0 %v911
        %1090 = vmatpush2.bf16.msra.mxu0 %v910
        %1091 = vmatprep.subr.bf16.mxu0 %v907
        %1092 = vmatpush2.bf16.msra.mxu0 %v906
        %1093 = vmatprep.subr.bf16.mxu0 %v903
        %1094 = vmatpush2.bf16.msra.mxu0 %v902
        %1095 = vmatprep.subr.bf16.mxu0 %v899
        %1096 = vmatpush2.bf16.msra.mxu0 %v898
        %1097 = vmatprep.mubr.bf16.mxu0 %v577
        %1098 = vmatmul.mubr.bf16.gmra.mxu0 %v576
        %v1099 = vpop.f32.mrf.mxu0
        %v1100 = vadd.f32 %v667, %v1099
        %v1101 = vpop.f32.mrf.mxu0
        %v1102 = vadd.f32 %v671, %v1101
        %v1103 = vpop.f32.mrf.mxu0
        %v1104 = vadd.f32 %v667, %v1103
        %v1105 = vpop.f32.mrf.mxu0
        %v1106 = vadd.f32 %v671, %v1105
        %1107 = vmatprep.mubr.bf16.mxu0 %v579
        %1108 = vmatmul.mubr.bf16.gmra.mxu0 %v578
        %v1109 = vpop.f32.mrf.mxu0
        %v1110 = vadd.f32 %v667, %v1109
        %v1111 = vpop.f32.mrf.mxu0
        %v1112 = vadd.f32 %v671, %v1111
        %v1113 = vpop.f32.mrf.mxu0
        %v1114 = vadd.f32 %v667, %v1113
        %v1115 = vpop.f32.mrf.mxu0
        %v1116 = vadd.f32 %v671, %v1115
        %1117 = vmatprep.mubr.bf16.mxu0 %v581
        %1118 = vmatmul.mubr.bf16.gmra.mxu0 %v580
        %v1119 = vpop.f32.mrf.mxu0
        %v1120 = vadd.f32 %v667, %v1119
        %v1121 = vpop.f32.mrf.mxu0
        %v1122 = vadd.f32 %v671, %v1121
        %v1123 = vpop.f32.mrf.mxu0
        %v1124 = vadd.f32 %v667, %v1123
        %v1125 = vpop.f32.mrf.mxu0
        %v1126 = vadd.f32 %v671, %v1125
        %1127 = vmatprep.mubr.bf16.mxu0 %v583
        %1128 = vmatmul.mubr.bf16.gmra.mxu0 %v582
        %v1129 = vpop.f32.mrf.mxu0
        %v1130 = vadd.f32 %v667, %v1129
        %v1131 = vpop.f32.mrf.mxu0
        %v1132 = vadd.f32 %v671, %v1131
        %v1133 = vpop.f32.mrf.mxu0
        %v1134 = vadd.f32 %v667, %v1133
        %v1135 = vpop.f32.mrf.mxu0
        %v1136 = vadd.f32 %v671, %v1135
        %1137 = vdwg.mxu0
        %v1138 = vld [vmem:[%s484] sm:$0xff]
        %v1139 = vld [vmem:[%s484 + $0x8] sm:$0xff]
        %v1140 = vld [vmem:[%s484 + $0x10] sm:$0xff]
        %v1141 = vld [vmem:[%s484 + $0x18] sm:$0xff]
        %v1142 = vld [vmem:[%s484 + $0x20] sm:$0xff]
        %v1143 = vld [vmem:[%s484 + $0x28] sm:$0xff]
        %v1144 = vld [vmem:[%s484 + $0x30] sm:$0xff]
        %v1145 = vld [vmem:[%s484 + $0x38] sm:$0xff]
        %v1146 = vld [vmem:[%s484 + $0x40] sm:$0xff]
        %v1147 = vld [vmem:[%s484 + $0x48] sm:$0xff]
        %v1148 = vld [vmem:[%s484 + $0x50] sm:$0xff]
        %v1149 = vld [vmem:[%s484 + $0x58] sm:$0xff]
        %v1150 = vld [vmem:[%s484 + $0x60] sm:$0xff]
        %v1151 = vld [vmem:[%s484 + $0x68] sm:$0xff]
        %v1152 = vld [vmem:[%s484 + $0x70] sm:$0xff]
        %v1153 = vld [vmem:[%s484 + $0x78] sm:$0xff]
        %v1154 = vld [vmem:[%s484 + $0x80] sm:$0xff]
        %v1155 = vld [vmem:[%s484 + $0x88] sm:$0xff]
        %v1156 = vld [vmem:[%s484 + $0x90] sm:$0xff]
        %v1157 = vld [vmem:[%s484 + $0x98] sm:$0xff]
        %v1158 = vld [vmem:[%s484 + $0xa0] sm:$0xff]
        %v1159 = vld [vmem:[%s484 + $0xa8] sm:$0xff]
        %v1160 = vld [vmem:[%s484 + $0xb0] sm:$0xff]
        %v1161 = vld [vmem:[%s484 + $0xb8] sm:$0xff]
        %v1162 = vld [vmem:[%s484 + $0xc0] sm:$0xff]
        %v1163 = vld [vmem:[%s484 + $0xc8] sm:$0xff]
        %v1164 = vld [vmem:[%s484 + $0xd0] sm:$0xff]
        %v1165 = vld [vmem:[%s484 + $0xd8] sm:$0xff]
        %v1166 = vld [vmem:[%s484 + $0xe0] sm:$0xff]
        %v1167 = vld [vmem:[%s484 + $0xe8] sm:$0xff]
        %v1168 = vld [vmem:[%s484 + $0xf0] sm:$0xff]
        %v1169 = vld [vmem:[%s484 + $0xf8] sm:$0xff]
        %v1170 = vlaneseq
        %v1171 = vshrl.u32 %v1170, 7
        %v1172 = vsub.s32 1, %v1171
        %v1173 = vrot.slane %v554, %v1172
        %v1174 = vlaneseq
        %v1175 = vshrl.u32 %v1174, 7
        %v1176 = vsub.s32 1, %v1175
        %v1177 = vrot.slane %v555, %v1176
        %v1210 = vunpack.c.l.b16 %v1138
        %v1211 = vunpack.c.h.b16 %v1138
        %v1212 = vunpack.c.l.b16 %v1139
        %v1213 = vunpack.c.h.b16 %v1139
        %v1214 = vunpack.c.l.b16 %v1140
        %v1215 = vunpack.c.h.b16 %v1140
        %v1216 = vunpack.c.l.b16 %v1141
        %v1217 = vunpack.c.h.b16 %v1141
        %v1218 = vunpack.c.l.b16 %v1142
        %v1219 = vunpack.c.h.b16 %v1142
        %v1220 = vunpack.c.l.b16 %v1143
        %v1221 = vunpack.c.h.b16 %v1143
        %v1222 = vunpack.c.l.b16 %v1144
        %v1223 = vunpack.c.h.b16 %v1144
        %v1224 = vunpack.c.l.b16 %v1145
        %v1225 = vunpack.c.h.b16 %v1145
        %v1226 = vunpack.c.l.b16 %v1146
        %v1227 = vunpack.c.h.b16 %v1146
        %v1228 = vunpack.c.l.b16 %v1147
        %v1229 = vunpack.c.h.b16 %v1147
        %v1230 = vunpack.c.l.b16 %v1148
        %v1231 = vunpack.c.h.b16 %v1148
        %v1232 = vunpack.c.l.b16 %v1149
        %v1233 = vunpack.c.h.b16 %v1149
        %v1234 = vunpack.c.l.b16 %v1150
        %v1235 = vunpack.c.h.b16 %v1150
        %v1236 = vunpack.c.l.b16 %v1151
        %v1237 = vunpack.c.h.b16 %v1151
        %v1238 = vunpack.c.l.b16 %v1152
        %v1239 = vunpack.c.h.b16 %v1152
        %v1240 = vunpack.c.l.b16 %v1153
        %v1241 = vunpack.c.h.b16 %v1153
        %v1242 = vunpack.c.l.b16 %v1154
        %v1243 = vunpack.c.h.b16 %v1154
        %v1244 = vunpack.c.l.b16 %v1155
        %v1245 = vunpack.c.h.b16 %v1155
        %v1246 = vunpack.c.l.b16 %v1156
        %v1247 = vunpack.c.h.b16 %v1156
        %v1248 = vunpack.c.l.b16 %v1157
        %v1249 = vunpack.c.h.b16 %v1157
        %v1250 = vunpack.c.l.b16 %v1158
        %v1251 = vunpack.c.h.b16 %v1158
        %v1252 = vunpack.c.l.b16 %v1159
        %v1253 = vunpack.c.h.b16 %v1159
        %v1254 = vunpack.c.l.b16 %v1160
        %v1255 = vunpack.c.h.b16 %v1160
        %v1256 = vunpack.c.l.b16 %v1161
        %v1257 = vunpack.c.h.b16 %v1161
        %v1258 = vunpack.c.l.b16 %v1162
        %v1259 = vunpack.c.h.b16 %v1162
        %v1260 = vunpack.c.l.b16 %v1163
        %v1261 = vunpack.c.h.b16 %v1163
        %v1262 = vunpack.c.l.b16 %v1164
        %v1263 = vunpack.c.h.b16 %v1164
        %v1264 = vunpack.c.l.b16 %v1165
        %v1265 = vunpack.c.h.b16 %v1165
        %v1266 = vunpack.c.l.b16 %v1166
        %v1267 = vunpack.c.h.b16 %v1166
        %v1268 = vunpack.c.l.b16 %v1167
        %v1269 = vunpack.c.h.b16 %v1167
        %v1270 = vunpack.c.l.b16 %v1168
        %v1271 = vunpack.c.h.b16 %v1168
        %v1272 = vunpack.c.l.b16 %v1169
        %v1273 = vunpack.c.h.b16 %v1169
        %v1274 = vpack.c.b16 %v1212, %v1210
        %v1275 = vpack.c.b16 %v1213, %v1211
        %v1276 = vpack.c.b16 %v1216, %v1214
        %v1277 = vpack.c.b16 %v1217, %v1215
        %v1278 = vpack.c.b16 %v1220, %v1218
        %v1279 = vpack.c.b16 %v1221, %v1219
        %v1280 = vpack.c.b16 %v1224, %v1222
        %v1281 = vpack.c.b16 %v1225, %v1223
        %v1282 = vpack.c.b16 %v1228, %v1226
        %v1283 = vpack.c.b16 %v1229, %v1227
        %v1284 = vpack.c.b16 %v1232, %v1230
        %v1285 = vpack.c.b16 %v1233, %v1231
        %v1286 = vpack.c.b16 %v1236, %v1234
        %v1287 = vpack.c.b16 %v1237, %v1235
        %v1288 = vpack.c.b16 %v1240, %v1238
        %v1289 = vpack.c.b16 %v1241, %v1239
        %v1290 = vpack.c.b16 %v1244, %v1242
        %v1291 = vpack.c.b16 %v1245, %v1243
        %v1292 = vpack.c.b16 %v1248, %v1246
        %v1293 = vpack.c.b16 %v1249, %v1247
        %v1294 = vpack.c.b16 %v1252, %v1250
        %v1295 = vpack.c.b16 %v1253, %v1251
        %v1296 = vpack.c.b16 %v1256, %v1254
        %v1297 = vpack.c.b16 %v1257, %v1255
        %v1298 = vpack.c.b16 %v1260, %v1258
        %v1299 = vpack.c.b16 %v1261, %v1259
        %v1300 = vpack.c.b16 %v1264, %v1262
        %v1301 = vpack.c.b16 %v1265, %v1263
        %v1302 = vpack.c.b16 %v1268, %v1266
        %v1303 = vpack.c.b16 %v1269, %v1267
        %v1304 = vpack.c.b16 %v1272, %v1270
        %v1305 = vpack.c.b16 %v1273, %v1271
        %1338 = vmatprep.subr.bf16.mxu0 %v1289
        %1339 = vmatpush1.bf16.msra.mxu0 %v1288
        %1340 = vmatprep.subr.bf16.mxu0 %v1287
        %1341 = vmatpush1.bf16.msra.mxu0 %v1286
        %1342 = vmatprep.subr.bf16.mxu0 %v1285
        %1343 = vmatpush1.bf16.msra.mxu0 %v1284
        %1344 = vmatprep.subr.bf16.mxu0 %v1283
        %1345 = vmatpush1.bf16.msra.mxu0 %v1282
        %1346 = vmatprep.subr.bf16.mxu0 %v1281
        %1347 = vmatpush1.bf16.msra.mxu0 %v1280
        %1348 = vmatprep.subr.bf16.mxu0 %v1279
        %1349 = vmatpush1.bf16.msra.mxu0 %v1278
        %1350 = vmatprep.subr.bf16.mxu0 %v1277
        %1351 = vmatpush1.bf16.msra.mxu0 %v1276
        %1352 = vmatprep.subr.bf16.mxu0 %v1275
        %1353 = vmatpush1.bf16.msra.mxu0 %v1274
        %1354 = vmatprep.subr.bf16.mxu0 %v1305
        %1355 = vmatpush2.bf16.msra.mxu0 %v1304
        %1356 = vmatprep.subr.bf16.mxu0 %v1303
        %1357 = vmatpush2.bf16.msra.mxu0 %v1302
        %1358 = vmatprep.subr.bf16.mxu0 %v1301
        %1359 = vmatpush2.bf16.msra.mxu0 %v1300
        %1360 = vmatprep.subr.bf16.mxu0 %v1299
        %1361 = vmatpush2.bf16.msra.mxu0 %v1298
        %1362 = vmatprep.subr.bf16.mxu0 %v1297
        %1363 = vmatpush2.bf16.msra.mxu0 %v1296
        %1364 = vmatprep.subr.bf16.mxu0 %v1295
        %1365 = vmatpush2.bf16.msra.mxu0 %v1294
        %1366 = vmatprep.subr.bf16.mxu0 %v1293
        %1367 = vmatpush2.bf16.msra.mxu0 %v1292
        %1368 = vmatprep.subr.bf16.mxu0 %v1291
        %1369 = vmatpush2.bf16.msra.mxu0 %v1290
        %1370 = vmatprep.mubr.bf16.mxu0 %v585
        %1371 = vmatmul.mubr.bf16.gmra.mxu0 %v584
        %v1372 = vpop.f32.mrf.mxu0
        %v1373 = vadd.f32 %v1173, %v1372
        %v1374 = vpop.f32.mrf.mxu0
        %v1375 = vadd.f32 %v1177, %v1374
        %v1376 = vpop.f32.mrf.mxu0
        %v1377 = vadd.f32 %v1173, %v1376
        %v1378 = vpop.f32.mrf.mxu0
        %v1379 = vadd.f32 %v1177, %v1378
        %1380 = vmatprep.mubr.bf16.mxu0 %v587
        %1381 = vmatmul.mubr.bf16.gmra.mxu0 %v586
        %v1382 = vpop.f32.mrf.mxu0
        %v1383 = vadd.f32 %v1173, %v1382
        %v1384 = vpop.f32.mrf.mxu0
        %v1385 = vadd.f32 %v1177, %v1384
        %v1386 = vpop.f32.mrf.mxu0
        %v1387 = vadd.f32 %v1173, %v1386
        %v1388 = vpop.f32.mrf.mxu0
        %v1389 = vadd.f32 %v1177, %v1388
        %1390 = vmatprep.mubr.bf16.mxu0 %v589
        %1391 = vmatmul.mubr.bf16.gmra.mxu0 %v588
        %v1392 = vpop.f32.mrf.mxu0
        %v1393 = vadd.f32 %v1173, %v1392
        %v1394 = vpop.f32.mrf.mxu0
        %v1395 = vadd.f32 %v1177, %v1394
        %v1396 = vpop.f32.mrf.mxu0
        %v1397 = vadd.f32 %v1173, %v1396
        %v1398 = vpop.f32.mrf.mxu0
        %v1399 = vadd.f32 %v1177, %v1398
        %1400 = vmatprep.mubr.bf16.mxu0 %v591
        %1401 = vmatmul.mubr.bf16.gmra.mxu0 %v590
        %v1402 = vpop.f32.mrf.mxu0
        %v1403 = vadd.f32 %v1173, %v1402
        %v1404 = vpop.f32.mrf.mxu0
        %v1405 = vadd.f32 %v1177, %v1404
        %v1406 = vpop.f32.mrf.mxu0
        %v1407 = vadd.f32 %v1173, %v1406
        %v1408 = vpop.f32.mrf.mxu0
        %v1409 = vadd.f32 %v1177, %v1408
        %1410 = vdwg.mxu0
        %v1411 = vpack.c.bf16 %v1031, %v1027
        %v1412 = vpack.c.bf16 %v1033, %v1029
        %v1413 = vpack.c.bf16 %v1041, %v1037
        %v1414 = vpack.c.bf16 %v1043, %v1039
        %v1415 = vpack.c.bf16 %v1051, %v1047
        %v1416 = vpack.c.bf16 %v1053, %v1049
        %v1417 = vpack.c.bf16 %v1061, %v1057
        %v1418 = vpack.c.bf16 %v1063, %v1059
        %v1419 = vpack.c.bf16 %v1104, %v1100
        %v1420 = vpack.c.bf16 %v1106, %v1102
        %v1421 = vpack.c.bf16 %v1114, %v1110
        %v1422 = vpack.c.bf16 %v1116, %v1112
        %v1423 = vpack.c.bf16 %v1124, %v1120
        %v1424 = vpack.c.bf16 %v1126, %v1122
        %v1425 = vpack.c.bf16 %v1134, %v1130
        %v1426 = vpack.c.bf16 %v1136, %v1132
        %v1427 = vpack.c.bf16 %v1377, %v1373
        %v1428 = vpack.c.bf16 %v1379, %v1375
        %v1429 = vpack.c.bf16 %v1387, %v1383
        %v1430 = vpack.c.bf16 %v1389, %v1385
        %v1431 = vpack.c.bf16 %v1397, %v1393
        %v1432 = vpack.c.bf16 %v1399, %v1395
        %v1433 = vpack.c.bf16 %v1407, %v1403
        %v1434 = vpack.c.bf16 %v1409, %v1405
        %1435 = vmatprep.subr.bf16.mxu0 0
        %1436 = vmatpush1.bf16.xpose.msra.mxu0 0
        %1437 = vmatprep.subr.bf16.mxu0 0
        %1438 = vmatpush1.bf16.xpose.msra.mxu0 0
        %1439 = vmatprep.subr.bf16.mxu0 0
        %1440 = vmatpush1.bf16.xpose.msra.mxu0 0
        %1441 = vmatprep.subr.bf16.mxu0 0
        %1442 = vmatpush1.bf16.xpose.msra.mxu0 0
        %1443 = vmatprep.subr.bf16.mxu0 0
        %1444 = vmatpush1.bf16.xpose.msra.mxu0 0
        %1445 = vmatprep.subr.bf16.mxu0 0
        %1446 = vmatpush1.bf16.xpose.msra.mxu0 0
        %1447 = vmatprep.subr.bf16.mxu0 0
        %1448 = vmatpush1.bf16.xpose.msra.mxu0 %v1421
        %1449 = vmatprep.subr.bf16.mxu0 0
        %1450 = vmatpush1.bf16.xpose.msra.mxu0 %v1419
        %1451 = vmatprep.subr.bf16.mxu0 0
        %1452 = vmatpush2.bf16.xpose.msra.mxu0 0
        %1453 = vmatprep.subr.bf16.mxu0 0
        %1454 = vmatpush2.bf16.xpose.msra.mxu0 0
        %1455 = vmatprep.subr.bf16.mxu0 0
        %1456 = vmatpush2.bf16.xpose.msra.mxu0 0
        %1457 = vmatprep.subr.bf16.mxu0 0
        %1458 = vmatpush2.bf16.xpose.msra.mxu0 0
        %1459 = vmatprep.subr.bf16.mxu0 0
        %1460 = vmatpush2.bf16.xpose.msra.mxu0 0
        %1461 = vmatprep.subr.bf16.mxu0 0
        %1462 = vmatpush2.bf16.xpose.msra.mxu0 0
        %1463 = vmatprep.subr.bf16.mxu0 0
        %1464 = vmatpush2.bf16.xpose.msra.mxu0 0
        %1465 = vmatprep.subr.bf16.mxu0 0
        %1466 = vmatpush2.bf16.xpose.msra.mxu0 0
        %1467 = vmatprep.mubr.bf16.mxu0 0
        %1468 = vmatmul.mubr.bf16.gmra.mxu0 %v1411
        %v1469 = vpop.f32.mrf.mxu0
        %v1470 = vadd.f32 0.0, %v1469
        %v1471 = vpop.f32.mrf.mxu0
        %v1472 = vpop.f32.mrf.mxu0
        %v1473 = vadd.f32 0.0, %v1472
        %v1474 = vpop.f32.mrf.mxu0
        %1475 = vmatprep.mubr.bf16.mxu0 0
        %1476 = vmatmul.mubr.bf16.gmra.mxu0 %v1413
        %v1477 = vpop.f32.mrf.mxu0
        %v1478 = vadd.f32 0.0, %v1477
        %v1479 = vpop.f32.mrf.mxu0
        %v1480 = vpop.f32.mrf.mxu0
        %v1481 = vadd.f32 0.0, %v1480
        %v1482 = vpop.f32.mrf.mxu0
        %1483 = vdwg.mxu0
        %vm1484 = vcmask 261120
        %v1485 = vsel %vm1484, %v1470, -inf
        %1486 = vmax.xlane.f32.xlu0 %v1485
        %v1487 = vpop.xlane.xlu0 %1486
        %v1488 = vsel %vm1484, %v1473, -inf
        %1489 = vmax.xlane.f32.xlu0 %v1488
        %v1490 = vpop.xlane.xlu0 %1489
        %v1491 = vsel %vm1484, %v1478, -inf
        %1492 = vmax.xlane.f32.xlu0 %v1491
        %v1493 = vpop.xlane.xlu0 %1492
        %v1494 = vsel %vm1484, %v1481, -inf
        %1495 = vmax.xlane.f32.xlu0 %v1494
        %v1496 = vpop.xlane.xlu0 %1495
        %v1497 = vsub.f32 %v1470, %v1487
        %v1498 = vsub.f32 %v1473, %v1490
        %v1499 = vsub.f32 %v1478, %v1493
        %v1500 = vsub.f32 %v1481, %v1496
        %v1501 = vmul.f32 %v1497, 1.442695
        %v1502 = vpow.pop %v1501
        %v1503 = vmul.f32 %v1498, 1.442695
        %v1504 = vpow.pop %v1503
        %v1505 = vmul.f32 %v1499, 1.442695
        %v1506 = vpow.pop %v1505
        %v1507 = vmul.f32 %v1500, 1.442695
        %v1508 = vpow.pop %v1507
        %v1509 = vsel %vm1484, %v1502, 0.0
        %1510 = vadd.xlane.f32.xlu0 %v1509
        %v1511 = vpop.xlane.xlu0 %1510
        %v1512 = vsel %vm1484, %v1504, 0.0
        %1513 = vadd.xlane.f32.xlu0 %v1512
        %v1514 = vpop.xlane.xlu0 %1513
        %v1515 = vsel %vm1484, %v1506, 0.0
        %1516 = vadd.xlane.f32.xlu0 %v1515
        %v1517 = vpop.xlane.xlu0 %1516
        %v1518 = vsel %vm1484, %v1508, 0.0
        %1519 = vadd.xlane.f32.xlu0 %v1518
        %v1520 = vpop.xlane.xlu0 %1519
        %v1521 = vrcp.pop %v1511
        %v1522 = vrcp.pop %v1514
        %v1523 = vrcp.pop %v1517
        %v1524 = vrcp.pop %v1520
        %v1525 = vmul.f32 %v1502, %v1521
        %v1526 = vmul.f32 %v1504, %v1522
        %v1527 = vmul.f32 %v1506, %v1523
        %v1528 = vmul.f32 %v1508, %v1524
        %v1529 = vpack.c.bf16 %v1526, %v1525
        %v1530 = vpack.c.bf16 %v1528, %v1527
        %v1532 = vsel %vm1484, %v1529, 0
        %v1535 = vsel %vm1484, %v1530, 0
        %1537 = vmatprep.subr.bf16.mxu0 0
        %1538 = vmatpush1.bf16.msra.mxu0 0
        %1539 = vmatprep.subr.bf16.mxu0 0
        %1540 = vmatpush1.bf16.msra.mxu0 0
        %1541 = vmatprep.subr.bf16.mxu0 0
        %1542 = vmatpush1.bf16.msra.mxu0 0
        %1543 = vmatprep.subr.bf16.mxu0 0
        %1544 = vmatpush1.bf16.msra.mxu0 0
        %1545 = vmatprep.subr.bf16.mxu0 0
        %1546 = vmatpush1.bf16.msra.mxu0 0
        %1547 = vmatprep.subr.bf16.mxu0 0
        %1548 = vmatpush1.bf16.msra.mxu0 0
        %1549 = vmatprep.subr.bf16.mxu0 0
        %1550 = vmatpush1.bf16.msra.mxu0 %v1429
        %1551 = vmatprep.subr.bf16.mxu0 0
        %1552 = vmatpush1.bf16.msra.mxu0 %v1427
        %1553 = vmatprep.subr.bf16.mxu0 0
        %1554 = vmatpush2.bf16.msra.mxu0 0
        %1555 = vmatprep.subr.bf16.mxu0 0
        %1556 = vmatpush2.bf16.msra.mxu0 0
        %1557 = vmatprep.subr.bf16.mxu0 0
        %1558 = vmatpush2.bf16.msra.mxu0 0
        %1559 = vmatprep.subr.bf16.mxu0 0
        %1560 = vmatpush2.bf16.msra.mxu0 0
        %1561 = vmatprep.subr.bf16.mxu0 0
        %1562 = vmatpush2.bf16.msra.mxu0 0
        %1563 = vmatprep.subr.bf16.mxu0 0
        %1564 = vmatpush2.bf16.msra.mxu0 0
        %1565 = vmatprep.subr.bf16.mxu0 0
        %1566 = vmatpush2.bf16.msra.mxu0 0
        %1567 = vmatprep.subr.bf16.mxu0 0
        %1568 = vmatpush2.bf16.msra.mxu0 0
        %1569 = vmatprep.mubr.bf16.mxu0 0
        %1570 = vmatmul.mubr.bf16.gmra.mxu0 %v1532
        %v1571 = vpop.f32.mrf.mxu0
        %v1572 = vadd.f32 0.0, %v1571
        %v1573 = vpop.f32.mrf.mxu0
        %v1574 = vpop.f32.mrf.mxu0
        %v1575 = vadd.f32 0.0, %v1574
        %v1576 = vpop.f32.mrf.mxu0
        %1577 = vmatprep.mubr.bf16.mxu0 0
        %1578 = vmatmul.mubr.bf16.gmra.mxu0 %v1535
        %v1579 = vpop.f32.mrf.mxu0
        %v1580 = vadd.f32 0.0, %v1579
        %v1581 = vpop.f32.mrf.mxu0
        %v1582 = vpop.f32.mrf.mxu0
        %v1583 = vadd.f32 0.0, %v1582
        %v1584 = vpop.f32.mrf.mxu0
        %1585 = vdwg.mxu0
        %1586 = vst [vmem:[#allocation3] sm:$0xff] %v1572
        %1587 = vst [vmem:[#allocation3 + $0x10] sm:$0xff] %v1575
        %1588 = vst [vmem:[#allocation3 + $0x20] sm:$0xff] %v1580
        %1589 = vst [vmem:[#allocation3 + $0x30] sm:$0xff] %v1583
        %1590 = vmatprep.subr.bf16.mxu0 0
        %1591 = vmatpush1.bf16.xpose.msra.mxu0 0
        %1592 = vmatprep.subr.bf16.mxu0 0
        %1593 = vmatpush1.bf16.xpose.msra.mxu0 0
        %1594 = vmatprep.subr.bf16.mxu0 0
        %1595 = vmatpush1.bf16.xpose.msra.mxu0 0
        %1596 = vmatprep.subr.bf16.mxu0 0
        %1597 = vmatpush1.bf16.xpose.msra.mxu0 0
        %1598 = vmatprep.subr.bf16.mxu0 0
        %1599 = vmatpush1.bf16.xpose.msra.mxu0 0
        %1600 = vmatprep.subr.bf16.mxu0 0
        %1601 = vmatpush1.bf16.xpose.msra.mxu0 0
        %1602 = vmatprep.subr.bf16.mxu0 0
        %1603 = vmatpush1.bf16.xpose.msra.mxu0 %v1422
        %1604 = vmatprep.subr.bf16.mxu0 0
        %1605 = vmatpush1.bf16.xpose.msra.mxu0 %v1420
        %1606 = vmatprep.subr.bf16.mxu0 0
        %1607 = vmatpush2.bf16.xpose.msra.mxu0 0
        %1608 = vmatprep.subr.bf16.mxu0 0
        %1609 = vmatpush2.bf16.xpose.msra.mxu0 0
        %1610 = vmatprep.subr.bf16.mxu0 0
        %1611 = vmatpush2.bf16.xpose.msra.mxu0 0
        %1612 = vmatprep.subr.bf16.mxu0 0
        %1613 = vmatpush2.bf16.xpose.msra.mxu0 0
        %1614 = vmatprep.subr.bf16.mxu0 0
        %1615 = vmatpush2.bf16.xpose.msra.mxu0 0
        %1616 = vmatprep.subr.bf16.mxu0 0
        %1617 = vmatpush2.bf16.xpose.msra.mxu0 0
        %1618 = vmatprep.subr.bf16.mxu0 0
        %1619 = vmatpush2.bf16.xpose.msra.mxu0 0
        %1620 = vmatprep.subr.bf16.mxu0 0
        %1621 = vmatpush2.bf16.xpose.msra.mxu0 0
        %1622 = vmatprep.mubr.bf16.mxu0 0
        %1623 = vmatmul.mubr.bf16.gmra.mxu0 %v1412
        %v1624 = vpop.f32.mrf.mxu0
        %v1625 = vadd.f32 0.0, %v1624
        %v1626 = vpop.f32.mrf.mxu0
        %v1627 = vpop.f32.mrf.mxu0
        %v1628 = vadd.f32 0.0, %v1627
        %v1629 = vpop.f32.mrf.mxu0
        %1630 = vmatprep.mubr.bf16.mxu0 0
        %1631 = vmatmul.mubr.bf16.gmra.mxu0 %v1414
        %v1632 = vpop.f32.mrf.mxu0
        %v1633 = vadd.f32 0.0, %v1632
        %v1634 = vpop.f32.mrf.mxu0
        %v1635 = vpop.f32.mrf.mxu0
        %v1636 = vadd.f32 0.0, %v1635
        %v1637 = vpop.f32.mrf.mxu0
        %1638 = vdwg.mxu0
        %v1639 = vsel %vm1484, %v1625, -inf
        %1640 = vmax.xlane.f32.xlu0 %v1639
        %v1641 = vpop.xlane.xlu0 %1640
        %v1642 = vsel %vm1484, %v1628, -inf
        %1643 = vmax.xlane.f32.xlu0 %v1642
        %v1644 = vpop.xlane.xlu0 %1643
        %v1645 = vsel %vm1484, %v1633, -inf
        %1646 = vmax.xlane.f32.xlu0 %v1645
        %v1647 = vpop.xlane.xlu0 %1646
        %v1648 = vsel %vm1484, %v1636, -inf
        %1649 = vmax.xlane.f32.xlu0 %v1648
        %v1650 = vpop.xlane.xlu0 %1649
        %v1651 = vsub.f32 %v1625, %v1641
        %v1652 = vsub.f32 %v1628, %v1644
        %v1653 = vsub.f32 %v1633, %v1647
        %v1654 = vsub.f32 %v1636, %v1650
        %v1655 = vmul.f32 %v1651, 1.442695
        %v1656 = vpow.pop %v1655
        %v1657 = vmul.f32 %v1652, 1.442695
        %v1658 = vpow.pop %v1657
        %v1659 = vmul.f32 %v1653, 1.442695
        %v1660 = vpow.pop %v1659
        %v1661 = vmul.f32 %v1654, 1.442695
        %v1662 = vpow.pop %v1661
        %v1663 = vsel %vm1484, %v1656, 0.0
        %1664 = vadd.xlane.f32.xlu0 %v1663
        %v1665 = vpop.xlane.xlu0 %1664
        %v1666 = vsel %vm1484, %v1658, 0.0
        %1667 = vadd.xlane.f32.xlu0 %v1666
        %v1668 = vpop.xlane.xlu0 %1667
        %v1669 = vsel %vm1484, %v1660, 0.0
        %1670 = vadd.xlane.f32.xlu0 %v1669
        %v1671 = vpop.xlane.xlu0 %1670
        %v1672 = vsel %vm1484, %v1662, 0.0
        %1673 = vadd.xlane.f32.xlu0 %v1672
        %v1674 = vpop.xlane.xlu0 %1673
        %v1675 = vrcp.pop %v1665
        %v1676 = vrcp.pop %v1668
        %v1677 = vrcp.pop %v1671
        %v1678 = vrcp.pop %v1674
        %v1679 = vmul.f32 %v1656, %v1675
        %v1680 = vmul.f32 %v1658, %v1676
        %v1681 = vmul.f32 %v1660, %v1677
        %v1682 = vmul.f32 %v1662, %v1678
        %v1683 = vpack.c.bf16 %v1680, %v1679
        %v1684 = vpack.c.bf16 %v1682, %v1681
        %v1686 = vsel %vm1484, %v1683, 0
        %v1689 = vsel %vm1484, %v1684, 0
        %1691 = vmatprep.subr.bf16.mxu0 0
        %1692 = vmatpush1.bf16.msra.mxu0 0
        %1693 = vmatprep.subr.bf16.mxu0 0
        %1694 = vmatpush1.bf16.msra.mxu0 0
        %1695 = vmatprep.subr.bf16.mxu0 0
        %1696 = vmatpush1.bf16.msra.mxu0 0
        %1697 = vmatprep.subr.bf16.mxu0 0
        %1698 = vmatpush1.bf16.msra.mxu0 0
        %1699 = vmatprep.subr.bf16.mxu0 0
        %1700 = vmatpush1.bf16.msra.mxu0 0
        %1701 = vmatprep.subr.bf16.mxu0 0
        %1702 = vmatpush1.bf16.msra.mxu0 0
        %1703 = vmatprep.subr.bf16.mxu0 0
        %1704 = vmatpush1.bf16.msra.mxu0 %v1430
        %1705 = vmatprep.subr.bf16.mxu0 0
        %1706 = vmatpush1.bf16.msra.mxu0 %v1428
        %1707 = vmatprep.subr.bf16.mxu0 0
        %1708 = vmatpush2.bf16.msra.mxu0 0
        %1709 = vmatprep.subr.bf16.mxu0 0
        %1710 = vmatpush2.bf16.msra.mxu0 0
        %1711 = vmatprep.subr.bf16.mxu0 0
        %1712 = vmatpush2.bf16.msra.mxu0 0
        %1713 = vmatprep.subr.bf16.mxu0 0
        %1714 = vmatpush2.bf16.msra.mxu0 0
        %1715 = vmatprep.subr.bf16.mxu0 0
        %1716 = vmatpush2.bf16.msra.mxu0 0
        %1717 = vmatprep.subr.bf16.mxu0 0
        %1718 = vmatpush2.bf16.msra.mxu0 0
        %1719 = vmatprep.subr.bf16.mxu0 0
        %1720 = vmatpush2.bf16.msra.mxu0 0
        %1721 = vmatprep.subr.bf16.mxu0 0
        %1722 = vmatpush2.bf16.msra.mxu0 0
        %1723 = vmatprep.mubr.bf16.mxu0 0
        %1724 = vmatmul.mubr.bf16.gmra.mxu0 %v1686
        %v1725 = vpop.f32.mrf.mxu0
        %v1726 = vadd.f32 0.0, %v1725
        %v1727 = vpop.f32.mrf.mxu0
        %v1728 = vpop.f32.mrf.mxu0
        %v1729 = vadd.f32 0.0, %v1728
        %v1730 = vpop.f32.mrf.mxu0
        %1731 = vmatprep.mubr.bf16.mxu0 0
        %1732 = vmatmul.mubr.bf16.gmra.mxu0 %v1689
        %v1733 = vpop.f32.mrf.mxu0
        %v1734 = vadd.f32 0.0, %v1733
        %v1735 = vpop.f32.mrf.mxu0
        %v1736 = vpop.f32.mrf.mxu0
        %v1737 = vadd.f32 0.0, %v1736
        %v1738 = vpop.f32.mrf.mxu0
        %1739 = vdwg.mxu0
        %1740 = vst [vmem:[#allocation3 + $0x8] sm:$0xff] %v1726
        %1741 = vst [vmem:[#allocation3 + $0x18] sm:$0xff] %v1729
        %1742 = vst [vmem:[#allocation3 + $0x28] sm:$0xff] %v1734
        %1743 = vst [vmem:[#allocation3 + $0x38] sm:$0xff] %v1737
        %1744 = vmatprep.subr.bf16.mxu0 0
        %1745 = vmatpush1.bf16.xpose.msra.mxu0 0
        %1746 = vmatprep.subr.bf16.mxu0 0
        %1747 = vmatpush1.bf16.xpose.msra.mxu0 0
        %1748 = vmatprep.subr.bf16.mxu0 0
        %1749 = vmatpush1.bf16.xpose.msra.mxu0 0
        %1750 = vmatprep.subr.bf16.mxu0 0
        %1751 = vmatpush1.bf16.xpose.msra.mxu0 0
        %1752 = vmatprep.subr.bf16.mxu0 0
        %1753 = vmatpush1.bf16.xpose.msra.mxu0 0
        %1754 = vmatprep.subr.bf16.mxu0 0
        %1755 = vmatpush1.bf16.xpose.msra.mxu0 0
        %1756 = vmatprep.subr.bf16.mxu0 0
        %1757 = vmatpush1.bf16.xpose.msra.mxu0 %v1425
        %1758 = vmatprep.subr.bf16.mxu0 0
        %1759 = vmatpush1.bf16.xpose.msra.mxu0 %v1423
        %1760 = vmatprep.subr.bf16.mxu0 0
        %1761 = vmatpush2.bf16.xpose.msra.mxu0 0
        %1762 = vmatprep.subr.bf16.mxu0 0
        %1763 = vmatpush2.bf16.xpose.msra.mxu0 0
        %1764 = vmatprep.subr.bf16.mxu0 0
        %1765 = vmatpush2.bf16.xpose.msra.mxu0 0
        %1766 = vmatprep.subr.bf16.mxu0 0
        %1767 = vmatpush2.bf16.xpose.msra.mxu0 0
        %1768 = vmatprep.subr.bf16.mxu0 0
        %1769 = vmatpush2.bf16.xpose.msra.mxu0 0
        %1770 = vmatprep.subr.bf16.mxu0 0
        %1771 = vmatpush2.bf16.xpose.msra.mxu0 0
        %1772 = vmatprep.subr.bf16.mxu0 0
        %1773 = vmatpush2.bf16.xpose.msra.mxu0 0
        %1774 = vmatprep.subr.bf16.mxu0 0
        %1775 = vmatpush2.bf16.xpose.msra.mxu0 0
        %1776 = vmatprep.mubr.bf16.mxu0 0
        %1777 = vmatmul.mubr.bf16.gmra.mxu0 %v1415
        %v1778 = vpop.f32.mrf.mxu0
        %v1779 = vadd.f32 0.0, %v1778
        %v1780 = vpop.f32.mrf.mxu0
        %v1781 = vpop.f32.mrf.mxu0
        %v1782 = vadd.f32 0.0, %v1781
        %v1783 = vpop.f32.mrf.mxu0
        %1784 = vmatprep.mubr.bf16.mxu0 0
        %1785 = vmatmul.mubr.bf16.gmra.mxu0 %v1417
        %v1786 = vpop.f32.mrf.mxu0
        %v1787 = vadd.f32 0.0, %v1786
        %v1788 = vpop.f32.mrf.mxu0
        %v1789 = vpop.f32.mrf.mxu0
        %v1790 = vadd.f32 0.0, %v1789
        %v1791 = vpop.f32.mrf.mxu0
        %1792 = vdwg.mxu0
        %v1793 = vsel %vm1484, %v1779, -inf
        %1794 = vmax.xlane.f32.xlu0 %v1793
        %v1795 = vpop.xlane.xlu0 %1794
        %v1796 = vsel %vm1484, %v1782, -inf
        %1797 = vmax.xlane.f32.xlu0 %v1796
        %v1798 = vpop.xlane.xlu0 %1797
        %v1799 = vsel %vm1484, %v1787, -inf
        %1800 = vmax.xlane.f32.xlu0 %v1799
        %v1801 = vpop.xlane.xlu0 %1800
        %v1802 = vsel %vm1484, %v1790, -inf
        %1803 = vmax.xlane.f32.xlu0 %v1802
        %v1804 = vpop.xlane.xlu0 %1803
        %v1805 = vsub.f32 %v1779, %v1795
        %v1806 = vsub.f32 %v1782, %v1798
        %v1807 = vsub.f32 %v1787, %v1801
        %v1808 = vsub.f32 %v1790, %v1804
        %v1809 = vmul.f32 %v1805, 1.442695
        %v1810 = vpow.pop %v1809
        %v1811 = vmul.f32 %v1806, 1.442695
        %v1812 = vpow.pop %v1811
        %v1813 = vmul.f32 %v1807, 1.442695
        %v1814 = vpow.pop %v1813
        %v1815 = vmul.f32 %v1808, 1.442695
        %v1816 = vpow.pop %v1815
        %v1817 = vsel %vm1484, %v1810, 0.0
        %1818 = vadd.xlane.f32.xlu0 %v1817
        %v1819 = vpop.xlane.xlu0 %1818
        %v1820 = vsel %vm1484, %v1812, 0.0
        %1821 = vadd.xlane.f32.xlu0 %v1820
        %v1822 = vpop.xlane.xlu0 %1821
        %v1823 = vsel %vm1484, %v1814, 0.0
        %1824 = vadd.xlane.f32.xlu0 %v1823
        %v1825 = vpop.xlane.xlu0 %1824
        %v1826 = vsel %vm1484, %v1816, 0.0
        %1827 = vadd.xlane.f32.xlu0 %v1826
        %v1828 = vpop.xlane.xlu0 %1827
        %v1829 = vrcp.pop %v1819
        %v1830 = vrcp.pop %v1822
        %v1831 = vrcp.pop %v1825
        %v1832 = vrcp.pop %v1828
        %v1833 = vmul.f32 %v1810, %v1829
        %v1834 = vmul.f32 %v1812, %v1830
        %v1835 = vmul.f32 %v1814, %v1831
        %v1836 = vmul.f32 %v1816, %v1832
        %v1837 = vpack.c.bf16 %v1834, %v1833
        %v1838 = vpack.c.bf16 %v1836, %v1835
        %v1840 = vsel %vm1484, %v1837, 0
        %v1843 = vsel %vm1484, %v1838, 0
        %1845 = vmatprep.subr.bf16.mxu0 0
        %1846 = vmatpush1.bf16.msra.mxu0 0
        %1847 = vmatprep.subr.bf16.mxu0 0
        %1848 = vmatpush1.bf16.msra.mxu0 0
        %1849 = vmatprep.subr.bf16.mxu0 0
        %1850 = vmatpush1.bf16.msra.mxu0 0
        %1851 = vmatprep.subr.bf16.mxu0 0
        %1852 = vmatpush1.bf16.msra.mxu0 0
        %1853 = vmatprep.subr.bf16.mxu0 0
        %1854 = vmatpush1.bf16.msra.mxu0 0
        %1855 = vmatprep.subr.bf16.mxu0 0
        %1856 = vmatpush1.bf16.msra.mxu0 0
        %1857 = vmatprep.subr.bf16.mxu0 0
        %1858 = vmatpush1.bf16.msra.mxu0 %v1433
        %1859 = vmatprep.subr.bf16.mxu0 0
        %1860 = vmatpush1.bf16.msra.mxu0 %v1431
        %1861 = vmatprep.subr.bf16.mxu0 0
        %1862 = vmatpush2.bf16.msra.mxu0 0
        %1863 = vmatprep.subr.bf16.mxu0 0
        %1864 = vmatpush2.bf16.msra.mxu0 0
        %1865 = vmatprep.subr.bf16.mxu0 0
        %1866 = vmatpush2.bf16.msra.mxu0 0
        %1867 = vmatprep.subr.bf16.mxu0 0
        %1868 = vmatpush2.bf16.msra.mxu0 0
        %1869 = vmatprep.subr.bf16.mxu0 0
        %1870 = vmatpush2.bf16.msra.mxu0 0
        %1871 = vmatprep.subr.bf16.mxu0 0
        %1872 = vmatpush2.bf16.msra.mxu0 0
        %1873 = vmatprep.subr.bf16.mxu0 0
        %1874 = vmatpush2.bf16.msra.mxu0 0
        %1875 = vmatprep.subr.bf16.mxu0 0
        %1876 = vmatpush2.bf16.msra.mxu0 0
        %1877 = vmatprep.mubr.bf16.mxu0 0
        %1878 = vmatmul.mubr.bf16.gmra.mxu0 %v1840
        %v1879 = vpop.f32.mrf.mxu0
        %v1880 = vadd.f32 0.0, %v1879
        %v1881 = vpop.f32.mrf.mxu0
        %v1882 = vpop.f32.mrf.mxu0
        %v1883 = vadd.f32 0.0, %v1882
        %v1884 = vpop.f32.mrf.mxu0
        %1885 = vmatprep.mubr.bf16.mxu0 0
        %1886 = vmatmul.mubr.bf16.gmra.mxu0 %v1843
        %v1887 = vpop.f32.mrf.mxu0
        %v1888 = vadd.f32 0.0, %v1887
        %v1889 = vpop.f32.mrf.mxu0
        %v1890 = vpop.f32.mrf.mxu0
        %v1891 = vadd.f32 0.0, %v1890
        %v1892 = vpop.f32.mrf.mxu0
        %1893 = vdwg.mxu0
        %1894 = vst [vmem:[#allocation3 + $0x40] sm:$0xff] %v1880
        %1895 = vst [vmem:[#allocation3 + $0x50] sm:$0xff] %v1883
        %1896 = vst [vmem:[#allocation3 + $0x60] sm:$0xff] %v1888
        %1897 = vst [vmem:[#allocation3 + $0x70] sm:$0xff] %v1891
        %1898 = vmatprep.subr.bf16.mxu0 0
        %1899 = vmatpush1.bf16.xpose.msra.mxu0 0
        %1900 = vmatprep.subr.bf16.mxu0 0
        %1901 = vmatpush1.bf16.xpose.msra.mxu0 0
        %1902 = vmatprep.subr.bf16.mxu0 0
        %1903 = vmatpush1.bf16.xpose.msra.mxu0 0
        %1904 = vmatprep.subr.bf16.mxu0 0
        %1905 = vmatpush1.bf16.xpose.msra.mxu0 0
        %1906 = vmatprep.subr.bf16.mxu0 0
        %1907 = vmatpush1.bf16.xpose.msra.mxu0 0
        %1908 = vmatprep.subr.bf16.mxu0 0
        %1909 = vmatpush1.bf16.xpose.msra.mxu0 0
        %1910 = vmatprep.subr.bf16.mxu0 0
        %1911 = vmatpush1.bf16.xpose.msra.mxu0 %v1426
        %1912 = vmatprep.subr.bf16.mxu0 0
        %1913 = vmatpush1.bf16.xpose.msra.mxu0 %v1424
        %1914 = vmatprep.subr.bf16.mxu0 0
        %1915 = vmatpush2.bf16.xpose.msra.mxu0 0
        %1916 = vmatprep.subr.bf16.mxu0 0
        %1917 = vmatpush2.bf16.xpose.msra.mxu0 0
        %1918 = vmatprep.subr.bf16.mxu0 0
        %1919 = vmatpush2.bf16.xpose.msra.mxu0 0
        %1920 = vmatprep.subr.bf16.mxu0 0
        %1921 = vmatpush2.bf16.xpose.msra.mxu0 0
        %1922 = vmatprep.subr.bf16.mxu0 0
        %1923 = vmatpush2.bf16.xpose.msra.mxu0 0
        %1924 = vmatprep.subr.bf16.mxu0 0
        %1925 = vmatpush2.bf16.xpose.msra.mxu0 0
        %1926 = vmatprep.subr.bf16.mxu0 0
        %1927 = vmatpush2.bf16.xpose.msra.mxu0 0
        %1928 = vmatprep.subr.bf16.mxu0 0
        %1929 = vmatpush2.bf16.xpose.msra.mxu0 0
        %1930 = vmatprep.mubr.bf16.mxu0 0
        %1931 = vmatmul.mubr.bf16.gmra.mxu0 %v1416
        %v1932 = vpop.f32.mrf.mxu0
        %v1933 = vadd.f32 0.0, %v1932
        %v1934 = vpop.f32.mrf.mxu0
        %v1935 = vpop.f32.mrf.mxu0
        %v1936 = vadd.f32 0.0, %v1935
        %v1937 = vpop.f32.mrf.mxu0
        %1938 = vmatprep.mubr.bf16.mxu0 0
        %1939 = vmatmul.mubr.bf16.gmra.mxu0 %v1418
        %v1940 = vpop.f32.mrf.mxu0
        %v1941 = vadd.f32 0.0, %v1940
        %v1942 = vpop.f32.mrf.mxu0
        %v1943 = vpop.f32.mrf.mxu0
        %v1944 = vadd.f32 0.0, %v1943
        %v1945 = vpop.f32.mrf.mxu0
        %1946 = vdwg.mxu0
        %v1947 = vsel %vm1484, %v1933, -inf
        %1948 = vmax.xlane.f32.xlu0 %v1947
        %v1949 = vpop.xlane.xlu0 %1948
        %v1950 = vsel %vm1484, %v1936, -inf
        %1951 = vmax.xlane.f32.xlu0 %v1950
        %v1952 = vpop.xlane.xlu0 %1951
        %v1953 = vsel %vm1484, %v1941, -inf
        %1954 = vmax.xlane.f32.xlu0 %v1953
        %v1955 = vpop.xlane.xlu0 %1954
        %v1956 = vsel %vm1484, %v1944, -inf
        %1957 = vmax.xlane.f32.xlu0 %v1956
        %v1958 = vpop.xlane.xlu0 %1957
        %v1959 = vsub.f32 %v1933, %v1949
        %v1960 = vsub.f32 %v1936, %v1952
        %v1961 = vsub.f32 %v1941, %v1955
        %v1962 = vsub.f32 %v1944, %v1958
        %v1963 = vmul.f32 %v1959, 1.442695
        %v1964 = vpow.pop %v1963
        %v1965 = vmul.f32 %v1960, 1.442695
        %v1966 = vpow.pop %v1965
        %v1967 = vmul.f32 %v1961, 1.442695
        %v1968 = vpow.pop %v1967
        %v1969 = vmul.f32 %v1962, 1.442695
        %v1970 = vpow.pop %v1969
        %v1971 = vsel %vm1484, %v1964, 0.0
        %1972 = vadd.xlane.f32.xlu0 %v1971
        %v1973 = vpop.xlane.xlu0 %1972
        %v1974 = vsel %vm1484, %v1966, 0.0
        %1975 = vadd.xlane.f32.xlu0 %v1974
        %v1976 = vpop.xlane.xlu0 %1975
        %v1977 = vsel %vm1484, %v1968, 0.0
        %1978 = vadd.xlane.f32.xlu0 %v1977
        %v1979 = vpop.xlane.xlu0 %1978
        %v1980 = vsel %vm1484, %v1970, 0.0
        %1981 = vadd.xlane.f32.xlu0 %v1980
        %v1982 = vpop.xlane.xlu0 %1981
        %v1983 = vrcp.pop %v1973
        %v1984 = vrcp.pop %v1976
        %v1985 = vrcp.pop %v1979
        %v1986 = vrcp.pop %v1982
        %v1987 = vmul.f32 %v1964, %v1983
        %v1988 = vmul.f32 %v1966, %v1984
        %v1989 = vmul.f32 %v1968, %v1985
        %v1990 = vmul.f32 %v1970, %v1986
        %v1991 = vpack.c.bf16 %v1988, %v1987
        %v1992 = vpack.c.bf16 %v1990, %v1989
        %v1994 = vsel %vm1484, %v1991, 0
        %v1997 = vsel %vm1484, %v1992, 0
        %1999 = vmatprep.subr.bf16.mxu0 0
        %2000 = vmatpush1.bf16.msra.mxu0 0
        %2001 = vmatprep.subr.bf16.mxu0 0
        %2002 = vmatpush1.bf16.msra.mxu0 0
        %2003 = vmatprep.subr.bf16.mxu0 0
        %2004 = vmatpush1.bf16.msra.mxu0 0
        %2005 = vmatprep.subr.bf16.mxu0 0
        %2006 = vmatpush1.bf16.msra.mxu0 0
        %2007 = vmatprep.subr.bf16.mxu0 0
        %2008 = vmatpush1.bf16.msra.mxu0 0
        %2009 = vmatprep.subr.bf16.mxu0 0
        %2010 = vmatpush1.bf16.msra.mxu0 0
        %2011 = vmatprep.subr.bf16.mxu0 0
        %2012 = vmatpush1.bf16.msra.mxu0 %v1434
        %2013 = vmatprep.subr.bf16.mxu0 0
        %2014 = vmatpush1.bf16.msra.mxu0 %v1432
        %2015 = vmatprep.subr.bf16.mxu0 0
        %2016 = vmatpush2.bf16.msra.mxu0 0
        %2017 = vmatprep.subr.bf16.mxu0 0
        %2018 = vmatpush2.bf16.msra.mxu0 0
        %2019 = vmatprep.subr.bf16.mxu0 0
        %2020 = vmatpush2.bf16.msra.mxu0 0
        %2021 = vmatprep.subr.bf16.mxu0 0
        %2022 = vmatpush2.bf16.msra.mxu0 0
        %2023 = vmatprep.subr.bf16.mxu0 0
        %2024 = vmatpush2.bf16.msra.mxu0 0
        %2025 = vmatprep.subr.bf16.mxu0 0
        %2026 = vmatpush2.bf16.msra.mxu0 0
        %2027 = vmatprep.subr.bf16.mxu0 0
        %2028 = vmatpush2.bf16.msra.mxu0 0
        %2029 = vmatprep.subr.bf16.mxu0 0
        %2030 = vmatpush2.bf16.msra.mxu0 0
        %2031 = vmatprep.mubr.bf16.mxu0 0
        %2032 = vmatmul.mubr.bf16.gmra.mxu0 %v1994
        %v2033 = vpop.f32.mrf.mxu0
        %v2034 = vadd.f32 0.0, %v2033
        %v2035 = vpop.f32.mrf.mxu0
        %v2036 = vpop.f32.mrf.mxu0
        %v2037 = vadd.f32 0.0, %v2036
        %v2038 = vpop.f32.mrf.mxu0
        %2039 = vmatprep.mubr.bf16.mxu0 0
        %2040 = vmatmul.mubr.bf16.gmra.mxu0 %v1997
        %v2041 = vpop.f32.mrf.mxu0
        %v2042 = vadd.f32 0.0, %v2041
        %v2043 = vpop.f32.mrf.mxu0
        %v2044 = vpop.f32.mrf.mxu0
        %v2045 = vadd.f32 0.0, %v2044
        %v2046 = vpop.f32.mrf.mxu0
        %2047 = vdwg.mxu0
        %2048 = vst [vmem:[#allocation3 + $0x48] sm:$0xff] %v2034
        %2049 = vst [vmem:[#allocation3 + $0x58] sm:$0xff] %v2037
        %2050 = vst [vmem:[#allocation3 + $0x68] sm:$0xff] %v2042
        %2051 = vst [vmem:[#allocation3 + $0x78] sm:$0xff] %v2045
        %v2052 = vld [vmem:[#allocation3] sm:$0xff]
        %v2053 = vld [vmem:[#allocation3 + $0x8] sm:$0xff]
        %v2054 = vld [vmem:[#allocation3 + $0x10] sm:$0xff]
        %v2055 = vld [vmem:[#allocation3 + $0x18] sm:$0xff]
        %v2056 = vld [vmem:[#allocation3 + $0x20] sm:$0xff]
        %v2057 = vld [vmem:[#allocation3 + $0x28] sm:$0xff]
        %v2058 = vld [vmem:[#allocation3 + $0x30] sm:$0xff]
        %v2059 = vld [vmem:[#allocation3 + $0x38] sm:$0xff]
        %v2060 = vld [vmem:[#allocation3 + $0x40] sm:$0xff]
        %v2061 = vld [vmem:[#allocation3 + $0x48] sm:$0xff]
        %v2062 = vld [vmem:[#allocation3 + $0x50] sm:$0xff]
        %v2063 = vld [vmem:[#allocation3 + $0x58] sm:$0xff]
        %v2064 = vld [vmem:[#allocation3 + $0x60] sm:$0xff]
        %v2065 = vld [vmem:[#allocation3 + $0x68] sm:$0xff]
        %v2066 = vld [vmem:[#allocation3 + $0x70] sm:$0xff]
        %v2067 = vld [vmem:[#allocation3 + $0x78] sm:$0xff]
        %v2068 = vpack.c.bf16 %v2054, %v2052
        %v2069 = vpack.c.bf16 %v2055, %v2053
        %v2070 = vpack.c.bf16 %v2058, %v2056
        %v2071 = vpack.c.bf16 %v2059, %v2057
        %v2072 = vpack.c.bf16 %v2062, %v2060
        %v2073 = vpack.c.bf16 %v2063, %v2061
        %v2074 = vpack.c.bf16 %v2066, %v2064
        %v2075 = vpack.c.bf16 %v2067, %v2065
        %v2076 = vld [vmem:[%s400] sm:$0xff]
        %v2077 = vld [vmem:[%s400 + $0x8] sm:$0xff]
        %v2078 = vld [vmem:[%s400 + $0x10] sm:$0xff]
        %v2079 = vld [vmem:[%s400 + $0x18] sm:$0xff]
        %v2080 = vld [vmem:[%s400 + $0x20] sm:$0xff]
        %v2081 = vld [vmem:[%s400 + $0x28] sm:$0xff]
        %v2082 = vld [vmem:[%s400 + $0x30] sm:$0xff]
        %v2083 = vld [vmem:[%s400 + $0x38] sm:$0xff]
        %v2084 = vld [vmem:[%s400 + $0x40] sm:$0xff]
        %v2085 = vld [vmem:[%s400 + $0x48] sm:$0xff]
        %v2086 = vld [vmem:[%s400 + $0x50] sm:$0xff]
        %v2087 = vld [vmem:[%s400 + $0x58] sm:$0xff]
        %v2088 = vld [vmem:[%s400 + $0x60] sm:$0xff]
        %v2089 = vld [vmem:[%s400 + $0x68] sm:$0xff]
        %v2090 = vld [vmem:[%s400 + $0x70] sm:$0xff]
        %v2091 = vld [vmem:[%s400 + $0x78] sm:$0xff]
        %v2092 = vld [vmem:[%s400 + $0x80] sm:$0xff]
        %v2093 = vld [vmem:[%s400 + $0x88] sm:$0xff]
        %v2094 = vld [vmem:[%s400 + $0x90] sm:$0xff]
        %v2095 = vld [vmem:[%s400 + $0x98] sm:$0xff]
        %v2096 = vld [vmem:[%s400 + $0xa0] sm:$0xff]
        %v2097 = vld [vmem:[%s400 + $0xa8] sm:$0xff]
        %v2098 = vld [vmem:[%s400 + $0xb0] sm:$0xff]
        %v2099 = vld [vmem:[%s400 + $0xb8] sm:$0xff]
        %v2100 = vld [vmem:[%s400 + $0xc0] sm:$0xff]
        %v2101 = vld [vmem:[%s400 + $0xc8] sm:$0xff]
        %v2102 = vld [vmem:[%s400 + $0xd0] sm:$0xff]
        %v2103 = vld [vmem:[%s400 + $0xd8] sm:$0xff]
        %v2104 = vld [vmem:[%s400 + $0xe0] sm:$0xff]
        %v2105 = vld [vmem:[%s400 + $0xe8] sm:$0xff]
        %v2106 = vld [vmem:[%s400 + $0xf0] sm:$0xff]
        %v2107 = vld [vmem:[%s400 + $0xf8] sm:$0xff]
        %v2108 = vlaneseq
        %v2109 = vshrl.u32 %v2108, 7
        %v2110 = vsub.s32 2, %v2109
        %v2111 = vrot.slane %v554, %v2110
        %v2112 = vlaneseq
        %v2113 = vshrl.u32 %v2112, 7
        %v2114 = vsub.s32 2, %v2113
        %v2115 = vrot.slane %v555, %v2114
        %v2148 = vunpack.c.l.b16 %v2076
        %v2149 = vunpack.c.h.b16 %v2076
        %v2150 = vunpack.c.l.b16 %v2077
        %v2151 = vunpack.c.h.b16 %v2077
        %v2152 = vunpack.c.l.b16 %v2078
        %v2153 = vunpack.c.h.b16 %v2078
        %v2154 = vunpack.c.l.b16 %v2079
        %v2155 = vunpack.c.h.b16 %v2079
        %v2156 = vunpack.c.l.b16 %v2080
        %v2157 = vunpack.c.h.b16 %v2080
        %v2158 = vunpack.c.l.b16 %v2081
        %v2159 = vunpack.c.h.b16 %v2081
        %v2160 = vunpack.c.l.b16 %v2082
        %v2161 = vunpack.c.h.b16 %v2082
        %v2162 = vunpack.c.l.b16 %v2083
        %v2163 = vunpack.c.h.b16 %v2083
        %v2164 = vunpack.c.l.b16 %v2084
        %v2165 = vunpack.c.h.b16 %v2084
        %v2166 = vunpack.c.l.b16 %v2085
        %v2167 = vunpack.c.h.b16 %v2085
        %v2168 = vunpack.c.l.b16 %v2086
        %v2169 = vunpack.c.h.b16 %v2086
        %v2170 = vunpack.c.l.b16 %v2087
        %v2171 = vunpack.c.h.b16 %v2087
        %v2172 = vunpack.c.l.b16 %v2088
        %v2173 = vunpack.c.h.b16 %v2088
        %v2174 = vunpack.c.l.b16 %v2089
        %v2175 = vunpack.c.h.b16 %v2089
        %v2176 = vunpack.c.l.b16 %v2090
        %v2177 = vunpack.c.h.b16 %v2090
        %v2178 = vunpack.c.l.b16 %v2091
        %v2179 = vunpack.c.h.b16 %v2091
        %v2180 = vunpack.c.l.b16 %v2092
        %v2181 = vunpack.c.h.b16 %v2092
        %v2182 = vunpack.c.l.b16 %v2093
        %v2183 = vunpack.c.h.b16 %v2093
        %v2184 = vunpack.c.l.b16 %v2094
        %v2185 = vunpack.c.h.b16 %v2094
        %v2186 = vunpack.c.l.b16 %v2095
        %v2187 = vunpack.c.h.b16 %v2095
        %v2188 = vunpack.c.l.b16 %v2096
        %v2189 = vunpack.c.h.b16 %v2096
        %v2190 = vunpack.c.l.b16 %v2097
        %v2191 = vunpack.c.h.b16 %v2097
        %v2192 = vunpack.c.l.b16 %v2098
        %v2193 = vunpack.c.h.b16 %v2098
        %v2194 = vunpack.c.l.b16 %v2099
        %v2195 = vunpack.c.h.b16 %v2099
        %v2196 = vunpack.c.l.b16 %v2100
        %v2197 = vunpack.c.h.b16 %v2100
        %v2198 = vunpack.c.l.b16 %v2101
        %v2199 = vunpack.c.h.b16 %v2101
        %v2200 = vunpack.c.l.b16 %v2102
        %v2201 = vunpack.c.h.b16 %v2102
        %v2202 = vunpack.c.l.b16 %v2103
        %v2203 = vunpack.c.h.b16 %v2103
        %v2204 = vunpack.c.l.b16 %v2104
        %v2205 = vunpack.c.h.b16 %v2104
        %v2206 = vunpack.c.l.b16 %v2105
        %v2207 = vunpack.c.h.b16 %v2105
        %v2208 = vunpack.c.l.b16 %v2106
        %v2209 = vunpack.c.h.b16 %v2106
        %v2210 = vunpack.c.l.b16 %v2107
        %v2211 = vunpack.c.h.b16 %v2107
        %v2212 = vpack.c.b16 %v2150, %v2148
        %v2213 = vpack.c.b16 %v2151, %v2149
        %v2214 = vpack.c.b16 %v2154, %v2152
        %v2215 = vpack.c.b16 %v2155, %v2153
        %v2216 = vpack.c.b16 %v2158, %v2156
        %v2217 = vpack.c.b16 %v2159, %v2157
        %v2218 = vpack.c.b16 %v2162, %v2160
        %v2219 = vpack.c.b16 %v2163, %v2161
        %v2220 = vpack.c.b16 %v2166, %v2164
        %v2221 = vpack.c.b16 %v2167, %v2165
        %v2222 = vpack.c.b16 %v2170, %v2168
        %v2223 = vpack.c.b16 %v2171, %v2169
        %v2224 = vpack.c.b16 %v2174, %v2172
        %v2225 = vpack.c.b16 %v2175, %v2173
        %v2226 = vpack.c.b16 %v2178, %v2176
        %v2227 = vpack.c.b16 %v2179, %v2177
        %v2228 = vpack.c.b16 %v2182, %v2180
        %v2229 = vpack.c.b16 %v2183, %v2181
        %v2230 = vpack.c.b16 %v2186, %v2184
        %v2231 = vpack.c.b16 %v2187, %v2185
        %v2232 = vpack.c.b16 %v2190, %v2188
        %v2233 = vpack.c.b16 %v2191, %v2189
        %v2234 = vpack.c.b16 %v2194, %v2192
        %v2235 = vpack.c.b16 %v2195, %v2193
        %v2236 = vpack.c.b16 %v2198, %v2196
        %v2237 = vpack.c.b16 %v2199, %v2197
        %v2238 = vpack.c.b16 %v2202, %v2200
        %v2239 = vpack.c.b16 %v2203, %v2201
        %v2240 = vpack.c.b16 %v2206, %v2204
        %v2241 = vpack.c.b16 %v2207, %v2205
        %v2242 = vpack.c.b16 %v2210, %v2208
        %v2243 = vpack.c.b16 %v2211, %v2209
        %2276 = vmatprep.subr.bf16.mxu0 %v2227
        %2277 = vmatpush1.bf16.msra.mxu0 %v2226
        %2278 = vmatprep.subr.bf16.mxu0 %v2225
        %2279 = vmatpush1.bf16.msra.mxu0 %v2224
        %2280 = vmatprep.subr.bf16.mxu0 %v2223
        %2281 = vmatpush1.bf16.msra.mxu0 %v2222
        %2282 = vmatprep.subr.bf16.mxu0 %v2221
        %2283 = vmatpush1.bf16.msra.mxu0 %v2220
        %2284 = vmatprep.subr.bf16.mxu0 %v2219
        %2285 = vmatpush1.bf16.msra.mxu0 %v2218
        %2286 = vmatprep.subr.bf16.mxu0 %v2217
        %2287 = vmatpush1.bf16.msra.mxu0 %v2216
        %2288 = vmatprep.subr.bf16.mxu0 %v2215
        %2289 = vmatpush1.bf16.msra.mxu0 %v2214
        %2290 = vmatprep.subr.bf16.mxu0 %v2213
        %2291 = vmatpush1.bf16.msra.mxu0 %v2212
        %2292 = vmatprep.subr.bf16.mxu0 %v2243
        %2293 = vmatpush2.bf16.msra.mxu0 %v2242
        %2294 = vmatprep.subr.bf16.mxu0 %v2241
        %2295 = vmatpush2.bf16.msra.mxu0 %v2240
        %2296 = vmatprep.subr.bf16.mxu0 %v2239
        %2297 = vmatpush2.bf16.msra.mxu0 %v2238
        %2298 = vmatprep.subr.bf16.mxu0 %v2237
        %2299 = vmatpush2.bf16.msra.mxu0 %v2236
        %2300 = vmatprep.subr.bf16.mxu0 %v2235
        %2301 = vmatpush2.bf16.msra.mxu0 %v2234
        %2302 = vmatprep.subr.bf16.mxu0 %v2233
        %2303 = vmatpush2.bf16.msra.mxu0 %v2232
        %2304 = vmatprep.subr.bf16.mxu0 %v2231
        %2305 = vmatpush2.bf16.msra.mxu0 %v2230
        %2306 = vmatprep.subr.bf16.mxu0 %v2229
        %2307 = vmatpush2.bf16.msra.mxu0 %v2228
        %2308 = vmatprep.mubr.bf16.mxu0 %v2069
        %2309 = vmatmul.mubr.bf16.gmra.mxu0 %v2068
        %v2310 = vpop.f32.mrf.mxu0
        %v2311 = vadd.f32 %v2111, %v2310
        %v2312 = vpop.f32.mrf.mxu0
        %v2313 = vadd.f32 %v2115, %v2312
        %v2314 = vpop.f32.mrf.mxu0
        %v2315 = vadd.f32 %v2111, %v2314
        %v2316 = vpop.f32.mrf.mxu0
        %v2317 = vadd.f32 %v2115, %v2316
        %2318 = vmatprep.mubr.bf16.mxu0 %v2071
        %2319 = vmatmul.mubr.bf16.gmra.mxu0 %v2070
        %v2320 = vpop.f32.mrf.mxu0
        %v2321 = vadd.f32 %v2111, %v2320
        %v2322 = vpop.f32.mrf.mxu0
        %v2323 = vadd.f32 %v2115, %v2322
        %v2324 = vpop.f32.mrf.mxu0
        %v2325 = vadd.f32 %v2111, %v2324
        %v2326 = vpop.f32.mrf.mxu0
        %v2327 = vadd.f32 %v2115, %v2326
        %2328 = vmatprep.mubr.bf16.mxu0 %v2073
        %2329 = vmatmul.mubr.bf16.gmra.mxu0 %v2072
        %v2330 = vpop.f32.mrf.mxu0
        %v2331 = vadd.f32 %v2111, %v2330
        %v2332 = vpop.f32.mrf.mxu0
        %v2333 = vadd.f32 %v2115, %v2332
        %v2334 = vpop.f32.mrf.mxu0
        %v2335 = vadd.f32 %v2111, %v2334
        %v2336 = vpop.f32.mrf.mxu0
        %v2337 = vadd.f32 %v2115, %v2336
        %2338 = vmatprep.mubr.bf16.mxu0 %v2075
        %2339 = vmatmul.mubr.bf16.gmra.mxu0 %v2074
        %v2340 = vpop.f32.mrf.mxu0
        %v2341 = vadd.f32 %v2111, %v2340
        %v2342 = vpop.f32.mrf.mxu0
        %v2343 = vadd.f32 %v2115, %v2342
        %v2344 = vpop.f32.mrf.mxu0
        %v2345 = vadd.f32 %v2111, %v2344
        %v2346 = vpop.f32.mrf.mxu0
        %v2347 = vadd.f32 %v2115, %v2346
        %2348 = vdwg.mxu0
        %v2349 = vadd.f32 %v522, %v2311
        %v2350 = vadd.f32 %v523, %v2313
        %v2351 = vadd.f32 %v524, %v2315
        %v2352 = vadd.f32 %v525, %v2317
        %v2353 = vadd.f32 %v526, %v2321
        %v2354 = vadd.f32 %v527, %v2323
        %v2355 = vadd.f32 %v528, %v2325
        %v2356 = vadd.f32 %v529, %v2327
        %v2357 = vadd.f32 %v530, %v2331
        %v2358 = vadd.f32 %v531, %v2333
        %v2359 = vadd.f32 %v532, %v2335
        %v2360 = vadd.f32 %v533, %v2337
        %v2361 = vadd.f32 %v534, %v2341
        %v2362 = vadd.f32 %v535, %v2343
        %v2363 = vadd.f32 %v536, %v2345
        %v2364 = vadd.f32 %v537, %v2347
        %v2365 = vadd.f32 %v2349, %v2350
        %2366 = vadd.xlane.f32.xlu0 %v2365
        %v2367 = vpop.xlane.xlu0 %2366
        %v2368 = vadd.f32 %v2351, %v2352
        %2369 = vadd.xlane.f32.xlu0 %v2368
        %v2370 = vpop.xlane.xlu0 %2369
        %v2371 = vadd.f32 %v2353, %v2354
        %2372 = vadd.xlane.f32.xlu0 %v2371
        %v2373 = vpop.xlane.xlu0 %2372
        %v2374 = vadd.f32 %v2355, %v2356
        %2375 = vadd.xlane.f32.xlu0 %v2374
        %v2376 = vpop.xlane.xlu0 %2375
        %v2377 = vadd.f32 %v2357, %v2358
        %2378 = vadd.xlane.f32.xlu0 %v2377
        %v2379 = vpop.xlane.xlu0 %2378
        %v2380 = vadd.f32 %v2359, %v2360
        %2381 = vadd.xlane.f32.xlu0 %v2380
        %v2382 = vpop.xlane.xlu0 %2381
        %v2383 = vadd.f32 %v2361, %v2362
        %2384 = vadd.xlane.f32.xlu0 %v2383
        %v2385 = vpop.xlane.xlu0 %2384
        %v2386 = vadd.f32 %v2363, %v2364
        %2387 = vadd.xlane.f32.xlu0 %v2386
        %v2388 = vpop.xlane.xlu0 %2387
        %v2389 = vrcp.pop 256.0
        %v2390 = vmul.f32 %v2367, %v2389
        %v2391 = vmul.f32 %v2370, %v2389
        %v2392 = vmul.f32 %v2373, %v2389
        %v2393 = vmul.f32 %v2376, %v2389
        %v2394 = vmul.f32 %v2379, %v2389
        %v2395 = vmul.f32 %v2382, %v2389
        %v2396 = vmul.f32 %v2385, %v2389
        %v2397 = vmul.f32 %v2388, %v2389
        %v2398 = vsub.f32 %v2349, %v2390
        %v2399 = vsub.f32 %v2350, %v2390
        %v2400 = vsub.f32 %v2351, %v2391
        %v2401 = vsub.f32 %v2352, %v2391
        %v2402 = vsub.f32 %v2353, %v2392
        %v2403 = vsub.f32 %v2354, %v2392
        %v2404 = vsub.f32 %v2355, %v2393
        %v2405 = vsub.f32 %v2356, %v2393
        %v2406 = vsub.f32 %v2357, %v2394
        %v2407 = vsub.f32 %v2358, %v2394
        %v2408 = vsub.f32 %v2359, %v2395
        %v2409 = vsub.f32 %v2360, %v2395
        %v2410 = vsub.f32 %v2361, %v2396
        %v2411 = vsub.f32 %v2362, %v2396
        %v2412 = vsub.f32 %v2363, %v2397
        %v2413 = vsub.f32 %v2364, %v2397
        %v2414 = vmul.f32 %v2398, %v2398
        %v2415 = vmul.f32 %v2399, %v2399
        %v2416 = vmul.f32 %v2400, %v2400
        %v2417 = vmul.f32 %v2401, %v2401
        %v2418 = vmul.f32 %v2402, %v2402
        %v2419 = vmul.f32 %v2403, %v2403
        %v2420 = vmul.f32 %v2404, %v2404
        %v2421 = vmul.f32 %v2405, %v2405
        %v2422 = vmul.f32 %v2406, %v2406
        %v2423 = vmul.f32 %v2407, %v2407
        %v2424 = vmul.f32 %v2408, %v2408
        %v2425 = vmul.f32 %v2409, %v2409
        %v2426 = vmul.f32 %v2410, %v2410
        %v2427 = vmul.f32 %v2411, %v2411
        %v2428 = vmul.f32 %v2412, %v2412
        %v2429 = vmul.f32 %v2413, %v2413
        %v2430 = vadd.f32 %v2414, %v2415
        %2431 = vadd.xlane.f32.xlu0 %v2430
        %v2432 = vpop.xlane.xlu0 %2431
        %v2433 = vadd.f32 %v2416, %v2417
        %2434 = vadd.xlane.f32.xlu0 %v2433
        %v2435 = vpop.xlane.xlu0 %2434
        %v2436 = vadd.f32 %v2418, %v2419
        %2437 = vadd.xlane.f32.xlu0 %v2436
        %v2438 = vpop.xlane.xlu0 %2437
        %v2439 = vadd.f32 %v2420, %v2421
        %2440 = vadd.xlane.f32.xlu0 %v2439
        %v2441 = vpop.xlane.xlu0 %2440
        %v2442 = vadd.f32 %v2422, %v2423
        %2443 = vadd.xlane.f32.xlu0 %v2442
        %v2444 = vpop.xlane.xlu0 %2443
        %v2445 = vadd.f32 %v2424, %v2425
        %2446 = vadd.xlane.f32.xlu0 %v2445
        %v2447 = vpop.xlane.xlu0 %2446
        %v2448 = vadd.f32 %v2426, %v2427
        %2449 = vadd.xlane.f32.xlu0 %v2448
        %v2450 = vpop.xlane.xlu0 %2449
        %v2451 = vadd.f32 %v2428, %v2429
        %2452 = vadd.xlane.f32.xlu0 %v2451
        %v2453 = vpop.xlane.xlu0 %2452
        %v2454 = vmul.f32 %v2432, %v2389
        %v2455 = vmul.f32 %v2435, %v2389
        %v2456 = vmul.f32 %v2438, %v2389
        %v2457 = vmul.f32 %v2441, %v2389
        %v2458 = vmul.f32 %v2444, %v2389
        %v2459 = vmul.f32 %v2447, %v2389
        %v2460 = vmul.f32 %v2450, %v2389
        %v2461 = vmul.f32 %v2453, %v2389
        %v2462 = vadd.f32 %v2454, 1e-05
        %v2463 = vadd.f32 %v2455, 1e-05
        %v2464 = vadd.f32 %v2456, 1e-05
        %v2465 = vadd.f32 %v2457, 1e-05
        %v2466 = vadd.f32 %v2458, 1e-05
        %v2467 = vadd.f32 %v2459, 1e-05
        %v2468 = vadd.f32 %v2460, 1e-05
        %v2469 = vadd.f32 %v2461, 1e-05
        %v2470 = vrsqrt.pop %v2462
        %v2471 = vrsqrt.pop %v2463
        %v2472 = vrsqrt.pop %v2464
        %v2473 = vrsqrt.pop %v2465
        %v2474 = vrsqrt.pop %v2466
        %v2475 = vrsqrt.pop %v2467
        %v2476 = vrsqrt.pop %v2468
        %v2477 = vrsqrt.pop %v2469
        %v2478 = vmul.f32 %v2398, %v2470
        %v2479 = vmul.f32 %v2399, %v2470
        %v2480 = vmul.f32 %v2400, %v2471
        %v2481 = vmul.f32 %v2401, %v2471
        %v2482 = vmul.f32 %v2402, %v2472
        %v2483 = vmul.f32 %v2403, %v2472
        %v2484 = vmul.f32 %v2404, %v2473
        %v2485 = vmul.f32 %v2405, %v2473
        %v2486 = vmul.f32 %v2406, %v2474
        %v2487 = vmul.f32 %v2407, %v2474
        %v2488 = vmul.f32 %v2408, %v2475
        %v2489 = vmul.f32 %v2409, %v2475
        %v2490 = vmul.f32 %v2410, %v2476
        %v2491 = vmul.f32 %v2411, %v2476
        %v2492 = vmul.f32 %v2412, %v2477
        %v2493 = vmul.f32 %v2413, %v2477
        %v2494 = vlaneseq
        %v2495 = vshrl.u32 %v2494, 7
        %v2496 = vsub.s32 3, %v2495
        %v2497 = vrot.slane %v554, %v2496
        %v2498 = vlaneseq
        %v2499 = vshrl.u32 %v2498, 7
        %v2500 = vsub.s32 3, %v2499
        %v2501 = vrot.slane %v555, %v2500
        %v2502 = vmul.f32 %v2478, %v2497
        %v2503 = vmul.f32 %v2479, %v2501
        %v2504 = vmul.f32 %v2480, %v2497
        %v2505 = vmul.f32 %v2481, %v2501
        %v2506 = vmul.f32 %v2482, %v2497
        %v2507 = vmul.f32 %v2483, %v2501
        %v2508 = vmul.f32 %v2484, %v2497
        %v2509 = vmul.f32 %v2485, %v2501
        %v2510 = vmul.f32 %v2486, %v2497
        %v2511 = vmul.f32 %v2487, %v2501
        %v2512 = vmul.f32 %v2488, %v2497
        %v2513 = vmul.f32 %v2489, %v2501
        %v2514 = vmul.f32 %v2490, %v2497
        %v2515 = vmul.f32 %v2491, %v2501
        %v2516 = vmul.f32 %v2492, %v2497
        %v2517 = vmul.f32 %v2493, %v2501
        %v2518 = vlaneseq
        %v2519 = vshrl.u32 %v2518, 7
        %v2520 = vsub.s32 4, %v2519
        %v2521 = vrot.slane %v554, %v2520
        %v2522 = vlaneseq
        %v2523 = vshrl.u32 %v2522, 7
        %v2524 = vsub.s32 4, %v2523
        %v2525 = vrot.slane %v555, %v2524
        %v2526 = vadd.f32 %v2502, %v2521
        %v2527 = vadd.f32 %v2503, %v2525
        %v2528 = vadd.f32 %v2504, %v2521
        %v2529 = vadd.f32 %v2505, %v2525
        %v2530 = vadd.f32 %v2506, %v2521
        %v2531 = vadd.f32 %v2507, %v2525
        %v2532 = vadd.f32 %v2508, %v2521
        %v2533 = vadd.f32 %v2509, %v2525
        %v2534 = vadd.f32 %v2510, %v2521
        %v2535 = vadd.f32 %v2511, %v2525
        %v2536 = vadd.f32 %v2512, %v2521
        %v2537 = vadd.f32 %v2513, %v2525
        %v2538 = vadd.f32 %v2514, %v2521
        %v2539 = vadd.f32 %v2515, %v2525
        %v2540 = vadd.f32 %v2516, %v2521
        %v2541 = vadd.f32 %v2517, %v2525
        %v2542 = vpack.c.bf16 %v2528, %v2526
        %v2543 = vpack.c.bf16 %v2529, %v2527
        %v2544 = vpack.c.bf16 %v2532, %v2530
        %v2545 = vpack.c.bf16 %v2533, %v2531
        %v2546 = vpack.c.bf16 %v2536, %v2534
        %v2547 = vpack.c.bf16 %v2537, %v2535
        %v2548 = vpack.c.bf16 %v2540, %v2538
        %v2549 = vpack.c.bf16 %v2541, %v2539
        %v2550 = vld [vmem:[%s409] sm:$0xff]
        %v2551 = vld [vmem:[%s409 + $0x8] sm:$0xff]
        %v2552 = vld [vmem:[%s409 + $0x10] sm:$0xff]
        %v2553 = vld [vmem:[%s409 + $0x18] sm:$0xff]
        %v2554 = vld [vmem:[%s409 + $0x20] sm:$0xff]
        %v2555 = vld [vmem:[%s409 + $0x28] sm:$0xff]
        %v2556 = vld [vmem:[%s409 + $0x30] sm:$0xff]
        %v2557 = vld [vmem:[%s409 + $0x38] sm:$0xff]
        %v2558 = vld [vmem:[%s409 + $0x40] sm:$0xff]
        %v2559 = vld [vmem:[%s409 + $0x48] sm:$0xff]
        %v2560 = vld [vmem:[%s409 + $0x50] sm:$0xff]
        %v2561 = vld [vmem:[%s409 + $0x58] sm:$0xff]
        %v2562 = vld [vmem:[%s409 + $0x60] sm:$0xff]
        %v2563 = vld [vmem:[%s409 + $0x68] sm:$0xff]
        %v2564 = vld [vmem:[%s409 + $0x70] sm:$0xff]
        %v2565 = vld [vmem:[%s409 + $0x78] sm:$0xff]
        %v2566 = vld [vmem:[%s409 + $0x80] sm:$0xff]
        %v2567 = vld [vmem:[%s409 + $0x88] sm:$0xff]
        %v2568 = vld [vmem:[%s409 + $0x90] sm:$0xff]
        %v2569 = vld [vmem:[%s409 + $0x98] sm:$0xff]
        %v2570 = vld [vmem:[%s409 + $0xa0] sm:$0xff]
        %v2571 = vld [vmem:[%s409 + $0xa8] sm:$0xff]
        %v2572 = vld [vmem:[%s409 + $0xb0] sm:$0xff]
        %v2573 = vld [vmem:[%s409 + $0xb8] sm:$0xff]
        %v2574 = vld [vmem:[%s409 + $0xc0] sm:$0xff]
        %v2575 = vld [vmem:[%s409 + $0xc8] sm:$0xff]
        %v2576 = vld [vmem:[%s409 + $0xd0] sm:$0xff]
        %v2577 = vld [vmem:[%s409 + $0xd8] sm:$0xff]
        %v2578 = vld [vmem:[%s409 + $0xe0] sm:$0xff]
        %v2579 = vld [vmem:[%s409 + $0xe8] sm:$0xff]
        %v2580 = vld [vmem:[%s409 + $0xf0] sm:$0xff]
        %v2581 = vld [vmem:[%s409 + $0xf8] sm:$0xff]
        %v2582 = vld [vmem:[%s409 + $0x100] sm:$0xff]
        %v2583 = vld [vmem:[%s409 + $0x108] sm:$0xff]
        %v2584 = vld [vmem:[%s409 + $0x110] sm:$0xff]
        %v2585 = vld [vmem:[%s409 + $0x118] sm:$0xff]
        %v2586 = vld [vmem:[%s409 + $0x120] sm:$0xff]
        %v2587 = vld [vmem:[%s409 + $0x128] sm:$0xff]
        %v2588 = vld [vmem:[%s409 + $0x130] sm:$0xff]
        %v2589 = vld [vmem:[%s409 + $0x138] sm:$0xff]
        %v2590 = vld [vmem:[%s409 + $0x140] sm:$0xff]
        %v2591 = vld [vmem:[%s409 + $0x148] sm:$0xff]
        %v2592 = vld [vmem:[%s409 + $0x150] sm:$0xff]
        %v2593 = vld [vmem:[%s409 + $0x158] sm:$0xff]
        %v2594 = vld [vmem:[%s409 + $0x160] sm:$0xff]
        %v2595 = vld [vmem:[%s409 + $0x168] sm:$0xff]
        %v2596 = vld [vmem:[%s409 + $0x170] sm:$0xff]
        %v2597 = vld [vmem:[%s409 + $0x178] sm:$0xff]
        %v2598 = vld [vmem:[%s409 + $0x180] sm:$0xff]
        %v2599 = vld [vmem:[%s409 + $0x188] sm:$0xff]
        %v2600 = vld [vmem:[%s409 + $0x190] sm:$0xff]
        %v2601 = vld [vmem:[%s409 + $0x198] sm:$0xff]
        %v2602 = vld [vmem:[%s409 + $0x1a0] sm:$0xff]
        %v2603 = vld [vmem:[%s409 + $0x1a8] sm:$0xff]
        %v2604 = vld [vmem:[%s409 + $0x1b0] sm:$0xff]
        %v2605 = vld [vmem:[%s409 + $0x1b8] sm:$0xff]
        %v2606 = vld [vmem:[%s409 + $0x1c0] sm:$0xff]
        %v2607 = vld [vmem:[%s409 + $0x1c8] sm:$0xff]
        %v2608 = vld [vmem:[%s409 + $0x1d0] sm:$0xff]
        %v2609 = vld [vmem:[%s409 + $0x1d8] sm:$0xff]
        %v2610 = vld [vmem:[%s409 + $0x1e0] sm:$0xff]
        %v2611 = vld [vmem:[%s409 + $0x1e8] sm:$0xff]
        %v2612 = vld [vmem:[%s409 + $0x1f0] sm:$0xff]
        %v2613 = vld [vmem:[%s409 + $0x1f8] sm:$0xff]
        %v2614 = vlaneseq
        %v2615 = vshrl.u32 %v2614, 7
        %v2616 = vsub.s32 5, %v2615
        %v2617 = vrot.slane %v554, %v2616
        %v2618 = vlaneseq
        %v2619 = vshrl.u32 %v2618, 7
        %v2620 = vsub.s32 5, %v2619
        %v2621 = vrot.slane %v555, %v2620
        %v2622 = vlaneseq
        %v2623 = vshrl.u32 %v2622, 7
        %v2624 = vsub.s32 5, %v2623
        %v2625 = vrot.slane %v556, %v2624
        %v2626 = vlaneseq
        %v2627 = vshrl.u32 %v2626, 7
        %v2628 = vsub.s32 5, %v2627
        %v2629 = vrot.slane %v557, %v2628
        %v2694 = vunpack.c.l.b16 %v2550
        %v2695 = vunpack.c.h.b16 %v2550
        %v2696 = vunpack.c.l.b16 %v2551
        %v2697 = vunpack.c.h.b16 %v2551
        %v2698 = vunpack.c.l.b16 %v2552
        %v2699 = vunpack.c.h.b16 %v2552
        %v2700 = vunpack.c.l.b16 %v2553
        %v2701 = vunpack.c.h.b16 %v2553
        %v2702 = vunpack.c.l.b16 %v2554
        %v2703 = vunpack.c.h.b16 %v2554
        %v2704 = vunpack.c.l.b16 %v2555
        %v2705 = vunpack.c.h.b16 %v2555
        %v2706 = vunpack.c.l.b16 %v2556
        %v2707 = vunpack.c.h.b16 %v2556
        %v2708 = vunpack.c.l.b16 %v2557
        %v2709 = vunpack.c.h.b16 %v2557
        %v2710 = vunpack.c.l.b16 %v2558
        %v2711 = vunpack.c.h.b16 %v2558
        %v2712 = vunpack.c.l.b16 %v2559
        %v2713 = vunpack.c.h.b16 %v2559
        %v2714 = vunpack.c.l.b16 %v2560
        %v2715 = vunpack.c.h.b16 %v2560
        %v2716 = vunpack.c.l.b16 %v2561
        %v2717 = vunpack.c.h.b16 %v2561
        %v2718 = vunpack.c.l.b16 %v2562
        %v2719 = vunpack.c.h.b16 %v2562
        %v2720 = vunpack.c.l.b16 %v2563
        %v2721 = vunpack.c.h.b16 %v2563
        %v2722 = vunpack.c.l.b16 %v2564
        %v2723 = vunpack.c.h.b16 %v2564
        %v2724 = vunpack.c.l.b16 %v2565
        %v2725 = vunpack.c.h.b16 %v2565
        %v2726 = vunpack.c.l.b16 %v2566
        %v2727 = vunpack.c.h.b16 %v2566
        %v2728 = vunpack.c.l.b16 %v2567
        %v2729 = vunpack.c.h.b16 %v2567
        %v2730 = vunpack.c.l.b16 %v2568
        %v2731 = vunpack.c.h.b16 %v2568
        %v2732 = vunpack.c.l.b16 %v2569
        %v2733 = vunpack.c.h.b16 %v2569
        %v2734 = vunpack.c.l.b16 %v2570
        %v2735 = vunpack.c.h.b16 %v2570
        %v2736 = vunpack.c.l.b16 %v2571
        %v2737 = vunpack.c.h.b16 %v2571
        %v2738 = vunpack.c.l.b16 %v2572
        %v2739 = vunpack.c.h.b16 %v2572
        %v2740 = vunpack.c.l.b16 %v2573
        %v2741 = vunpack.c.h.b16 %v2573
        %v2742 = vunpack.c.l.b16 %v2574
        %v2743 = vunpack.c.h.b16 %v2574
        %v2744 = vunpack.c.l.b16 %v2575
        %v2745 = vunpack.c.h.b16 %v2575
        %v2746 = vunpack.c.l.b16 %v2576
        %v2747 = vunpack.c.h.b16 %v2576
        %v2748 = vunpack.c.l.b16 %v2577
        %v2749 = vunpack.c.h.b16 %v2577
        %v2750 = vunpack.c.l.b16 %v2578
        %v2751 = vunpack.c.h.b16 %v2578
        %v2752 = vunpack.c.l.b16 %v2579
        %v2753 = vunpack.c.h.b16 %v2579
        %v2754 = vunpack.c.l.b16 %v2580
        %v2755 = vunpack.c.h.b16 %v2580
        %v2756 = vunpack.c.l.b16 %v2581
        %v2757 = vunpack.c.h.b16 %v2581
        %v2758 = vunpack.c.l.b16 %v2582
        %v2759 = vunpack.c.h.b16 %v2582
        %v2760 = vunpack.c.l.b16 %v2583
        %v2761 = vunpack.c.h.b16 %v2583
        %v2762 = vunpack.c.l.b16 %v2584
        %v2763 = vunpack.c.h.b16 %v2584
        %v2764 = vunpack.c.l.b16 %v2585
        %v2765 = vunpack.c.h.b16 %v2585
        %v2766 = vunpack.c.l.b16 %v2586
        %v2767 = vunpack.c.h.b16 %v2586
        %v2768 = vunpack.c.l.b16 %v2587
        %v2769 = vunpack.c.h.b16 %v2587
        %v2770 = vunpack.c.l.b16 %v2588
        %v2771 = vunpack.c.h.b16 %v2588
        %v2772 = vunpack.c.l.b16 %v2589
        %v2773 = vunpack.c.h.b16 %v2589
        %v2774 = vunpack.c.l.b16 %v2590
        %v2775 = vunpack.c.h.b16 %v2590
        %v2776 = vunpack.c.l.b16 %v2591
        %v2777 = vunpack.c.h.b16 %v2591
        %v2778 = vunpack.c.l.b16 %v2592
        %v2779 = vunpack.c.h.b16 %v2592
        %v2780 = vunpack.c.l.b16 %v2593
        %v2781 = vunpack.c.h.b16 %v2593
        %v2782 = vunpack.c.l.b16 %v2594
        %v2783 = vunpack.c.h.b16 %v2594
        %v2784 = vunpack.c.l.b16 %v2595
        %v2785 = vunpack.c.h.b16 %v2595
        %v2786 = vunpack.c.l.b16 %v2596
        %v2787 = vunpack.c.h.b16 %v2596
        %v2788 = vunpack.c.l.b16 %v2597
        %v2789 = vunpack.c.h.b16 %v2597
        %v2790 = vunpack.c.l.b16 %v2598
        %v2791 = vunpack.c.h.b16 %v2598
        %v2792 = vunpack.c.l.b16 %v2599
        %v2793 = vunpack.c.h.b16 %v2599
        %v2794 = vunpack.c.l.b16 %v2600
        %v2795 = vunpack.c.h.b16 %v2600
        %v2796 = vunpack.c.l.b16 %v2601
        %v2797 = vunpack.c.h.b16 %v2601
        %v2798 = vunpack.c.l.b16 %v2602
        %v2799 = vunpack.c.h.b16 %v2602
        %v2800 = vunpack.c.l.b16 %v2603
        %v2801 = vunpack.c.h.b16 %v2603
        %v2802 = vunpack.c.l.b16 %v2604
        %v2803 = vunpack.c.h.b16 %v2604
        %v2804 = vunpack.c.l.b16 %v2605
        %v2805 = vunpack.c.h.b16 %v2605
        %v2806 = vunpack.c.l.b16 %v2606
        %v2807 = vunpack.c.h.b16 %v2606
        %v2808 = vunpack.c.l.b16 %v2607
        %v2809 = vunpack.c.h.b16 %v2607
        %v2810 = vunpack.c.l.b16 %v2608
        %v2811 = vunpack.c.h.b16 %v2608
        %v2812 = vunpack.c.l.b16 %v2609
        %v2813 = vunpack.c.h.b16 %v2609
        %v2814 = vunpack.c.l.b16 %v2610
        %v2815 = vunpack.c.h.b16 %v2610
        %v2816 = vunpack.c.l.b16 %v2611
        %v2817 = vunpack.c.h.b16 %v2611
        %v2818 = vunpack.c.l.b16 %v2612
        %v2819 = vunpack.c.h.b16 %v2612
        %v2820 = vunpack.c.l.b16 %v2613
        %v2821 = vunpack.c.h.b16 %v2613
        %v2822 = vpack.c.b16 %v2698, %v2694
        %v2823 = vpack.c.b16 %v2699, %v2695
        %v2824 = vpack.c.b16 %v2700, %v2696
        %v2825 = vpack.c.b16 %v2701, %v2697
        %v2826 = vpack.c.b16 %v2706, %v2702
        %v2827 = vpack.c.b16 %v2707, %v2703
        %v2828 = vpack.c.b16 %v2708, %v2704
        %v2829 = vpack.c.b16 %v2709, %v2705
        %v2830 = vpack.c.b16 %v2714, %v2710
        %v2831 = vpack.c.b16 %v2715, %v2711
        %v2832 = vpack.c.b16 %v2716, %v2712
        %v2833 = vpack.c.b16 %v2717, %v2713
        %v2834 = vpack.c.b16 %v2722, %v2718
        %v2835 = vpack.c.b16 %v2723, %v2719
        %v2836 = vpack.c.b16 %v2724, %v2720
        %v2837 = vpack.c.b16 %v2725, %v2721
        %v2838 = vpack.c.b16 %v2730, %v2726
        %v2839 = vpack.c.b16 %v2731, %v2727
        %v2840 = vpack.c.b16 %v2732, %v2728
        %v2841 = vpack.c.b16 %v2733, %v2729
        %v2842 = vpack.c.b16 %v2738, %v2734
        %v2843 = vpack.c.b16 %v2739, %v2735
        %v2844 = vpack.c.b16 %v2740, %v2736
        %v2845 = vpack.c.b16 %v2741, %v2737
        %v2846 = vpack.c.b16 %v2746, %v2742
        %v2847 = vpack.c.b16 %v2747, %v2743
        %v2848 = vpack.c.b16 %v2748, %v2744
        %v2849 = vpack.c.b16 %v2749, %v2745
        %v2850 = vpack.c.b16 %v2754, %v2750
        %v2851 = vpack.c.b16 %v2755, %v2751
        %v2852 = vpack.c.b16 %v2756, %v2752
        %v2853 = vpack.c.b16 %v2757, %v2753
        %v2854 = vpack.c.b16 %v2762, %v2758
        %v2855 = vpack.c.b16 %v2763, %v2759
        %v2856 = vpack.c.b16 %v2764, %v2760
        %v2857 = vpack.c.b16 %v2765, %v2761
        %v2858 = vpack.c.b16 %v2770, %v2766
        %v2859 = vpack.c.b16 %v2771, %v2767
        %v2860 = vpack.c.b16 %v2772, %v2768
        %v2861 = vpack.c.b16 %v2773, %v2769
        %v2862 = vpack.c.b16 %v2778, %v2774
        %v2863 = vpack.c.b16 %v2779, %v2775
        %v2864 = vpack.c.b16 %v2780, %v2776
        %v2865 = vpack.c.b16 %v2781, %v2777
        %v2866 = vpack.c.b16 %v2786, %v2782
        %v2867 = vpack.c.b16 %v2787, %v2783
        %v2868 = vpack.c.b16 %v2788, %v2784
        %v2869 = vpack.c.b16 %v2789, %v2785
        %v2870 = vpack.c.b16 %v2794, %v2790
        %v2871 = vpack.c.b16 %v2795, %v2791
        %v2872 = vpack.c.b16 %v2796, %v2792
        %v2873 = vpack.c.b16 %v2797, %v2793
        %v2874 = vpack.c.b16 %v2802, %v2798
        %v2875 = vpack.c.b16 %v2803, %v2799
        %v2876 = vpack.c.b16 %v2804, %v2800
        %v2877 = vpack.c.b16 %v2805, %v2801
        %v2878 = vpack.c.b16 %v2810, %v2806
        %v2879 = vpack.c.b16 %v2811, %v2807
        %v2880 = vpack.c.b16 %v2812, %v2808
        %v2881 = vpack.c.b16 %v2813, %v2809
        %v2882 = vpack.c.b16 %v2818, %v2814
        %v2883 = vpack.c.b16 %v2819, %v2815
        %v2884 = vpack.c.b16 %v2820, %v2816
        %v2885 = vpack.c.b16 %v2821, %v2817
        %2950 = vmatprep.subr.bf16.mxu0 %v2851
        %2951 = vmatpush1.bf16.msra.mxu0 %v2850
        %2952 = vmatprep.subr.bf16.mxu0 %v2847
        %2953 = vmatpush1.bf16.msra.mxu0 %v2846
        %2954 = vmatprep.subr.bf16.mxu0 %v2843
        %2955 = vmatpush1.bf16.msra.mxu0 %v2842
        %2956 = vmatprep.subr.bf16.mxu0 %v2839
        %2957 = vmatpush1.bf16.msra.mxu0 %v2838
        %2958 = vmatprep.subr.bf16.mxu0 %v2835
        %2959 = vmatpush1.bf16.msra.mxu0 %v2834
        %2960 = vmatprep.subr.bf16.mxu0 %v2831
        %2961 = vmatpush1.bf16.msra.mxu0 %v2830
        %2962 = vmatprep.subr.bf16.mxu0 %v2827
        %2963 = vmatpush1.bf16.msra.mxu0 %v2826
        %2964 = vmatprep.subr.bf16.mxu0 %v2823
        %2965 = vmatpush1.bf16.msra.mxu0 %v2822
        %2966 = vmatprep.subr.bf16.mxu0 %v2883
        %2967 = vmatpush2.bf16.msra.mxu0 %v2882
        %2968 = vmatprep.subr.bf16.mxu0 %v2879
        %2969 = vmatpush2.bf16.msra.mxu0 %v2878
        %2970 = vmatprep.subr.bf16.mxu0 %v2875
        %2971 = vmatpush2.bf16.msra.mxu0 %v2874
        %2972 = vmatprep.subr.bf16.mxu0 %v2871
        %2973 = vmatpush2.bf16.msra.mxu0 %v2870
        %2974 = vmatprep.subr.bf16.mxu0 %v2867
        %2975 = vmatpush2.bf16.msra.mxu0 %v2866
        %2976 = vmatprep.subr.bf16.mxu0 %v2863
        %2977 = vmatpush2.bf16.msra.mxu0 %v2862
        %2978 = vmatprep.subr.bf16.mxu0 %v2859
        %2979 = vmatpush2.bf16.msra.mxu0 %v2858
        %2980 = vmatprep.subr.bf16.mxu0 %v2855
        %2981 = vmatpush2.bf16.msra.mxu0 %v2854
        %2982 = vmatprep.mubr.bf16.mxu0 %v2543
        %2983 = vmatmul.mubr.bf16.gmra.mxu0 %v2542
        %v2984 = vpop.f32.mrf.mxu0
        %v2985 = vadd.f32 %v2617, %v2984
        %v2986 = vpop.f32.mrf.mxu0
        %v2987 = vadd.f32 %v2621, %v2986
        %v2988 = vpop.f32.mrf.mxu0
        %v2989 = vadd.f32 %v2617, %v2988
        %v2990 = vpop.f32.mrf.mxu0
        %v2991 = vadd.f32 %v2621, %v2990
        %2992 = vmatprep.mubr.bf16.mxu0 %v2545
        %2993 = vmatmul.mubr.bf16.gmra.mxu0 %v2544
        %v2994 = vpop.f32.mrf.mxu0
        %v2995 = vadd.f32 %v2617, %v2994
        %v2996 = vpop.f32.mrf.mxu0
        %v2997 = vadd.f32 %v2621, %v2996
        %v2998 = vpop.f32.mrf.mxu0
        %v2999 = vadd.f32 %v2617, %v2998
        %v3000 = vpop.f32.mrf.mxu0
        %v3001 = vadd.f32 %v2621, %v3000
        %3002 = vmatprep.mubr.bf16.mxu0 %v2547
        %3003 = vmatmul.mubr.bf16.gmra.mxu0 %v2546
        %v3004 = vpop.f32.mrf.mxu0
        %v3005 = vadd.f32 %v2617, %v3004
        %v3006 = vpop.f32.mrf.mxu0
        %v3007 = vadd.f32 %v2621, %v3006
        %v3008 = vpop.f32.mrf.mxu0
        %v3009 = vadd.f32 %v2617, %v3008
        %v3010 = vpop.f32.mrf.mxu0
        %v3011 = vadd.f32 %v2621, %v3010
        %3012 = vmatprep.mubr.bf16.mxu0 %v2549
        %3013 = vmatmul.mubr.bf16.gmra.mxu0 %v2548
        %v3014 = vpop.f32.mrf.mxu0
        %v3015 = vadd.f32 %v2617, %v3014
        %v3016 = vpop.f32.mrf.mxu0
        %v3017 = vadd.f32 %v2621, %v3016
        %v3018 = vpop.f32.mrf.mxu0
        %v3019 = vadd.f32 %v2617, %v3018
        %v3020 = vpop.f32.mrf.mxu0
        %v3021 = vadd.f32 %v2621, %v3020
        %3022 = vdwg.mxu0
        %3023 = vmatprep.subr.bf16.mxu0 %v2853
        %3024 = vmatpush1.bf16.msra.mxu0 %v2852
        %3025 = vmatprep.subr.bf16.mxu0 %v2849
        %3026 = vmatpush1.bf16.msra.mxu0 %v2848
        %3027 = vmatprep.subr.bf16.mxu0 %v2845
        %3028 = vmatpush1.bf16.msra.mxu0 %v2844
        %3029 = vmatprep.subr.bf16.mxu0 %v2841
        %3030 = vmatpush1.bf16.msra.mxu0 %v2840
        %3031 = vmatprep.subr.bf16.mxu0 %v2837
        %3032 = vmatpush1.bf16.msra.mxu0 %v2836
        %3033 = vmatprep.subr.bf16.mxu0 %v2833
        %3034 = vmatpush1.bf16.msra.mxu0 %v2832
        %3035 = vmatprep.subr.bf16.mxu0 %v2829
        %3036 = vmatpush1.bf16.msra.mxu0 %v2828
        %3037 = vmatprep.subr.bf16.mxu0 %v2825
        %3038 = vmatpush1.bf16.msra.mxu0 %v2824
        %3039 = vmatprep.subr.bf16.mxu0 %v2885
        %3040 = vmatpush2.bf16.msra.mxu0 %v2884
        %3041 = vmatprep.subr.bf16.mxu0 %v2881
        %3042 = vmatpush2.bf16.msra.mxu0 %v2880
        %3043 = vmatprep.subr.bf16.mxu0 %v2877
        %3044 = vmatpush2.bf16.msra.mxu0 %v2876
        %3045 = vmatprep.subr.bf16.mxu0 %v2873
        %3046 = vmatpush2.bf16.msra.mxu0 %v2872
        %3047 = vmatprep.subr.bf16.mxu0 %v2869
        %3048 = vmatpush2.bf16.msra.mxu0 %v2868
        %3049 = vmatprep.subr.bf16.mxu0 %v2865
        %3050 = vmatpush2.bf16.msra.mxu0 %v2864
        %3051 = vmatprep.subr.bf16.mxu0 %v2861
        %3052 = vmatpush2.bf16.msra.mxu0 %v2860
        %3053 = vmatprep.subr.bf16.mxu0 %v2857
        %3054 = vmatpush2.bf16.msra.mxu0 %v2856
        %3055 = vmatprep.mubr.bf16.mxu0 %v2543
        %3056 = vmatmul.mubr.bf16.gmra.mxu0 %v2542
        %v3057 = vpop.f32.mrf.mxu0
        %v3058 = vadd.f32 %v2625, %v3057
        %v3059 = vpop.f32.mrf.mxu0
        %v3060 = vadd.f32 %v2629, %v3059
        %v3061 = vpop.f32.mrf.mxu0
        %v3062 = vadd.f32 %v2625, %v3061
        %v3063 = vpop.f32.mrf.mxu0
        %v3064 = vadd.f32 %v2629, %v3063
        %3065 = vmatprep.mubr.bf16.mxu0 %v2545
        %3066 = vmatmul.mubr.bf16.gmra.mxu0 %v2544
        %v3067 = vpop.f32.mrf.mxu0
        %v3068 = vadd.f32 %v2625, %v3067
        %v3069 = vpop.f32.mrf.mxu0
        %v3070 = vadd.f32 %v2629, %v3069
        %v3071 = vpop.f32.mrf.mxu0
        %v3072 = vadd.f32 %v2625, %v3071
        %v3073 = vpop.f32.mrf.mxu0
        %v3074 = vadd.f32 %v2629, %v3073
        %3075 = vmatprep.mubr.bf16.mxu0 %v2547
        %3076 = vmatmul.mubr.bf16.gmra.mxu0 %v2546
        %v3077 = vpop.f32.mrf.mxu0
        %v3078 = vadd.f32 %v2625, %v3077
        %v3079 = vpop.f32.mrf.mxu0
        %v3080 = vadd.f32 %v2629, %v3079
        %v3081 = vpop.f32.mrf.mxu0
        %v3082 = vadd.f32 %v2625, %v3081
        %v3083 = vpop.f32.mrf.mxu0
        %v3084 = vadd.f32 %v2629, %v3083
        %3085 = vmatprep.mubr.bf16.mxu0 %v2549
        %3086 = vmatmul.mubr.bf16.gmra.mxu0 %v2548
        %v3087 = vpop.f32.mrf.mxu0
        %v3088 = vadd.f32 %v2625, %v3087
        %v3089 = vpop.f32.mrf.mxu0
        %v3090 = vadd.f32 %v2629, %v3089
        %v3091 = vpop.f32.mrf.mxu0
        %v3092 = vadd.f32 %v2625, %v3091
        %v3093 = vpop.f32.mrf.mxu0
        %v3094 = vadd.f32 %v2629, %v3093
        %3095 = vdwg.mxu0
        %v3096 = vmax.f32 %v2985, 0.0
        %v3097 = vmax.f32 %v2987, 0.0
        %v3098 = vmax.f32 %v3058, 0.0
        %v3099 = vmax.f32 %v3060, 0.0
        %v3100 = vmax.f32 %v2989, 0.0
        %v3101 = vmax.f32 %v2991, 0.0
        %v3102 = vmax.f32 %v3062, 0.0
        %v3103 = vmax.f32 %v3064, 0.0
        %v3104 = vmax.f32 %v2995, 0.0
        %v3105 = vmax.f32 %v2997, 0.0
        %v3106 = vmax.f32 %v3068, 0.0
        %v3107 = vmax.f32 %v3070, 0.0
        %v3108 = vmax.f32 %v2999, 0.0
        %v3109 = vmax.f32 %v3001, 0.0
        %v3110 = vmax.f32 %v3072, 0.0
        %v3111 = vmax.f32 %v3074, 0.0
        %v3112 = vmax.f32 %v3005, 0.0
        %v3113 = vmax.f32 %v3007, 0.0
        %v3114 = vmax.f32 %v3078, 0.0
        %v3115 = vmax.f32 %v3080, 0.0
        %v3116 = vmax.f32 %v3009, 0.0
        %v3117 = vmax.f32 %v3011, 0.0
        %v3118 = vmax.f32 %v3082, 0.0
        %v3119 = vmax.f32 %v3084, 0.0
        %v3120 = vmax.f32 %v3015, 0.0
        %v3121 = vmax.f32 %v3017, 0.0
        %v3122 = vmax.f32 %v3088, 0.0
        %v3123 = vmax.f32 %v3090, 0.0
        %v3124 = vmax.f32 %v3019, 0.0
        %v3125 = vmax.f32 %v3021, 0.0
        %v3126 = vmax.f32 %v3092, 0.0
        %v3127 = vmax.f32 %v3094, 0.0
        %v3128 = vpack.c.bf16 %v3100, %v3096
        %v3129 = vpack.c.bf16 %v3101, %v3097
        %v3130 = vpack.c.bf16 %v3102, %v3098
        %v3131 = vpack.c.bf16 %v3103, %v3099
        %v3132 = vpack.c.bf16 %v3108, %v3104
        %v3133 = vpack.c.bf16 %v3109, %v3105
        %v3134 = vpack.c.bf16 %v3110, %v3106
        %v3135 = vpack.c.bf16 %v3111, %v3107
        %v3136 = vpack.c.bf16 %v3116, %v3112
        %v3137 = vpack.c.bf16 %v3117, %v3113
        %v3138 = vpack.c.bf16 %v3118, %v3114
        %v3139 = vpack.c.bf16 %v3119, %v3115
        %v3140 = vpack.c.bf16 %v3124, %v3120
        %v3141 = vpack.c.bf16 %v3125, %v3121
        %v3142 = vpack.c.bf16 %v3126, %v3122
        %v3143 = vpack.c.bf16 %v3127, %v3123
        %v3144 = vld [vmem:[%s418] sm:$0xff]
        %v3145 = vld [vmem:[%s418 + $0x8] sm:$0xff]
        %v3146 = vld [vmem:[%s418 + $0x10] sm:$0xff]
        %v3147 = vld [vmem:[%s418 + $0x18] sm:$0xff]
        %v3148 = vld [vmem:[%s418 + $0x20] sm:$0xff]
        %v3149 = vld [vmem:[%s418 + $0x28] sm:$0xff]
        %v3150 = vld [vmem:[%s418 + $0x30] sm:$0xff]
        %v3151 = vld [vmem:[%s418 + $0x38] sm:$0xff]
        %v3152 = vld [vmem:[%s418 + $0x40] sm:$0xff]
        %v3153 = vld [vmem:[%s418 + $0x48] sm:$0xff]
        %v3154 = vld [vmem:[%s418 + $0x50] sm:$0xff]
        %v3155 = vld [vmem:[%s418 + $0x58] sm:$0xff]
        %v3156 = vld [vmem:[%s418 + $0x60] sm:$0xff]
        %v3157 = vld [vmem:[%s418 + $0x68] sm:$0xff]
        %v3158 = vld [vmem:[%s418 + $0x70] sm:$0xff]
        %v3159 = vld [vmem:[%s418 + $0x78] sm:$0xff]
        %v3160 = vld [vmem:[%s418 + $0x80] sm:$0xff]
        %v3161 = vld [vmem:[%s418 + $0x88] sm:$0xff]
        %v3162 = vld [vmem:[%s418 + $0x90] sm:$0xff]
        %v3163 = vld [vmem:[%s418 + $0x98] sm:$0xff]
        %v3164 = vld [vmem:[%s418 + $0xa0] sm:$0xff]
        %v3165 = vld [vmem:[%s418 + $0xa8] sm:$0xff]
        %v3166 = vld [vmem:[%s418 + $0xb0] sm:$0xff]
        %v3167 = vld [vmem:[%s418 + $0xb8] sm:$0xff]
        %v3168 = vld [vmem:[%s418 + $0xc0] sm:$0xff]
        %v3169 = vld [vmem:[%s418 + $0xc8] sm:$0xff]
        %v3170 = vld [vmem:[%s418 + $0xd0] sm:$0xff]
        %v3171 = vld [vmem:[%s418 + $0xd8] sm:$0xff]
        %v3172 = vld [vmem:[%s418 + $0xe0] sm:$0xff]
        %v3173 = vld [vmem:[%s418 + $0xe8] sm:$0xff]
        %v3174 = vld [vmem:[%s418 + $0xf0] sm:$0xff]
        %v3175 = vld [vmem:[%s418 + $0xf8] sm:$0xff]
        %v3176 = vld [vmem:[%s418 + $0x100] sm:$0xff]
        %v3177 = vld [vmem:[%s418 + $0x108] sm:$0xff]
        %v3178 = vld [vmem:[%s418 + $0x110] sm:$0xff]
        %v3179 = vld [vmem:[%s418 + $0x118] sm:$0xff]
        %v3180 = vld [vmem:[%s418 + $0x120] sm:$0xff]
        %v3181 = vld [vmem:[%s418 + $0x128] sm:$0xff]
        %v3182 = vld [vmem:[%s418 + $0x130] sm:$0xff]
        %v3183 = vld [vmem:[%s418 + $0x138] sm:$0xff]
        %v3184 = vld [vmem:[%s418 + $0x140] sm:$0xff]
        %v3185 = vld [vmem:[%s418 + $0x148] sm:$0xff]
        %v3186 = vld [vmem:[%s418 + $0x150] sm:$0xff]
        %v3187 = vld [vmem:[%s418 + $0x158] sm:$0xff]
        %v3188 = vld [vmem:[%s418 + $0x160] sm:$0xff]
        %v3189 = vld [vmem:[%s418 + $0x168] sm:$0xff]
        %v3190 = vld [vmem:[%s418 + $0x170] sm:$0xff]
        %v3191 = vld [vmem:[%s418 + $0x178] sm:$0xff]
        %v3192 = vld [vmem:[%s418 + $0x180] sm:$0xff]
        %v3193 = vld [vmem:[%s418 + $0x188] sm:$0xff]
        %v3194 = vld [vmem:[%s418 + $0x190] sm:$0xff]
        %v3195 = vld [vmem:[%s418 + $0x198] sm:$0xff]
        %v3196 = vld [vmem:[%s418 + $0x1a0] sm:$0xff]
        %v3197 = vld [vmem:[%s418 + $0x1a8] sm:$0xff]
        %v3198 = vld [vmem:[%s418 + $0x1b0] sm:$0xff]
        %v3199 = vld [vmem:[%s418 + $0x1b8] sm:$0xff]
        %v3200 = vld [vmem:[%s418 + $0x1c0] sm:$0xff]
        %v3201 = vld [vmem:[%s418 + $0x1c8] sm:$0xff]
        %v3202 = vld [vmem:[%s418 + $0x1d0] sm:$0xff]
        %v3203 = vld [vmem:[%s418 + $0x1d8] sm:$0xff]
        %v3204 = vld [vmem:[%s418 + $0x1e0] sm:$0xff]
        %v3205 = vld [vmem:[%s418 + $0x1e8] sm:$0xff]
        %v3206 = vld [vmem:[%s418 + $0x1f0] sm:$0xff]
        %v3207 = vld [vmem:[%s418 + $0x1f8] sm:$0xff]
        %v3208 = vlaneseq
        %v3209 = vshrl.u32 %v3208, 7
        %v3210 = vsub.s32 6, %v3209
        %v3211 = vrot.slane %v554, %v3210
        %v3212 = vlaneseq
        %v3213 = vshrl.u32 %v3212, 7
        %v3214 = vsub.s32 6, %v3213
        %v3215 = vrot.slane %v555, %v3214
        %v3280 = vunpack.c.l.b16 %v3144
        %v3281 = vunpack.c.h.b16 %v3144
        %v3282 = vunpack.c.l.b16 %v3145
        %v3283 = vunpack.c.h.b16 %v3145
        %v3284 = vunpack.c.l.b16 %v3146
        %v3285 = vunpack.c.h.b16 %v3146
        %v3286 = vunpack.c.l.b16 %v3147
        %v3287 = vunpack.c.h.b16 %v3147
        %v3288 = vunpack.c.l.b16 %v3148
        %v3289 = vunpack.c.h.b16 %v3148
        %v3290 = vunpack.c.l.b16 %v3149
        %v3291 = vunpack.c.h.b16 %v3149
        %v3292 = vunpack.c.l.b16 %v3150
        %v3293 = vunpack.c.h.b16 %v3150
        %v3294 = vunpack.c.l.b16 %v3151
        %v3295 = vunpack.c.h.b16 %v3151
        %v3296 = vunpack.c.l.b16 %v3152
        %v3297 = vunpack.c.h.b16 %v3152
        %v3298 = vunpack.c.l.b16 %v3153
        %v3299 = vunpack.c.h.b16 %v3153
        %v3300 = vunpack.c.l.b16 %v3154
        %v3301 = vunpack.c.h.b16 %v3154
        %v3302 = vunpack.c.l.b16 %v3155
        %v3303 = vunpack.c.h.b16 %v3155
        %v3304 = vunpack.c.l.b16 %v3156
        %v3305 = vunpack.c.h.b16 %v3156
        %v3306 = vunpack.c.l.b16 %v3157
        %v3307 = vunpack.c.h.b16 %v3157
        %v3308 = vunpack.c.l.b16 %v3158
        %v3309 = vunpack.c.h.b16 %v3158
        %v3310 = vunpack.c.l.b16 %v3159
        %v3311 = vunpack.c.h.b16 %v3159
        %v3312 = vunpack.c.l.b16 %v3160
        %v3313 = vunpack.c.h.b16 %v3160
        %v3314 = vunpack.c.l.b16 %v3161
        %v3315 = vunpack.c.h.b16 %v3161
        %v3316 = vunpack.c.l.b16 %v3162
        %v3317 = vunpack.c.h.b16 %v3162
        %v3318 = vunpack.c.l.b16 %v3163
        %v3319 = vunpack.c.h.b16 %v3163
        %v3320 = vunpack.c.l.b16 %v3164
        %v3321 = vunpack.c.h.b16 %v3164
        %v3322 = vunpack.c.l.b16 %v3165
        %v3323 = vunpack.c.h.b16 %v3165
        %v3324 = vunpack.c.l.b16 %v3166
        %v3325 = vunpack.c.h.b16 %v3166
        %v3326 = vunpack.c.l.b16 %v3167
        %v3327 = vunpack.c.h.b16 %v3167
        %v3328 = vunpack.c.l.b16 %v3168
        %v3329 = vunpack.c.h.b16 %v3168
        %v3330 = vunpack.c.l.b16 %v3169
        %v3331 = vunpack.c.h.b16 %v3169
        %v3332 = vunpack.c.l.b16 %v3170
        %v3333 = vunpack.c.h.b16 %v3170
        %v3334 = vunpack.c.l.b16 %v3171
        %v3335 = vunpack.c.h.b16 %v3171
        %v3336 = vunpack.c.l.b16 %v3172
        %v3337 = vunpack.c.h.b16 %v3172
        %v3338 = vunpack.c.l.b16 %v3173
        %v3339 = vunpack.c.h.b16 %v3173
        %v3340 = vunpack.c.l.b16 %v3174
        %v3341 = vunpack.c.h.b16 %v3174
        %v3342 = vunpack.c.l.b16 %v3175
        %v3343 = vunpack.c.h.b16 %v3175
        %v3344 = vunpack.c.l.b16 %v3176
        %v3345 = vunpack.c.h.b16 %v3176
        %v3346 = vunpack.c.l.b16 %v3177
        %v3347 = vunpack.c.h.b16 %v3177
        %v3348 = vunpack.c.l.b16 %v3178
        %v3349 = vunpack.c.h.b16 %v3178
        %v3350 = vunpack.c.l.b16 %v3179
        %v3351 = vunpack.c.h.b16 %v3179
        %v3352 = vunpack.c.l.b16 %v3180
        %v3353 = vunpack.c.h.b16 %v3180
        %v3354 = vunpack.c.l.b16 %v3181
        %v3355 = vunpack.c.h.b16 %v3181
        %v3356 = vunpack.c.l.b16 %v3182
        %v3357 = vunpack.c.h.b16 %v3182
        %v3358 = vunpack.c.l.b16 %v3183
        %v3359 = vunpack.c.h.b16 %v3183
        %v3360 = vunpack.c.l.b16 %v3184
        %v3361 = vunpack.c.h.b16 %v3184
        %v3362 = vunpack.c.l.b16 %v3185
        %v3363 = vunpack.c.h.b16 %v3185
        %v3364 = vunpack.c.l.b16 %v3186
        %v3365 = vunpack.c.h.b16 %v3186
        %v3366 = vunpack.c.l.b16 %v3187
        %v3367 = vunpack.c.h.b16 %v3187
        %v3368 = vunpack.c.l.b16 %v3188
        %v3369 = vunpack.c.h.b16 %v3188
        %v3370 = vunpack.c.l.b16 %v3189
        %v3371 = vunpack.c.h.b16 %v3189
        %v3372 = vunpack.c.l.b16 %v3190
        %v3373 = vunpack.c.h.b16 %v3190
        %v3374 = vunpack.c.l.b16 %v3191
        %v3375 = vunpack.c.h.b16 %v3191
        %v3376 = vunpack.c.l.b16 %v3192
        %v3377 = vunpack.c.h.b16 %v3192
        %v3378 = vunpack.c.l.b16 %v3193
        %v3379 = vunpack.c.h.b16 %v3193
        %v3380 = vunpack.c.l.b16 %v3194
        %v3381 = vunpack.c.h.b16 %v3194
        %v3382 = vunpack.c.l.b16 %v3195
        %v3383 = vunpack.c.h.b16 %v3195
        %v3384 = vunpack.c.l.b16 %v3196
        %v3385 = vunpack.c.h.b16 %v3196
        %v3386 = vunpack.c.l.b16 %v3197
        %v3387 = vunpack.c.h.b16 %v3197
        %v3388 = vunpack.c.l.b16 %v3198
        %v3389 = vunpack.c.h.b16 %v3198
        %v3390 = vunpack.c.l.b16 %v3199
        %v3391 = vunpack.c.h.b16 %v3199
        %v3392 = vunpack.c.l.b16 %v3200
        %v3393 = vunpack.c.h.b16 %v3200
        %v3394 = vunpack.c.l.b16 %v3201
        %v3395 = vunpack.c.h.b16 %v3201
        %v3396 = vunpack.c.l.b16 %v3202
        %v3397 = vunpack.c.h.b16 %v3202
        %v3398 = vunpack.c.l.b16 %v3203
        %v3399 = vunpack.c.h.b16 %v3203
        %v3400 = vunpack.c.l.b16 %v3204
        %v3401 = vunpack.c.h.b16 %v3204
        %v3402 = vunpack.c.l.b16 %v3205
        %v3403 = vunpack.c.h.b16 %v3205
        %v3404 = vunpack.c.l.b16 %v3206
        %v3405 = vunpack.c.h.b16 %v3206
        %v3406 = vunpack.c.l.b16 %v3207
        %v3407 = vunpack.c.h.b16 %v3207
        %v3408 = vpack.c.b16 %v3282, %v3280
        %v3409 = vpack.c.b16 %v3283, %v3281
        %v3410 = vpack.c.b16 %v3286, %v3284
        %v3411 = vpack.c.b16 %v3287, %v3285
        %v3412 = vpack.c.b16 %v3290, %v3288
        %v3413 = vpack.c.b16 %v3291, %v3289
        %v3414 = vpack.c.b16 %v3294, %v3292
        %v3415 = vpack.c.b16 %v3295, %v3293
        %v3416 = vpack.c.b16 %v3298, %v3296
        %v3417 = vpack.c.b16 %v3299, %v3297
        %v3418 = vpack.c.b16 %v3302, %v3300
        %v3419 = vpack.c.b16 %v3303, %v3301
        %v3420 = vpack.c.b16 %v3306, %v3304
        %v3421 = vpack.c.b16 %v3307, %v3305
        %v3422 = vpack.c.b16 %v3310, %v3308
        %v3423 = vpack.c.b16 %v3311, %v3309
        %v3424 = vpack.c.b16 %v3314, %v3312
        %v3425 = vpack.c.b16 %v3315, %v3313
        %v3426 = vpack.c.b16 %v3318, %v3316
        %v3427 = vpack.c.b16 %v3319, %v3317
        %v3428 = vpack.c.b16 %v3322, %v3320
        %v3429 = vpack.c.b16 %v3323, %v3321
        %v3430 = vpack.c.b16 %v3326, %v3324
        %v3431 = vpack.c.b16 %v3327, %v3325
        %v3432 = vpack.c.b16 %v3330, %v3328
        %v3433 = vpack.c.b16 %v3331, %v3329
        %v3434 = vpack.c.b16 %v3334, %v3332
        %v3435 = vpack.c.b16 %v3335, %v3333
        %v3436 = vpack.c.b16 %v3338, %v3336
        %v3437 = vpack.c.b16 %v3339, %v3337
        %v3438 = vpack.c.b16 %v3342, %v3340
        %v3439 = vpack.c.b16 %v3343, %v3341
        %v3440 = vpack.c.b16 %v3346, %v3344
        %v3441 = vpack.c.b16 %v3347, %v3345
        %v3442 = vpack.c.b16 %v3350, %v3348
        %v3443 = vpack.c.b16 %v3351, %v3349
        %v3444 = vpack.c.b16 %v3354, %v3352
        %v3445 = vpack.c.b16 %v3355, %v3353
        %v3446 = vpack.c.b16 %v3358, %v3356
        %v3447 = vpack.c.b16 %v3359, %v3357
        %v3448 = vpack.c.b16 %v3362, %v3360
        %v3449 = vpack.c.b16 %v3363, %v3361
        %v3450 = vpack.c.b16 %v3366, %v3364
        %v3451 = vpack.c.b16 %v3367, %v3365
        %v3452 = vpack.c.b16 %v3370, %v3368
        %v3453 = vpack.c.b16 %v3371, %v3369
        %v3454 = vpack.c.b16 %v3374, %v3372
        %v3455 = vpack.c.b16 %v3375, %v3373
        %v3456 = vpack.c.b16 %v3378, %v3376
        %v3457 = vpack.c.b16 %v3379, %v3377
        %v3458 = vpack.c.b16 %v3382, %v3380
        %v3459 = vpack.c.b16 %v3383, %v3381
        %v3460 = vpack.c.b16 %v3386, %v3384
        %v3461 = vpack.c.b16 %v3387, %v3385
        %v3462 = vpack.c.b16 %v3390, %v3388
        %v3463 = vpack.c.b16 %v3391, %v3389
        %v3464 = vpack.c.b16 %v3394, %v3392
        %v3465 = vpack.c.b16 %v3395, %v3393
        %v3466 = vpack.c.b16 %v3398, %v3396
        %v3467 = vpack.c.b16 %v3399, %v3397
        %v3468 = vpack.c.b16 %v3402, %v3400
        %v3469 = vpack.c.b16 %v3403, %v3401
        %v3470 = vpack.c.b16 %v3406, %v3404
        %v3471 = vpack.c.b16 %v3407, %v3405
        %3536 = vmatprep.subr.bf16.mxu0 %v3423
        %3537 = vmatpush1.bf16.msra.mxu0 %v3422
        %3538 = vmatprep.subr.bf16.mxu0 %v3421
        %3539 = vmatpush1.bf16.msra.mxu0 %v3420
        %3540 = vmatprep.subr.bf16.mxu0 %v3419
        %3541 = vmatpush1.bf16.msra.mxu0 %v3418
        %3542 = vmatprep.subr.bf16.mxu0 %v3417
        %3543 = vmatpush1.bf16.msra.mxu0 %v3416
        %3544 = vmatprep.subr.bf16.mxu0 %v3415
        %3545 = vmatpush1.bf16.msra.mxu0 %v3414
        %3546 = vmatprep.subr.bf16.mxu0 %v3413
        %3547 = vmatpush1.bf16.msra.mxu0 %v3412
        %3548 = vmatprep.subr.bf16.mxu0 %v3411
        %3549 = vmatpush1.bf16.msra.mxu0 %v3410
        %3550 = vmatprep.subr.bf16.mxu0 %v3409
        %3551 = vmatpush1.bf16.msra.mxu0 %v3408
        %3552 = vmatprep.subr.bf16.mxu0 %v3439
        %3553 = vmatpush2.bf16.msra.mxu0 %v3438
        %3554 = vmatprep.subr.bf16.mxu0 %v3437
        %3555 = vmatpush2.bf16.msra.mxu0 %v3436
        %3556 = vmatprep.subr.bf16.mxu0 %v3435
        %3557 = vmatpush2.bf16.msra.mxu0 %v3434
        %3558 = vmatprep.subr.bf16.mxu0 %v3433
        %3559 = vmatpush2.bf16.msra.mxu0 %v3432
        %3560 = vmatprep.subr.bf16.mxu0 %v3431
        %3561 = vmatpush2.bf16.msra.mxu0 %v3430
        %3562 = vmatprep.subr.bf16.mxu0 %v3429
        %3563 = vmatpush2.bf16.msra.mxu0 %v3428
        %3564 = vmatprep.subr.bf16.mxu0 %v3427
        %3565 = vmatpush2.bf16.msra.mxu0 %v3426
        %3566 = vmatprep.subr.bf16.mxu0 %v3425
        %3567 = vmatpush2.bf16.msra.mxu0 %v3424
        %3568 = vmatprep.mubr.bf16.mxu0 %v3129
        %3569 = vmatmul.mubr.bf16.gmra.mxu0 %v3128
        %v3570 = vpop.f32.mrf.mxu0
        %v3571 = vadd.f32 %v3211, %v3570
        %v3572 = vpop.f32.mrf.mxu0
        %v3573 = vadd.f32 %v3215, %v3572
        %v3574 = vpop.f32.mrf.mxu0
        %v3575 = vadd.f32 %v3211, %v3574
        %v3576 = vpop.f32.mrf.mxu0
        %v3577 = vadd.f32 %v3215, %v3576
        %3578 = vmatprep.mubr.bf16.mxu0 %v3133
        %3579 = vmatmul.mubr.bf16.gmra.mxu0 %v3132
        %v3580 = vpop.f32.mrf.mxu0
        %v3581 = vadd.f32 %v3211, %v3580
        %v3582 = vpop.f32.mrf.mxu0
        %v3583 = vadd.f32 %v3215, %v3582
        %v3584 = vpop.f32.mrf.mxu0
        %v3585 = vadd.f32 %v3211, %v3584
        %v3586 = vpop.f32.mrf.mxu0
        %v3587 = vadd.f32 %v3215, %v3586
        %3588 = vmatprep.mubr.bf16.mxu0 %v3137
        %3589 = vmatmul.mubr.bf16.gmra.mxu0 %v3136
        %v3590 = vpop.f32.mrf.mxu0
        %v3591 = vadd.f32 %v3211, %v3590
        %v3592 = vpop.f32.mrf.mxu0
        %v3593 = vadd.f32 %v3215, %v3592
        %v3594 = vpop.f32.mrf.mxu0
        %v3595 = vadd.f32 %v3211, %v3594
        %v3596 = vpop.f32.mrf.mxu0
        %v3597 = vadd.f32 %v3215, %v3596
        %3598 = vmatprep.mubr.bf16.mxu0 %v3141
        %3599 = vmatmul.mubr.bf16.gmra.mxu0 %v3140
        %v3600 = vpop.f32.mrf.mxu0
        %v3601 = vadd.f32 %v3211, %v3600
        %v3602 = vpop.f32.mrf.mxu0
        %v3603 = vadd.f32 %v3215, %v3602
        %v3604 = vpop.f32.mrf.mxu0
        %v3605 = vadd.f32 %v3211, %v3604
        %v3606 = vpop.f32.mrf.mxu0
        %v3607 = vadd.f32 %v3215, %v3606
        %3608 = vdwg.mxu0
        %3609 = vmatprep.subr.bf16.mxu0 %v3455
        %3610 = vmatpush1.bf16.msra.mxu0 %v3454
        %3611 = vmatprep.subr.bf16.mxu0 %v3453
        %3612 = vmatpush1.bf16.msra.mxu0 %v3452
        %3613 = vmatprep.subr.bf16.mxu0 %v3451
        %3614 = vmatpush1.bf16.msra.mxu0 %v3450
        %3615 = vmatprep.subr.bf16.mxu0 %v3449
        %3616 = vmatpush1.bf16.msra.mxu0 %v3448
        %3617 = vmatprep.subr.bf16.mxu0 %v3447
        %3618 = vmatpush1.bf16.msra.mxu0 %v3446
        %3619 = vmatprep.subr.bf16.mxu0 %v3445
        %3620 = vmatpush1.bf16.msra.mxu0 %v3444
        %3621 = vmatprep.subr.bf16.mxu0 %v3443
        %3622 = vmatpush1.bf16.msra.mxu0 %v3442
        %3623 = vmatprep.subr.bf16.mxu0 %v3441
        %3624 = vmatpush1.bf16.msra.mxu0 %v3440
        %3625 = vmatprep.subr.bf16.mxu0 %v3471
        %3626 = vmatpush2.bf16.msra.mxu0 %v3470
        %3627 = vmatprep.subr.bf16.mxu0 %v3469
        %3628 = vmatpush2.bf16.msra.mxu0 %v3468
        %3629 = vmatprep.subr.bf16.mxu0 %v3467
        %3630 = vmatpush2.bf16.msra.mxu0 %v3466
        %3631 = vmatprep.subr.bf16.mxu0 %v3465
        %3632 = vmatpush2.bf16.msra.mxu0 %v3464
        %3633 = vmatprep.subr.bf16.mxu0 %v3463
        %3634 = vmatpush2.bf16.msra.mxu0 %v3462
        %3635 = vmatprep.subr.bf16.mxu0 %v3461
        %3636 = vmatpush2.bf16.msra.mxu0 %v3460
        %3637 = vmatprep.subr.bf16.mxu0 %v3459
        %3638 = vmatpush2.bf16.msra.mxu0 %v3458
        %3639 = vmatprep.subr.bf16.mxu0 %v3457
        %3640 = vmatpush2.bf16.msra.mxu0 %v3456
        %3641 = vmatprep.mubr.bf16.mxu0 %v3131
        %3642 = vmatmul.mubr.bf16.gmra.mxu0 %v3130
        %v3643 = vpop.f32.mrf.mxu0
        %v3644 = vadd.f32 %v3571, %v3643
        %v3645 = vpop.f32.mrf.mxu0
        %v3646 = vadd.f32 %v3573, %v3645
        %v3647 = vpop.f32.mrf.mxu0
        %v3648 = vadd.f32 %v3575, %v3647
        %v3649 = vpop.f32.mrf.mxu0
        %v3650 = vadd.f32 %v3577, %v3649
        %3651 = vmatprep.mubr.bf16.mxu0 %v3135
        %3652 = vmatmul.mubr.bf16.gmra.mxu0 %v3134
        %v3653 = vpop.f32.mrf.mxu0
        %v3654 = vadd.f32 %v3581, %v3653
        %v3655 = vpop.f32.mrf.mxu0
        %v3656 = vadd.f32 %v3583, %v3655
        %v3657 = vpop.f32.mrf.mxu0
        %v3658 = vadd.f32 %v3585, %v3657
        %v3659 = vpop.f32.mrf.mxu0
        %v3660 = vadd.f32 %v3587, %v3659
        %3661 = vmatprep.mubr.bf16.mxu0 %v3139
        %3662 = vmatmul.mubr.bf16.gmra.mxu0 %v3138
        %v3663 = vpop.f32.mrf.mxu0
        %v3664 = vadd.f32 %v3591, %v3663
        %v3665 = vpop.f32.mrf.mxu0
        %v3666 = vadd.f32 %v3593, %v3665
        %v3667 = vpop.f32.mrf.mxu0
        %v3668 = vadd.f32 %v3595, %v3667
        %v3669 = vpop.f32.mrf.mxu0
        %v3670 = vadd.f32 %v3597, %v3669
        %3671 = vmatprep.mubr.bf16.mxu0 %v3143
        %3672 = vmatmul.mubr.bf16.gmra.mxu0 %v3142
        %v3673 = vpop.f32.mrf.mxu0
        %v3674 = vadd.f32 %v3601, %v3673
        %v3675 = vpop.f32.mrf.mxu0
        %v3676 = vadd.f32 %v3603, %v3675
        %v3677 = vpop.f32.mrf.mxu0
        %v3678 = vadd.f32 %v3605, %v3677
        %v3679 = vpop.f32.mrf.mxu0
        %v3680 = vadd.f32 %v3607, %v3679
        %3681 = vdwg.mxu0
        %v3682 = vadd.f32 %v2526, %v3644
        %v3683 = vadd.f32 %v2527, %v3646
        %v3684 = vadd.f32 %v2528, %v3648
        %v3685 = vadd.f32 %v2529, %v3650
        %v3686 = vadd.f32 %v2530, %v3654
        %v3687 = vadd.f32 %v2531, %v3656
        %v3688 = vadd.f32 %v2532, %v3658
        %v3689 = vadd.f32 %v2533, %v3660
        %v3690 = vadd.f32 %v2534, %v3664
        %v3691 = vadd.f32 %v2535, %v3666
        %v3692 = vadd.f32 %v2536, %v3668
        %v3693 = vadd.f32 %v2537, %v3670
        %v3694 = vadd.f32 %v2538, %v3674
        %v3695 = vadd.f32 %v2539, %v3676
        %v3696 = vadd.f32 %v2540, %v3678
        %v3697 = vadd.f32 %v2541, %v3680
        %v3698 = vadd.f32 %v3682, %v3683
        %3699 = vadd.xlane.f32.xlu0 %v3698
        %v3700 = vpop.xlane.xlu0 %3699
        %v3701 = vadd.f32 %v3684, %v3685
        %3702 = vadd.xlane.f32.xlu0 %v3701
        %v3703 = vpop.xlane.xlu0 %3702
        %v3704 = vadd.f32 %v3686, %v3687
        %3705 = vadd.xlane.f32.xlu0 %v3704
        %v3706 = vpop.xlane.xlu0 %3705
        %v3707 = vadd.f32 %v3688, %v3689
        %3708 = vadd.xlane.f32.xlu0 %v3707
        %v3709 = vpop.xlane.xlu0 %3708
        %v3710 = vadd.f32 %v3690, %v3691
        %3711 = vadd.xlane.f32.xlu0 %v3710
        %v3712 = vpop.xlane.xlu0 %3711
        %v3713 = vadd.f32 %v3692, %v3693
        %3714 = vadd.xlane.f32.xlu0 %v3713
        %v3715 = vpop.xlane.xlu0 %3714
        %v3716 = vadd.f32 %v3694, %v3695
        %3717 = vadd.xlane.f32.xlu0 %v3716
        %v3718 = vpop.xlane.xlu0 %3717
        %v3719 = vadd.f32 %v3696, %v3697
        %3720 = vadd.xlane.f32.xlu0 %v3719
        %v3721 = vpop.xlane.xlu0 %3720
        %v3722 = vmul.f32 %v3700, %v2389
        %v3723 = vmul.f32 %v3703, %v2389
        %v3724 = vmul.f32 %v3706, %v2389
        %v3725 = vmul.f32 %v3709, %v2389
        %v3726 = vmul.f32 %v3712, %v2389
        %v3727 = vmul.f32 %v3715, %v2389
        %v3728 = vmul.f32 %v3718, %v2389
        %v3729 = vmul.f32 %v3721, %v2389
        %v3730 = vsub.f32 %v3682, %v3722
        %v3731 = vsub.f32 %v3683, %v3722
        %v3732 = vsub.f32 %v3684, %v3723
        %v3733 = vsub.f32 %v3685, %v3723
        %v3734 = vsub.f32 %v3686, %v3724
        %v3735 = vsub.f32 %v3687, %v3724
        %v3736 = vsub.f32 %v3688, %v3725
        %v3737 = vsub.f32 %v3689, %v3725
        %v3738 = vsub.f32 %v3690, %v3726
        %v3739 = vsub.f32 %v3691, %v3726
        %v3740 = vsub.f32 %v3692, %v3727
        %v3741 = vsub.f32 %v3693, %v3727
        %v3742 = vsub.f32 %v3694, %v3728
        %v3743 = vsub.f32 %v3695, %v3728
        %v3744 = vsub.f32 %v3696, %v3729
        %v3745 = vsub.f32 %v3697, %v3729
        %v3746 = vmul.f32 %v3730, %v3730
        %v3747 = vmul.f32 %v3731, %v3731
        %v3748 = vmul.f32 %v3732, %v3732
        %v3749 = vmul.f32 %v3733, %v3733
        %v3750 = vmul.f32 %v3734, %v3734
        %v3751 = vmul.f32 %v3735, %v3735
        %v3752 = vmul.f32 %v3736, %v3736
        %v3753 = vmul.f32 %v3737, %v3737
        %v3754 = vmul.f32 %v3738, %v3738
        %v3755 = vmul.f32 %v3739, %v3739
        %v3756 = vmul.f32 %v3740, %v3740
        %v3757 = vmul.f32 %v3741, %v3741
        %v3758 = vmul.f32 %v3742, %v3742
        %v3759 = vmul.f32 %v3743, %v3743
        %v3760 = vmul.f32 %v3744, %v3744
        %v3761 = vmul.f32 %v3745, %v3745
        %v3762 = vadd.f32 %v3746, %v3747
        %3763 = vadd.xlane.f32.xlu0 %v3762
        %v3764 = vpop.xlane.xlu0 %3763
        %v3765 = vadd.f32 %v3748, %v3749
        %3766 = vadd.xlane.f32.xlu0 %v3765
        %v3767 = vpop.xlane.xlu0 %3766
        %v3768 = vadd.f32 %v3750, %v3751
        %3769 = vadd.xlane.f32.xlu0 %v3768
        %v3770 = vpop.xlane.xlu0 %3769
        %v3771 = vadd.f32 %v3752, %v3753
        %3772 = vadd.xlane.f32.xlu0 %v3771
        %v3773 = vpop.xlane.xlu0 %3772
        %v3774 = vadd.f32 %v3754, %v3755
        %3775 = vadd.xlane.f32.xlu0 %v3774
        %v3776 = vpop.xlane.xlu0 %3775
        %v3777 = vadd.f32 %v3756, %v3757
        %3778 = vadd.xlane.f32.xlu0 %v3777
        %v3779 = vpop.xlane.xlu0 %3778
        %v3780 = vadd.f32 %v3758, %v3759
        %3781 = vadd.xlane.f32.xlu0 %v3780
        %v3782 = vpop.xlane.xlu0 %3781
        %v3783 = vadd.f32 %v3760, %v3761
        %3784 = vadd.xlane.f32.xlu0 %v3783
        %v3785 = vpop.xlane.xlu0 %3784
        %v3786 = vmul.f32 %v3764, %v2389
        %v3787 = vmul.f32 %v3767, %v2389
        %v3788 = vmul.f32 %v3770, %v2389
        %v3789 = vmul.f32 %v3773, %v2389
        %v3790 = vmul.f32 %v3776, %v2389
        %v3791 = vmul.f32 %v3779, %v2389
        %v3792 = vmul.f32 %v3782, %v2389
        %v3793 = vmul.f32 %v3785, %v2389
        %v3794 = vadd.f32 %v3786, 1e-05
        %v3795 = vadd.f32 %v3787, 1e-05
        %v3796 = vadd.f32 %v3788, 1e-05
        %v3797 = vadd.f32 %v3789, 1e-05
        %v3798 = vadd.f32 %v3790, 1e-05
        %v3799 = vadd.f32 %v3791, 1e-05
        %v3800 = vadd.f32 %v3792, 1e-05
        %v3801 = vadd.f32 %v3793, 1e-05
        %v3802 = vrsqrt.pop %v3794
        %v3803 = vrsqrt.pop %v3795
        %v3804 = vrsqrt.pop %v3796
        %v3805 = vrsqrt.pop %v3797
        %v3806 = vrsqrt.pop %v3798
        %v3807 = vrsqrt.pop %v3799
        %v3808 = vrsqrt.pop %v3800
        %v3809 = vrsqrt.pop %v3801
        %v3810 = vmul.f32 %v3730, %v3802
        %v3811 = vmul.f32 %v3731, %v3802
        %v3812 = vmul.f32 %v3732, %v3803
        %v3813 = vmul.f32 %v3733, %v3803
        %v3814 = vmul.f32 %v3734, %v3804
        %v3815 = vmul.f32 %v3735, %v3804
        %v3816 = vmul.f32 %v3736, %v3805
        %v3817 = vmul.f32 %v3737, %v3805
        %v3818 = vmul.f32 %v3738, %v3806
        %v3819 = vmul.f32 %v3739, %v3806
        %v3820 = vmul.f32 %v3740, %v3807
        %v3821 = vmul.f32 %v3741, %v3807
        %v3822 = vmul.f32 %v3742, %v3808
        %v3823 = vmul.f32 %v3743, %v3808
        %v3824 = vmul.f32 %v3744, %v3809
        %v3825 = vmul.f32 %v3745, %v3809
        %v3826 = vlaneseq
        %v3827 = vshrl.u32 %v3826, 7
        %v3828 = vsub.s32 7, %v3827
        %v3829 = vrot.slane %v554, %v3828
        %v3830 = vlaneseq
        %v3831 = vshrl.u32 %v3830, 7
        %v3832 = vsub.s32 7, %v3831
        %v3833 = vrot.slane %v555, %v3832
        %v3834 = vmul.f32 %v3810, %v3829
        %v3835 = vmul.f32 %v3811, %v3833
        %v3836 = vmul.f32 %v3812, %v3829
        %v3837 = vmul.f32 %v3813, %v3833
        %v3838 = vmul.f32 %v3814, %v3829
        %v3839 = vmul.f32 %v3815, %v3833
        %v3840 = vmul.f32 %v3816, %v3829
        %v3841 = vmul.f32 %v3817, %v3833
        %v3842 = vmul.f32 %v3818, %v3829
        %v3843 = vmul.f32 %v3819, %v3833
        %v3844 = vmul.f32 %v3820, %v3829
        %v3845 = vmul.f32 %v3821, %v3833
        %v3846 = vmul.f32 %v3822, %v3829
        %v3847 = vmul.f32 %v3823, %v3833
        %v3848 = vmul.f32 %v3824, %v3829
        %v3849 = vmul.f32 %v3825, %v3833
        %v3850 = vlaneseq
        %v3851 = vshrl.u32 %v3850, 7
        %v3852 = vsub.s32 0, %v3851
        %v3853 = vrot.slane %v558, %v3852
        %v3854 = vlaneseq
        %v3855 = vshrl.u32 %v3854, 7
        %v3856 = vsub.s32 0, %v3855
        %v3857 = vrot.slane %v559, %v3856
        %v3858 = vadd.f32 %v3834, %v3853
        %v3859 = vadd.f32 %v3835, %v3857
        %v3860 = vadd.f32 %v3836, %v3853
        %v3861 = vadd.f32 %v3837, %v3857
        %v3862 = vadd.f32 %v3838, %v3853
        %v3863 = vadd.f32 %v3839, %v3857
        %v3864 = vadd.f32 %v3840, %v3853
        %v3865 = vadd.f32 %v3841, %v3857
        %v3866 = vadd.f32 %v3842, %v3853
        %v3867 = vadd.f32 %v3843, %v3857
        %v3868 = vadd.f32 %v3844, %v3853
        %v3869 = vadd.f32 %v3845, %v3857
        %v3870 = vadd.f32 %v3846, %v3853
        %v3871 = vadd.f32 %v3847, %v3857
        %v3872 = vadd.f32 %v3848, %v3853
        %v3873 = vadd.f32 %v3849, %v3857
        %3874 = vst [vmem:[#allocation2] sm:$0xff] %v3858
        %3875 = vst [vmem:[#allocation2 + $0x8] sm:$0xff] %v3859
        %3876 = vst [vmem:[#allocation2 + $0x10] sm:$0xff] %v3860
        %3877 = vst [vmem:[#allocation2 + $0x18] sm:$0xff] %v3861
        %3878 = vst [vmem:[#allocation2 + $0x20] sm:$0xff] %v3862
        %3879 = vst [vmem:[#allocation2 + $0x28] sm:$0xff] %v3863
        %3880 = vst [vmem:[#allocation2 + $0x30] sm:$0xff] %v3864
        %3881 = vst [vmem:[#allocation2 + $0x38] sm:$0xff] %v3865
        %3882 = vst [vmem:[#allocation2 + $0x40] sm:$0xff] %v3866
        %3883 = vst [vmem:[#allocation2 + $0x48] sm:$0xff] %v3867
        %3884 = vst [vmem:[#allocation2 + $0x50] sm:$0xff] %v3868
        %3885 = vst [vmem:[#allocation2 + $0x58] sm:$0xff] %v3869
        %3886 = vst [vmem:[#allocation2 + $0x60] sm:$0xff] %v3870
        %3887 = vst [vmem:[#allocation2 + $0x68] sm:$0xff] %v3871
        %3888 = vst [vmem:[#allocation2 + $0x70] sm:$0xff] %v3872
        %3889 = vst [vmem:[#allocation2 + $0x78] sm:$0xff] %v3873
        %p3890 = scmp.eq.s32.totalorder %s28, 1
        // Predicated region
        $region77: #{transformer_encoder_forward.1} parent=51 // pred_check
          %p3891 = pneg %p3890
        $region78: #{transformer_encoder_forward.1} parent=51 // pred_check_branch
          %3893 = sbr.rel (%p3891) target = $region80
        $region79: #{transformer_encoder_forward.1} parent=51 // pred_region
          %3894 = vst [vmem:[%s8] sm:$0xff] %v3858
          %3895 = vst [vmem:[%s8 + $0x8] sm:$0xff] %v3859
          %3896 = vst [vmem:[%s8 + $0x10] sm:$0xff] %v3860
          %3897 = vst [vmem:[%s8 + $0x18] sm:$0xff] %v3861
          %3898 = vst [vmem:[%s8 + $0x20] sm:$0xff] %v3862
          %3899 = vst [vmem:[%s8 + $0x28] sm:$0xff] %v3863
          %3900 = vst [vmem:[%s8 + $0x30] sm:$0xff] %v3864
          %3901 = vst [vmem:[%s8 + $0x38] sm:$0xff] %v3865
          %3902 = vst [vmem:[%s8 + $0x40] sm:$0xff] %v3866
          %3903 = vst [vmem:[%s8 + $0x48] sm:$0xff] %v3867
          %3904 = vst [vmem:[%s8 + $0x50] sm:$0xff] %v3868
          %3905 = vst [vmem:[%s8 + $0x58] sm:$0xff] %v3869
          %3906 = vst [vmem:[%s8 + $0x60] sm:$0xff] %v3870
          %3907 = vst [vmem:[%s8 + $0x68] sm:$0xff] %v3871
          %3908 = vst [vmem:[%s8 + $0x70] sm:$0xff] %v3872
          %3909 = vst [vmem:[%s8 + $0x78] sm:$0xff] %v3873
        $region80: #{transformer_encoder_forward.1} parent=51 // pred_fallthru
          _
        // Predicated region
        $region81: #{transformer_encoder_forward.1} parent=51 // pred_check
          %p3910 = pneg %p239
        $region82: #{transformer_encoder_forward.1} parent=51 // pred_check_branch
          %3912 = sbr.rel (%p3910) target = $region84
        $region83: #{transformer_encoder_forward.1} parent=51 // pred_region
          _
        $region84: #{transformer_encoder_forward.1} parent=51 // pred_fallthru
          _
        // Predicated region
        $region85: #{transformer_encoder_forward.1} parent=51 // pred_check
          %p3913 = pneg %p239
        $region86: #{transformer_encoder_forward.1} parent=51 // pred_check_branch
          %3915 = sbr.rel (%p3913) target = $region88
        $region87: #{transformer_encoder_forward.1} parent=51 // pred_region
          _
        $region88: #{transformer_encoder_forward.1} parent=51 // pred_fallthru
          _
      $region52: #{transformer_encoder_forward.1} parent=5 // pred_fallthru
        _
      %p3916 = scmp.le.s32.totalorder 2, %s23
      // Predicated region
      $region89: #{transformer_encoder_forward.1} parent=5 // pred_check
        %p3917 = pneg %p3916
      $region90: #{transformer_encoder_forward.1} parent=5 // pred_check_branch
        %3919 = sbr.rel (%p3917) target = $region92
      $region91: #{transformer_encoder_forward.1} parent=5 // pred_region
        %s3920 = ssub.s32 %s23, 2
      $region92: #{transformer_encoder_forward.1} parent=5 // pred_fallthru
        _
    $region6: #{transformer_encoder_forward.1} parent=1 // loop_footer
      %s27 = sadd.s32 1, %s23
    $region7: #{transformer_encoder_forward.1} parent=1 // loop_footer_branch
      %22 = sbr.rel target = $region3
    $region8: #{transformer_encoder_forward.1} parent=1 // loop_exit
      _
    %3921 = vsyncpa [#allocation5], 1
    %s3922 = scalar_lea.sflag [#allocation5], 1
    %3923 = vsyncpa %s3922, 1
    %3924 = vsyncpa [#allocation7], 1
    %s3925 = scalar_lea.sflag [#allocation7], 1
    %3926 = vsyncpa %s3925, 1
    %3927 = vsyncpa [#allocation10], 1
    %s3928 = scalar_lea.sflag [#allocation10], 1
    %3929 = vsyncpa %s3928, 1

</llo_original>
